<compile_context>
chip_gen: v6e
topology: v6e:2x2x1
jax: 0.10.0
libtpu: 0.0.40
codegen_flags: <defaults>
</compile_context>

<pallas_src>
import functools

import jax
import jax.numpy as jnp
import numpy as np
from jax import lax
from jax.experimental import pallas as pl
from jax.experimental.pallas import tpu as pltpu


# ---------------------------------------------------------------------------
# in-kernel norm on the batch-folded (Co, NB*T) block
# ---------------------------------------------------------------------------
def _norm_wide(c, g, be, norm, eps, nb, T):
    """c: (Co, NB*T) f32; g/be: (Co,1). One-pass stats (E[x^2]-mean^2)."""
    co = c.shape[0]
    col_s = jnp.sum(c, axis=0, keepdims=True)          # (1, NB*T)
    col_s2 = jnp.sum(c * c, axis=0, keepdims=True)     # (1, NB*T)
    if norm == 'gln':
        # GlobalLayerNorm: stats over (channel, time) of EACH batch item.
        inv_n = 1.0 / float(co * T)
        mean_cols, rstd_cols = [], []
        for i in range(nb):
            s1 = jnp.sum(col_s[:, i * T:(i + 1) * T])
            s2 = jnp.sum(col_s2[:, i * T:(i + 1) * T])
            m = s1 * inv_n
            v = s2 * inv_n - m * m
            mean_cols.append(jnp.full((1, T), m, jnp.float32))
            rstd_cols.append(jnp.full((1, T), lax.rsqrt(v + eps), jnp.float32))
        mean = jnp.concatenate(mean_cols, axis=-1)      # (1, NB*T)
        rstd = jnp.concatenate(rstd_cols, axis=-1)
    else:
        # 'cln' (per-frame channel norm) is already per-item correct on the
        # folded lane axis: stats are per time frame (per lane).
        inv_c = 1.0 / float(co)
        mean = col_s * inv_c
        var = col_s2 * inv_c - mean * mean
        rstd = lax.rsqrt(var + eps)
    return g * (c - mean) * rstd + be


# ---------------------------------------------------------------------------
# the fused Pallas kernel (NB batch items per invocation)
# ---------------------------------------------------------------------------
def conv1d_block_kernel(x_ref, w1_ref, w2_ref, prm_ref, alpha_ref, out_ref,
                        *, nb, kernel_size, dilation, pad, norm, eps, ci, co):
    T = x_ref.shape[-1]
    NBT = nb * T

    # PReLU slopes live in SMEM.
    a1 = alpha_ref[0]
    a2 = alpha_ref[1]

    # Packed per-channel params: cols [b1, g1, be1, bd, g2, be2, b2, wd_0..wd_{K-1}].
    b1 = prm_ref[0:co, 0:1]
    g1 = prm_ref[0:co, 1:2]
    be1 = prm_ref[0:co, 2:3]
    bd = prm_ref[0:co, 3:4]
    g2 = prm_ref[0:co, 4:5]
    be2 = prm_ref[0:co, 5:6]
    b2 = prm_ref[0:ci, 6:7]

    # --- fold batch into the lane axis: (NB, Ci, T) -> (Ci, NB*T) bf16 -------
    x_wide = jnp.concatenate(
        [x_ref[i].astype(jnp.bfloat16) for i in range(nb)], axis=-1)

    # --- conv1x1 (Ci -> Co): one wide bf16 MXU matmul, f32 accumulation ------
    c = jnp.dot(w1_ref[...], x_wide, preferred_element_type=jnp.float32) + b1
    c = jnp.where(c > 0, c, a1 * c)                     # PReLU_1
    c = _norm_wide(c, g1, be1, norm, eps, nb, T)        # norm_1

    # --- depthwise dilated conv (groups = Co) --------------------------------
    # y[ch, i, t] = sum_k wd[ch, k] * c[ch, i, t + k*d - pad]  (zeros outside
    # [0, T) of each item).  Time shifts are a pltpu.roll of the whole wide
    # block (XLU); per-item validity comes from a tiny (1, NB*T) iota mask.
    t_within = jnp.concatenate(
        [lax.broadcasted_iota(jnp.int32, (1, T), 1)] * nb, axis=-1)
    acc = jnp.zeros_like(c)
    for k in range(kernel_size):
        off = k * dilation - pad
        tap = prm_ref[0:co, 7 + k:8 + k]                # (Co, 1) per-channel tap
        if off == 0:
            acc = acc + tap * c
        else:
            shifted = pltpu.roll(c, shift=(-off) % NBT, axis=1)
            valid = (t_within < T - off) if off > 0 else (t_within >= -off)
            acc = acc + tap * jnp.where(valid, shifted, 0.0)
    c = acc + bd
    # (causal trim `c[:, :, :-pad]` is implicit: only t in [0, T) is computed)

    c = jnp.where(c > 0, c, a2 * c)                     # PReLU_2
    c = _norm_wide(c, g2, be2, norm, eps, nb, T)        # norm_2

    # --- pointwise conv back to Ci (wide bf16 matmul) + residual --------------
    r = jnp.dot(w2_ref[...], c.astype(jnp.bfloat16),
                preferred_element_type=jnp.float32) + b2
    for i in range(nb):                                  # lane-dense stores
        out_ref[i] = (x_ref[i] + r[:, i * T:(i + 1) * T]).astype(out_ref.dtype)


# ---------------------------------------------------------------------------
# wrapper
# ---------------------------------------------------------------------------
def _choose_nb(B, T, requested=None):
    """Items folded per grid step: aim for >=512 result lanes, keep grid >= 2."""
    nb = min(requested, B) if requested is not None else max(1, min(B, pl.cdiv(512, T)))
    while nb > 1 and (B // nb) < 2:     # keep >= 2 steps for megacore/pipelining
        nb -= 1
    while B % nb:                       # NB must divide B
        nb -= 1
    return nb


def _pack_params(p, ci, co, K):
    rows = max(ci, co)
    P = jnp.zeros((rows, 7 + K), jnp.float32)
    P = P.at[:co, 0].set(p['b1'][:, 0])
    P = P.at[:co, 1].set(p['g1'][:, 0])
    P = P.at[:co, 2].set(p['be1'][:, 0])
    P = P.at[:co, 3].set(p['bd'][:, 0])
    P = P.at[:co, 4].set(p['g2'][:, 0])
    P = P.at[:co, 5].set(p['be2'][:, 0])
    P = P.at[:ci, 6].set(p['b2'][:, 0])
    P = P.at[:co, 7:7 + K].set(p['wd'])
    return P


def conv1d_block_forward(x, p, *, kernel_size, dilation, norm='gln',
                         causal=False, eps=1e-5, batch_fold=None):
    """x: (B, Ci, T) in the PyTorch NCL layout. Returns (B, Ci, T)."""
    assert norm in ('gln', 'cln'), "only 'gln' / 'cln' norms are implemented"
    # TODO(synk): BatchNorm1d branch of select_norm not implemented (training-mode
    # batch statistics span the batch axis, which is the pipelined grid axis here).
    B, Ci, T = x.shape
    Co, K = p['wd'].shape
    assert K == kernel_size
    if causal:
        pad = dilation * (kernel_size - 1)
    else:
        assert dilation * (kernel_size - 1) % 2 == 0, \
            "non-causal Conv1D_Block requires length-preserving padding"
        pad = dilation * (kernel_size - 1) // 2

    NB = _choose_nb(B, T, batch_fold)
    rows = max(Ci, Co)
    # TODO(synk): for TasNet-scale T (thousands of frames) add an inner T-chunked
    # pipeline with streamed gln statistics instead of full (Co, NB*T) residents.

    kernel = functools.partial(
        conv1d_block_kernel, nb=NB, kernel_size=kernel_size, dilation=dilation,
        pad=pad, norm=norm, eps=eps, ci=Ci, co=Co)

    # bf16 MXU weights (wrapper-side cast), packed per-channel params, SMEM slopes.
    w1_bf = p['w1'].astype(jnp.bfloat16)          # (Co, Ci)
    w2_bf = p['w2'].astype(jnp.bfloat16)          # (Ci, Co)
    packed = _pack_params(p, Ci, Co, K)           # (rows, 7+K)
    alphas = p['alphas'].reshape(-1).astype(jnp.float32)   # (2,)

    # explicit per-generation VMEM budget (double-buffered x/out + residents
    # + headroom for the live (Co, NB*T) f32 intermediates).
    step_bytes = (4 * NB * Ci * T * 4                 # x + out, double buffered
                  + (Co * Ci + Ci * Co) * 2           # bf16 weights
                  + rows * 128 * 4                    # packed params (lane-padded)
                  + 10 * Co * NB * T * 4)             # wide intermediates headroom
    vmem_limit = int(min(max(2 * step_bytes, 32 * 2 ** 20), 64 * 2 ** 20))

    in_specs = [
        pl.BlockSpec((NB, Ci, T), lambda b: (b, 0, 0)),      # x: NB items / step
        pl.BlockSpec((Co, Ci), lambda b: (0, 0)),            # w1 (resident)
        pl.BlockSpec((Ci, Co), lambda b: (0, 0)),            # w2 (resident)
        pl.BlockSpec((rows, 7 + K), lambda b: (0, 0)),       # packed params
        pl.BlockSpec(memory_space=pltpu.MemorySpace.SMEM),   # PReLU slopes
    ]

    return pl.pallas_call(
        kernel,
        out_shape=jax.ShapeDtypeStruct((B, Ci, T), x.dtype),
        grid=(B // NB,),
        in_specs=in_specs,
        out_specs=pl.BlockSpec((NB, Ci, T), lambda b: (b, 0, 0)),
        compiler_params=pltpu.CompilerParams(
            dimension_semantics=("parallel",),               # megacore on v7x
            vmem_limit_bytes=vmem_limit),
    )(x, w1_bf, w2_bf, packed, alphas)


# ---------------------------------------------------------------------------
# deterministic synthetic parameters (shapes match the nn.Module)
# ---------------------------------------------------------------------------
def init_params(key, in_channels, out_channels, kernel_size):
    Ci, Co, K = in_channels, out_channels, kernel_size
    ks = jax.random.split(key, 10)

    def u(k, shape, fan):
        bound = 1.0 / np.sqrt(fan)
        return jax.random.uniform(k, shape, jnp.float32, -bound, bound)

    return dict(
        w1=u(ks[0], (Co, Ci), Ci),              # Conv1d(Ci,Co,1).weight  (Co,Ci,1)
        b1=u(ks[1], (Co, 1), Ci),
        g1=1.0 + 0.1 * u(ks[2], (Co, 1), 1.0),  # norm_1.weight (1,Co,1)
        be1=0.1 * u(ks[3], (Co, 1), 1.0),       # norm_1.bias
        wd=u(ks[4], (Co, K), K),                # Dw_conv.weight (Co,1,K)
        bd=u(ks[5], (Co, 1), K),
        g2=1.0 + 0.1 * u(ks[6], (Co, 1), 1.0),
        be2=0.1 * u(ks[7], (Co, 1), 1.0),
        w2=u(ks[8], (Ci, Co), Co),              # Pw_conv.weight (Ci,Co,1)
        b2=u(ks[9], (Ci, 1), Co),
        alphas=jnp.full((1, 2), 0.25, jnp.float32),   # nn.PReLU() default slopes
    )


# ---------------------------------------------------------------------------
# pure-numpy reference of the PyTorch forward (f32)
# ---------------------------------------------------------------------------
def ref_norm(c, g, be, norm, eps=1e-5):
    if norm == 'gln':
        mean = c.mean(axis=(1, 2), keepdims=True)
        var = ((c - mean) ** 2).mean(axis=(1, 2), keepdims=True)
    else:  # 'cln'
        mean = c.mean(axis=1, keepdims=True)
        var = ((c - mean) ** 2).mean(axis=1, keepdims=True)
    return g[None] * (c - mean) / np.sqrt(var + eps) + be[None]


def ref_forward(x, p, kernel_size, dilation, norm, causal, eps=1e-5):
    x = np.asarray(x, np.float32)
    p = {k: np.asarray(v, np.float32) for k, v in p.items()}
    K, d = kernel_size, dilation
    pad = d * (K - 1) if causal else d * (K - 1) // 2
    a1, a2 = float(p['alphas'][0, 0]), float(p['alphas'][0, 1])

    c = np.einsum('oc,bct->bot', p['w1'], x) + p['b1'][None]
    c = np.where(c > 0, c, a1 * c)
    c = ref_norm(c, p['g1'], p['be1'], norm, eps)

    B, Co, T = c.shape
    cp = np.zeros((B, Co, T + 2 * pad), np.float32)
    cp[:, :, pad:pad + T] = c
    out_len = T + 2 * pad - d * (K - 1)
    y = np.zeros((B, Co, out_len), np.float32)
    for k in range(K):
        y += p['wd'][None, :, k:k + 1] * cp[:, :, k * d:k * d + out_len]
    y += p['bd'][None]
    if causal:
        y = y[:, :, :-pad]
    c = y

    c = np.where(c > 0, c, a2 * c)
    c = ref_norm(c, p['g2'], p['be2'], norm, eps)
    c = np.einsum('io,bot->bit', p['w2'], c) + p['b2'][None]
    return x + c


if __name__ == "__main__":
    # batch, in_ch, out_ch, frames, kernel  (B=8 -> NB=4 folded items, grid of 2)
    B, Ci, Co, T, K = 8, 64, 128, 128, 3

    key = jax.random.PRNGKey(0)
    kx, kp = jax.random.split(key)
    x = jax.random.normal(kx, (B, Ci, T), jnp.float32)   # PyTorch (N, C, L)
    params = init_params(kp, Ci, Co, K)

    configs = [
        dict(dilation=2, norm='gln', causal=False),
        dict(dilation=4, norm='cln', causal=True),
    ]
    for cfg in configs:
        y = conv1d_block_forward(x, params, kernel_size=K, **cfg)
        y = jax.block_until_ready(y)
        ref = ref_forward(x, params, K, cfg['dilation'], cfg['norm'], cfg['causal'])
        assert y.shape == ref.shape, (y.shape, ref.shape)
        # Tolerance sized for bf16 MXU operands (f32 accumulation) vs f32 reference.
        np.testing.assert_allclose(np.asarray(y), ref, rtol=3e-2, atol=3e-2)

    print("KERNEL_OK")
</pallas_src>

<mosaic_0001>
module attributes {stable_mosaic.version = 11 : i64} {
  func.func @conv1d_block_kernel(%arg0: i32, %arg1: memref<4x64x128xf32, #tpu.memory_space<vmem>>, %arg2: memref<128x64xbf16, #tpu.memory_space<vmem>>, %arg3: memref<64x128xbf16, #tpu.memory_space<vmem>>, %arg4: memref<128x10xf32, #tpu.memory_space<vmem>>, %arg5: memref<2xf32, #tpu.memory_space<smem>>, %arg6: memref<4x64x128xf32, #tpu.memory_space<vmem>>) attributes {dimension_semantics = [#tpu.dimension_semantics<parallel>], iteration_bounds = array<i64: 2>, scalar_prefetch = 0 : i64, scratch_operands = 0 : i64, tpu.core_type = #tpu.core_type<tc>, window_params = [{transform_indices = @transform_0, window_bounds = array<i64: 4, 64, 128>}, {pipeline_mode = #tpu.pipeline_mode<synchronous>, transform_indices = @transform_1, window_bounds = array<i64: 128, 64>}, {pipeline_mode = #tpu.pipeline_mode<synchronous>, transform_indices = @transform_2, window_bounds = array<i64: 64, 128>}, {pipeline_mode = #tpu.pipeline_mode<synchronous>, transform_indices = @transform_3, window_bounds = array<i64: 128, 10>}, {transform_indices = @transform_4, window_bounds = array<i64: 2>}, {transform_indices = @transform_5, window_bounds = array<i64: 4, 64, 128>}]} {
    %c0 = arith.constant 0 : index
    %0 = memref.load %arg5[%c0] : memref<2xf32, #tpu.memory_space<smem>>
    %c1 = arith.constant 1 : index
    %1 = memref.load %arg5[%c1] : memref<2xf32, #tpu.memory_space<smem>>
    %c0_0 = arith.constant 0 : index
    %c0_1 = arith.constant 0 : index
    %2 = vector.load %arg4[%c0_0, %c0_1] : memref<128x10xf32, #tpu.memory_space<vmem>>, vector<128x1xf32>
    %c0_2 = arith.constant 0 : index
    %c1_3 = arith.constant 1 : index
    %3 = vector.load %arg4[%c0_2, %c1_3] : memref<128x10xf32, #tpu.memory_space<vmem>>, vector<128x1xf32>
    %c0_4 = arith.constant 0 : index
    %c2 = arith.constant 2 : index
    %4 = vector.load %arg4[%c0_4, %c2] : memref<128x10xf32, #tpu.memory_space<vmem>>, vector<128x1xf32>
    %c0_5 = arith.constant 0 : index
    %c3 = arith.constant 3 : index
    %5 = vector.load %arg4[%c0_5, %c3] : memref<128x10xf32, #tpu.memory_space<vmem>>, vector<128x1xf32>
    %c0_6 = arith.constant 0 : index
    %c4 = arith.constant 4 : index
    %6 = vector.load %arg4[%c0_6, %c4] : memref<128x10xf32, #tpu.memory_space<vmem>>, vector<128x1xf32>
    %c0_7 = arith.constant 0 : index
    %c5 = arith.constant 5 : index
    %7 = vector.load %arg4[%c0_7, %c5] : memref<128x10xf32, #tpu.memory_space<vmem>>, vector<128x1xf32>
    %c0_8 = arith.constant 0 : index
    %c6 = arith.constant 6 : index
    %8 = vector.load %arg4[%c0_8, %c6] : memref<128x10xf32, #tpu.memory_space<vmem>>, vector<64x1xf32>
    %c0_9 = arith.constant 0 : index
    %c0_10 = arith.constant 0 : index
    %c0_11 = arith.constant 0 : index
    %9 = vector.load %arg1[%c0_9, %c0_10, %c0_11] : memref<4x64x128xf32, #tpu.memory_space<vmem>>, vector<1x64x128xf32>
    %10 = vector.shape_cast %9 : vector<1x64x128xf32> to vector<64x128xf32>
    %11 = arith.truncf %10 : vector<64x128xf32> to vector<64x128xbf16>
    %c1_12 = arith.constant 1 : index
    %c0_13 = arith.constant 0 : index
    %c0_14 = arith.constant 0 : index
    %12 = vector.load %arg1[%c1_12, %c0_13, %c0_14] : memref<4x64x128xf32, #tpu.memory_space<vmem>>, vector<1x64x128xf32>
    %13 = vector.shape_cast %12 : vector<1x64x128xf32> to vector<64x128xf32>
    %14 = arith.truncf %13 : vector<64x128xf32> to vector<64x128xbf16>
    %c2_15 = arith.constant 2 : index
    %c0_16 = arith.constant 0 : index
    %c0_17 = arith.constant 0 : index
    %15 = vector.load %arg1[%c2_15, %c0_16, %c0_17] : memref<4x64x128xf32, #tpu.memory_space<vmem>>, vector<1x64x128xf32>
    %16 = vector.shape_cast %15 : vector<1x64x128xf32> to vector<64x128xf32>
    %17 = arith.truncf %16 : vector<64x128xf32> to vector<64x128xbf16>
    %c3_18 = arith.constant 3 : index
    %c0_19 = arith.constant 0 : index
    %c0_20 = arith.constant 0 : index
    %18 = vector.load %arg1[%c3_18, %c0_19, %c0_20] : memref<4x64x128xf32, #tpu.memory_space<vmem>>, vector<1x64x128xf32>
    %19 = vector.shape_cast %18 : vector<1x64x128xf32> to vector<64x128xf32>
    %20 = arith.truncf %19 : vector<64x128xf32> to vector<64x128xbf16>
    %21 = tpu.concatenate %11, %14, %17, %20 in 1 : vector<64x128xbf16>, vector<64x128xbf16>, vector<64x128xbf16>, vector<64x128xbf16> -> vector<64x512xbf16>
    %c0_21 = arith.constant 0 : index
    %c0_22 = arith.constant 0 : index
    %22 = vector.load %arg2[%c0_21, %c0_22] : memref<128x64xbf16, #tpu.memory_space<vmem>>, vector<128x64xbf16>
    %cst = arith.constant dense<0.000000e+00> : vector<128x512xf32>
    %23 = tpu.matmul %22, %21, %cst {dimension_numbers = #tpu.dot_dimension_numbers<[1], [0], [0], [1], [0, 0, 1, 1], [], []>} : vector<128x64xbf16>, vector<64x512xbf16>, vector<128x512xf32> -> vector<128x512xf32>
    %24 = vector.broadcast %2 : vector<128x1xf32> to vector<128x512xf32>
    %25 = arith.addf %23, %24 : vector<128x512xf32>
    %cst_23 = arith.constant 0.000000e+00 : f32
    %26 = vector.broadcast %cst_23 : f32 to vector<128x512xf32>
    %27 = arith.cmpf ogt, %25, %26 : vector<128x512xf32>
    %28 = vector.broadcast %0 : f32 to vector<128x512xf32>
    %29 = arith.mulf %28, %25 : vector<128x512xf32>
    %30 = arith.select %27, %25, %29 : vector<128x512xi1>, vector<128x512xf32>
    %cst_24 = arith.constant dense<0.000000e+00> : vector<512xf32>
    %31 = vector.multi_reduction <add>, %30, %cst_24 [0] : vector<128x512xf32> to vector<512xf32>
    %32 = vector.shape_cast %31 : vector<512xf32> to vector<1x512xf32>
    %33 = arith.mulf %30, %30 : vector<128x512xf32>
    %cst_25 = arith.constant dense<0.000000e+00> : vector<512xf32>
    %34 = vector.multi_reduction <add>, %33, %cst_25 [0] : vector<128x512xf32> to vector<512xf32>
    %35 = vector.shape_cast %34 : vector<512xf32> to vector<1x512xf32>
    %36 = vector.extract_strided_slice %32 {offsets = [0, 0], sizes = [1, 128], strides = [1, 1]} : vector<1x512xf32> to vector<1x128xf32>
    %37 = vector.shape_cast %36 : vector<1x128xf32> to vector<1x1x128xf32>
    %cst_26 = arith.constant dense<0.000000e+00> : vector<1xf32>
    %38 = vector.multi_reduction <add>, %37, %cst_26 [1, 2] : vector<1x1x128xf32> to vector<1xf32>
    %39 = vector.shape_cast %38 : vector<1xf32> to vector<1x1x1xf32>
    %40 = vector.extract %39[0, 0, 0] : f32 from vector<1x1x1xf32>
    %41 = vector.extract_strided_slice %35 {offsets = [0, 0], sizes = [1, 128], strides = [1, 1]} : vector<1x512xf32> to vector<1x128xf32>
    %42 = vector.shape_cast %41 : vector<1x128xf32> to vector<1x1x128xf32>
    %cst_27 = arith.constant dense<0.000000e+00> : vector<1xf32>
    %43 = vector.multi_reduction <add>, %42, %cst_27 [1, 2] : vector<1x1x128xf32> to vector<1xf32>
    %44 = vector.shape_cast %43 : vector<1xf32> to vector<1x1x1xf32>
    %45 = vector.extract %44[0, 0, 0] : f32 from vector<1x1x1xf32>
    %cst_28 = arith.constant 6.10351563E-5 : f32
    %46 = arith.mulf %40, %cst_28 : f32
    %cst_29 = arith.constant 6.10351563E-5 : f32
    %47 = arith.mulf %45, %cst_29 : f32
    %48 = arith.mulf %46, %46 : f32
    %49 = arith.subf %47, %48 : f32
    %50 = vector.broadcast %46 : f32 to vector<1x128xf32>
    %cst_30 = arith.constant 9.99999974E-6 : f32
    %51 = arith.addf %49, %cst_30 : f32
    %52 = math.rsqrt %51 : f32
    %53 = vector.broadcast %52 : f32 to vector<1x128xf32>
    %54 = vector.extract_strided_slice %32 {offsets = [0, 128], sizes = [1, 128], strides = [1, 1]} : vector<1x512xf32> to vector<1x128xf32>
    %55 = vector.shape_cast %54 : vector<1x128xf32> to vector<1x1x128xf32>
    %cst_31 = arith.constant dense<0.000000e+00> : vector<1xf32>
    %56 = vector.multi_reduction <add>, %55, %cst_31 [1, 2] : vector<1x1x128xf32> to vector<1xf32>
    %57 = vector.shape_cast %56 : vector<1xf32> to vector<1x1x1xf32>
    %58 = vector.extract %57[0, 0, 0] : f32 from vector<1x1x1xf32>
    %59 = vector.extract_strided_slice %35 {offsets = [0, 128], sizes = [1, 128], strides = [1, 1]} : vector<1x512xf32> to vector<1x128xf32>
    %60 = vector.shape_cast %59 : vector<1x128xf32> to vector<1x1x128xf32>
    %cst_32 = arith.constant dense<0.000000e+00> : vector<1xf32>
    %61 = vector.multi_reduction <add>, %60, %cst_32 [1, 2] : vector<1x1x128xf32> to vector<1xf32>
    %62 = vector.shape_cast %61 : vector<1xf32> to vector<1x1x1xf32>
    %63 = vector.extract %62[0, 0, 0] : f32 from vector<1x1x1xf32>
    %cst_33 = arith.constant 6.10351563E-5 : f32
    %64 = arith.mulf %58, %cst_33 : f32
    %cst_34 = arith.constant 6.10351563E-5 : f32
    %65 = arith.mulf %63, %cst_34 : f32
    %66 = arith.mulf %64, %64 : f32
    %67 = arith.subf %65, %66 : f32
    %68 = vector.broadcast %64 : f32 to vector<1x128xf32>
    %cst_35 = arith.constant 9.99999974E-6 : f32
    %69 = arith.addf %67, %cst_35 : f32
    %70 = math.rsqrt %69 : f32
    %71 = vector.broadcast %70 : f32 to vector<1x128xf32>
    %72 = vector.extract_strided_slice %32 {offsets = [0, 256], sizes = [1, 128], strides = [1, 1]} : vector<1x512xf32> to vector<1x128xf32>
    %73 = vector.shape_cast %72 : vector<1x128xf32> to vector<1x1x128xf32>
    %cst_36 = arith.constant dense<0.000000e+00> : vector<1xf32>
    %74 = vector.multi_reduction <add>, %73, %cst_36 [1, 2] : vector<1x1x128xf32> to vector<1xf32>
    %75 = vector.shape_cast %74 : vector<1xf32> to vector<1x1x1xf32>
    %76 = vector.extract %75[0, 0, 0] : f32 from vector<1x1x1xf32>
    %77 = vector.extract_strided_slice %35 {offsets = [0, 256], sizes = [1, 128], strides = [1, 1]} : vector<1x512xf32> to vector<1x128xf32>
    %78 = vector.shape_cast %77 : vector<1x128xf32> to vector<1x1x128xf32>
    %cst_37 = arith.constant dense<0.000000e+00> : vector<1xf32>
    %79 = vector.multi_reduction <add>, %78, %cst_37 [1, 2] : vector<1x1x128xf32> to vector<1xf32>
    %80 = vector.shape_cast %79 : vector<1xf32> to vector<1x1x1xf32>
    %81 = vector.extract %80[0, 0, 0] : f32 from vector<1x1x1xf32>
    %cst_38 = arith.constant 6.10351563E-5 : f32
    %82 = arith.mulf %76, %cst_38 : f32
    %cst_39 = arith.constant 6.10351563E-5 : f32
    %83 = arith.mulf %81, %cst_39 : f32
    %84 = arith.mulf %82, %82 : f32
    %85 = arith.subf %83, %84 : f32
    %86 = vector.broadcast %82 : f32 to vector<1x128xf32>
    %cst_40 = arith.constant 9.99999974E-6 : f32
    %87 = arith.addf %85, %cst_40 : f32
    %88 = math.rsqrt %87 : f32
    %89 = vector.broadcast %88 : f32 to vector<1x128xf32>
    %90 = vector.extract_strided_slice %32 {offsets = [0, 384], sizes = [1, 128], strides = [1, 1]} : vector<1x512xf32> to vector<1x128xf32>
    %91 = vector.shape_cast %90 : vector<1x128xf32> to vector<1x1x128xf32>
    %cst_41 = arith.constant dense<0.000000e+00> : vector<1xf32>
    %92 = vector.multi_reduction <add>, %91, %cst_41 [1, 2] : vector<1x1x128xf32> to vector<1xf32>
    %93 = vector.shape_cast %92 : vector<1xf32> to vector<1x1x1xf32>
    %94 = vector.extract %93[0, 0, 0] : f32 from vector<1x1x1xf32>
    %95 = vector.extract_strided_slice %35 {offsets = [0, 384], sizes = [1, 128], strides = [1, 1]} : vector<1x512xf32> to vector<1x128xf32>
    %96 = vector.shape_cast %95 : vector<1x128xf32> to vector<1x1x128xf32>
    %cst_42 = arith.constant dense<0.000000e+00> : vector<1xf32>
    %97 = vector.multi_reduction <add>, %96, %cst_42 [1, 2] : vector<1x1x128xf32> to vector<1xf32>
    %98 = vector.shape_cast %97 : vector<1xf32> to vector<1x1x1xf32>
    %99 = vector.extract %98[0, 0, 0] : f32 from vector<1x1x1xf32>
    %cst_43 = arith.constant 6.10351563E-5 : f32
    %100 = arith.mulf %94, %cst_43 : f32
    %cst_44 = arith.constant 6.10351563E-5 : f32
    %101 = arith.mulf %99, %cst_44 : f32
    %102 = arith.mulf %100, %100 : f32
    %103 = arith.subf %101, %102 : f32
    %104 = vector.broadcast %100 : f32 to vector<1x128xf32>
    %cst_45 = arith.constant 9.99999974E-6 : f32
    %105 = arith.addf %103, %cst_45 : f32
    %106 = math.rsqrt %105 : f32
    %107 = vector.broadcast %106 : f32 to vector<1x128xf32>
    %108 = tpu.concatenate %50, %68, %86, %104 in 1 : vector<1x128xf32>, vector<1x128xf32>, vector<1x128xf32>, vector<1x128xf32> -> vector<1x512xf32>
    %109 = tpu.concatenate %53, %71, %89, %107 in 1 : vector<1x128xf32>, vector<1x128xf32>, vector<1x128xf32>, vector<1x128xf32> -> vector<1x512xf32>
    %110 = vector.broadcast %108 : vector<1x512xf32> to vector<128x512xf32>
    %111 = arith.subf %30, %110 : vector<128x512xf32>
    %112 = vector.broadcast %3 : vector<128x1xf32> to vector<128x512xf32>
    %113 = arith.mulf %112, %111 : vector<128x512xf32>
    %114 = vector.broadcast %109 : vector<1x512xf32> to vector<128x512xf32>
    %115 = arith.mulf %113, %114 : vector<128x512xf32>
    %116 = vector.broadcast %4 : vector<128x1xf32> to vector<128x512xf32>
    %117 = arith.addf %115, %116 : vector<128x512xf32>
    %118 = tpu.iota {dimensions = array<i32: 1>} : vector<1x128xi32>
    %119 = tpu.concatenate %118, %118, %118, %118 in 1 : vector<1x128xi32>, vector<1x128xi32>, vector<1x128xi32>, vector<1x128xi32> -> vector<1x512xi32>
    %cst_46 = arith.constant 0.000000e+00 : f32
    %120 = vector.broadcast %cst_46 : f32 to vector<128x512xf32>
    %c0_47 = arith.constant 0 : index
    %c7 = arith.constant 7 : index
    %121 = vector.load %arg4[%c0_47, %c7] : memref<128x10xf32, #tpu.memory_space<vmem>>, vector<128x1xf32>
    %c2_i32 = arith.constant 2 : i32
    %122 = tpu.dynamic_rotate %117 by %c2_i32 dim 1 : vector<128x512xf32>, i32 -> vector<128x512xf32>
    %c2_i32_48 = arith.constant 2 : i32
    %123 = vector.broadcast %c2_i32_48 : i32 to vector<1x512xi32>
    %124 = arith.cmpi sge, %119, %123 : vector<1x512xi32>
    %cst_49 = arith.constant 0.000000e+00 : f32
    %125 = vector.shape_cast %124 : vector<1x512xi1> to vector<1x512xi1>
    %126 = vector.broadcast %125 : vector<1x512xi1> to vector<128x512xi1>
    %127 = vector.broadcast %cst_49 : f32 to vector<128x512xf32>
    %128 = arith.select %126, %122, %127 : vector<128x512xi1>, vector<128x512xf32>
    %129 = vector.broadcast %121 : vector<128x1xf32> to vector<128x512xf32>
    %130 = arith.mulf %129, %128 : vector<128x512xf32>
    %131 = arith.addf %120, %130 : vector<128x512xf32>
    %c0_50 = arith.constant 0 : index
    %c8 = arith.constant 8 : index
    %132 = vector.load %arg4[%c0_50, %c8] : memref<128x10xf32, #tpu.memory_space<vmem>>, vector<128x1xf32>
    %133 = vector.broadcast %132 : vector<128x1xf32> to vector<128x512xf32>
    %134 = arith.mulf %133, %117 : vector<128x512xf32>
    %135 = arith.addf %131, %134 : vector<128x512xf32>
    %c0_51 = arith.constant 0 : index
    %c9 = arith.constant 9 : index
    %136 = vector.load %arg4[%c0_51, %c9] : memref<128x10xf32, #tpu.memory_space<vmem>>, vector<128x1xf32>
    %c510_i32 = arith.constant 510 : i32
    %137 = tpu.dynamic_rotate %117 by %c510_i32 dim 1 : vector<128x512xf32>, i32 -> vector<128x512xf32>
    %c126_i32 = arith.constant 126 : i32
    %138 = vector.broadcast %c126_i32 : i32 to vector<1x512xi32>
    %139 = arith.cmpi slt, %119, %138 : vector<1x512xi32>
    %cst_52 = arith.constant 0.000000e+00 : f32
    %140 = vector.shape_cast %139 : vector<1x512xi1> to vector<1x512xi1>
    %141 = vector.broadcast %140 : vector<1x512xi1> to vector<128x512xi1>
    %142 = vector.broadcast %cst_52 : f32 to vector<128x512xf32>
    %143 = arith.select %141, %137, %142 : vector<128x512xi1>, vector<128x512xf32>
    %144 = vector.broadcast %136 : vector<128x1xf32> to vector<128x512xf32>
    %145 = arith.mulf %144, %143 : vector<128x512xf32>
    %146 = arith.addf %135, %145 : vector<128x512xf32>
    %147 = vector.broadcast %5 : vector<128x1xf32> to vector<128x512xf32>
    %148 = arith.addf %146, %147 : vector<128x512xf32>
    %cst_53 = arith.constant 0.000000e+00 : f32
    %149 = vector.broadcast %cst_53 : f32 to vector<128x512xf32>
    %150 = arith.cmpf ogt, %148, %149 : vector<128x512xf32>
    %151 = vector.broadcast %1 : f32 to vector<128x512xf32>
    %152 = arith.mulf %151, %148 : vector<128x512xf32>
    %153 = arith.select %150, %148, %152 : vector<128x512xi1>, vector<128x512xf32>
    %cst_54 = arith.constant dense<0.000000e+00> : vector<512xf32>
    %154 = vector.multi_reduction <add>, %153, %cst_54 [0] : vector<128x512xf32> to vector<512xf32>
    %155 = vector.shape_cast %154 : vector<512xf32> to vector<1x512xf32>
    %156 = arith.mulf %153, %153 : vector<128x512xf32>
    %cst_55 = arith.constant dense<0.000000e+00> : vector<512xf32>
    %157 = vector.multi_reduction <add>, %156, %cst_55 [0] : vector<128x512xf32> to vector<512xf32>
    %158 = vector.shape_cast %157 : vector<512xf32> to vector<1x512xf32>
    %159 = vector.extract_strided_slice %155 {offsets = [0, 0], sizes = [1, 128], strides = [1, 1]} : vector<1x512xf32> to vector<1x128xf32>
    %160 = vector.shape_cast %159 : vector<1x128xf32> to vector<1x1x128xf32>
    %cst_56 = arith.constant dense<0.000000e+00> : vector<1xf32>
    %161 = vector.multi_reduction <add>, %160, %cst_56 [1, 2] : vector<1x1x128xf32> to vector<1xf32>
    %162 = vector.shape_cast %161 : vector<1xf32> to vector<1x1x1xf32>
    %163 = vector.extract %162[0, 0, 0] : f32 from vector<1x1x1xf32>
    %164 = vector.extract_strided_slice %158 {offsets = [0, 0], sizes = [1, 128], strides = [1, 1]} : vector<1x512xf32> to vector<1x128xf32>
    %165 = vector.shape_cast %164 : vector<1x128xf32> to vector<1x1x128xf32>
    %cst_57 = arith.constant dense<0.000000e+00> : vector<1xf32>
    %166 = vector.multi_reduction <add>, %165, %cst_57 [1, 2] : vector<1x1x128xf32> to vector<1xf32>
    %167 = vector.shape_cast %166 : vector<1xf32> to vector<1x1x1xf32>
    %168 = vector.extract %167[0, 0, 0] : f32 from vector<1x1x1xf32>
    %cst_58 = arith.constant 6.10351563E-5 : f32
    %169 = arith.mulf %163, %cst_58 : f32
    %cst_59 = arith.constant 6.10351563E-5 : f32
    %170 = arith.mulf %168, %cst_59 : f32
    %171 = arith.mulf %169, %169 : f32
    %172 = arith.subf %170, %171 : f32
    %173 = vector.broadcast %169 : f32 to vector<1x128xf32>
    %cst_60 = arith.constant 9.99999974E-6 : f32
    %174 = arith.addf %172, %cst_60 : f32
    %175 = math.rsqrt %174 : f32
    %176 = vector.broadcast %175 : f32 to vector<1x128xf32>
    %177 = vector.extract_strided_slice %155 {offsets = [0, 128], sizes = [1, 128], strides = [1, 1]} : vector<1x512xf32> to vector<1x128xf32>
    %178 = vector.shape_cast %177 : vector<1x128xf32> to vector<1x1x128xf32>
    %cst_61 = arith.constant dense<0.000000e+00> : vector<1xf32>
    %179 = vector.multi_reduction <add>, %178, %cst_61 [1, 2] : vector<1x1x128xf32> to vector<1xf32>
    %180 = vector.shape_cast %179 : vector<1xf32> to vector<1x1x1xf32>
    %181 = vector.extract %180[0, 0, 0] : f32 from vector<1x1x1xf32>
    %182 = vector.extract_strided_slice %158 {offsets = [0, 128], sizes = [1, 128], strides = [1, 1]} : vector<1x512xf32> to vector<1x128xf32>
    %183 = vector.shape_cast %182 : vector<1x128xf32> to vector<1x1x128xf32>
    %cst_62 = arith.constant dense<0.000000e+00> : vector<1xf32>
    %184 = vector.multi_reduction <add>, %183, %cst_62 [1, 2] : vector<1x1x128xf32> to vector<1xf32>
    %185 = vector.shape_cast %184 : vector<1xf32> to vector<1x1x1xf32>
    %186 = vector.extract %185[0, 0, 0] : f32 from vector<1x1x1xf32>
    %cst_63 = arith.constant 6.10351563E-5 : f32
    %187 = arith.mulf %181, %cst_63 : f32
    %cst_64 = arith.constant 6.10351563E-5 : f32
    %188 = arith.mulf %186, %cst_64 : f32
    %189 = arith.mulf %187, %187 : f32
    %190 = arith.subf %188, %189 : f32
    %191 = vector.broadcast %187 : f32 to vector<1x128xf32>
    %cst_65 = arith.constant 9.99999974E-6 : f32
    %192 = arith.addf %190, %cst_65 : f32
    %193 = math.rsqrt %192 : f32
    %194 = vector.broadcast %193 : f32 to vector<1x128xf32>
    %195 = vector.extract_strided_slice %155 {offsets = [0, 256], sizes = [1, 128], strides = [1, 1]} : vector<1x512xf32> to vector<1x128xf32>
    %196 = vector.shape_cast %195 : vector<1x128xf32> to vector<1x1x128xf32>
    %cst_66 = arith.constant dense<0.000000e+00> : vector<1xf32>
    %197 = vector.multi_reduction <add>, %196, %cst_66 [1, 2] : vector<1x1x128xf32> to vector<1xf32>
    %198 = vector.shape_cast %197 : vector<1xf32> to vector<1x1x1xf32>
    %199 = vector.extract %198[0, 0, 0] : f32 from vector<1x1x1xf32>
    %200 = vector.extract_strided_slice %158 {offsets = [0, 256], sizes = [1, 128], strides = [1, 1]} : vector<1x512xf32> to vector<1x128xf32>
    %201 = vector.shape_cast %200 : vector<1x128xf32> to vector<1x1x128xf32>
    %cst_67 = arith.constant dense<0.000000e+00> : vector<1xf32>
    %202 = vector.multi_reduction <add>, %201, %cst_67 [1, 2] : vector<1x1x128xf32> to vector<1xf32>
    %203 = vector.shape_cast %202 : vector<1xf32> to vector<1x1x1xf32>
    %204 = vector.extract %203[0, 0, 0] : f32 from vector<1x1x1xf32>
    %cst_68 = arith.constant 6.10351563E-5 : f32
    %205 = arith.mulf %199, %cst_68 : f32
    %cst_69 = arith.constant 6.10351563E-5 : f32
    %206 = arith.mulf %204, %cst_69 : f32
    %207 = arith.mulf %205, %205 : f32
    %208 = arith.subf %206, %207 : f32
    %209 = vector.broadcast %205 : f32 to vector<1x128xf32>
    %cst_70 = arith.constant 9.99999974E-6 : f32
    %210 = arith.addf %208, %cst_70 : f32
    %211 = math.rsqrt %210 : f32
    %212 = vector.broadcast %211 : f32 to vector<1x128xf32>
    %213 = vector.extract_strided_slice %155 {offsets = [0, 384], sizes = [1, 128], strides = [1, 1]} : vector<1x512xf32> to vector<1x128xf32>
    %214 = vector.shape_cast %213 : vector<1x128xf32> to vector<1x1x128xf32>
    %cst_71 = arith.constant dense<0.000000e+00> : vector<1xf32>
    %215 = vector.multi_reduction <add>, %214, %cst_71 [1, 2] : vector<1x1x128xf32> to vector<1xf32>
    %216 = vector.shape_cast %215 : vector<1xf32> to vector<1x1x1xf32>
    %217 = vector.extract %216[0, 0, 0] : f32 from vector<1x1x1xf32>
    %218 = vector.extract_strided_slice %158 {offsets = [0, 384], sizes = [1, 128], strides = [1, 1]} : vector<1x512xf32> to vector<1x128xf32>
    %219 = vector.shape_cast %218 : vector<1x128xf32> to vector<1x1x128xf32>
    %cst_72 = arith.constant dense<0.000000e+00> : vector<1xf32>
    %220 = vector.multi_reduction <add>, %219, %cst_72 [1, 2] : vector<1x1x128xf32> to vector<1xf32>
    %221 = vector.shape_cast %220 : vector<1xf32> to vector<1x1x1xf32>
    %222 = vector.extract %221[0, 0, 0] : f32 from vector<1x1x1xf32>
    %cst_73 = arith.constant 6.10351563E-5 : f32
    %223 = arith.mulf %217, %cst_73 : f32
    %cst_74 = arith.constant 6.10351563E-5 : f32
    %224 = arith.mulf %222, %cst_74 : f32
    %225 = arith.mulf %223, %223 : f32
    %226 = arith.subf %224, %225 : f32
    %227 = vector.broadcast %223 : f32 to vector<1x128xf32>
    %cst_75 = arith.constant 9.99999974E-6 : f32
    %228 = arith.addf %226, %cst_75 : f32
    %229 = math.rsqrt %228 : f32
    %230 = vector.broadcast %229 : f32 to vector<1x128xf32>
    %231 = tpu.concatenate %173, %191, %209, %227 in 1 : vector<1x128xf32>, vector<1x128xf32>, vector<1x128xf32>, vector<1x128xf32> -> vector<1x512xf32>
    %232 = tpu.concatenate %176, %194, %212, %230 in 1 : vector<1x128xf32>, vector<1x128xf32>, vector<1x128xf32>, vector<1x128xf32> -> vector<1x512xf32>
    %233 = vector.broadcast %231 : vector<1x512xf32> to vector<128x512xf32>
    %234 = arith.subf %153, %233 : vector<128x512xf32>
    %235 = vector.broadcast %6 : vector<128x1xf32> to vector<128x512xf32>
    %236 = arith.mulf %235, %234 : vector<128x512xf32>
    %237 = vector.broadcast %232 : vector<1x512xf32> to vector<128x512xf32>
    %238 = arith.mulf %236, %237 : vector<128x512xf32>
    %239 = vector.broadcast %7 : vector<128x1xf32> to vector<128x512xf32>
    %240 = arith.addf %238, %239 : vector<128x512xf32>
    %c0_76 = arith.constant 0 : index
    %c0_77 = arith.constant 0 : index
    %241 = vector.load %arg3[%c0_76, %c0_77] : memref<64x128xbf16, #tpu.memory_space<vmem>>, vector<64x128xbf16>
    %242 = arith.truncf %240 : vector<128x512xf32> to vector<128x512xbf16>
    %cst_78 = arith.constant dense<0.000000e+00> : vector<64x512xf32>
    %243 = tpu.matmul %241, %242, %cst_78 {dimension_numbers = #tpu.dot_dimension_numbers<[1], [0], [0], [1], [0, 0, 1, 1], [], []>} : vector<64x128xbf16>, vector<128x512xbf16>, vector<64x512xf32> -> vector<64x512xf32>
    %244 = vector.broadcast %8 : vector<64x1xf32> to vector<64x512xf32>
    %245 = arith.addf %243, %244 : vector<64x512xf32>
    %c0_79 = arith.constant 0 : index
    %c0_80 = arith.constant 0 : index
    %c0_81 = arith.constant 0 : index
    %246 = vector.load %arg1[%c0_79, %c0_80, %c0_81] : memref<4x64x128xf32, #tpu.memory_space<vmem>>, vector<1x64x128xf32>
    %247 = vector.shape_cast %246 : vector<1x64x128xf32> to vector<64x128xf32>
    %248 = vector.extract_strided_slice %245 {offsets = [0, 0], sizes = [64, 128], strides = [1, 1]} : vector<64x512xf32> to vector<64x128xf32>
    %249 = arith.addf %247, %248 : vector<64x128xf32>
    %c0_82 = arith.constant 0 : index
    %c0_83 = arith.constant 0 : index
    %c0_84 = arith.constant 0 : index
    %250 = vector.load %arg6[%c0_82, %c0_83, %c0_84] : memref<4x64x128xf32, #tpu.memory_space<vmem>>, vector<1x64x128xf32>
    %251 = vector.shape_cast %250 : vector<1x64x128xf32> to vector<64x128xf32>
    %252 = vector.shape_cast %249 : vector<64x128xf32> to vector<1x64x128xf32>
    tpu.vector_store %arg6[%c0_82, %c0_83, %c0_84], %252 {strides = array<i32>} : memref<4x64x128xf32, #tpu.memory_space<vmem>>, vector<1x64x128xf32>,
    %c1_85 = arith.constant 1 : index
    %c0_86 = arith.constant 0 : index
    %c0_87 = arith.constant 0 : index
    %253 = vector.load %arg1[%c1_85, %c0_86, %c0_87] : memref<4x64x128xf32, #tpu.memory_space<vmem>>, vector<1x64x128xf32>
    %254 = vector.shape_cast %253 : vector<1x64x128xf32> to vector<64x128xf32>
    %255 = vector.extract_strided_slice %245 {offsets = [0, 128], sizes = [64, 128], strides = [1, 1]} : vector<64x512xf32> to vector<64x128xf32>
    %256 = arith.addf %254, %255 : vector<64x128xf32>
    %c1_88 = arith.constant 1 : index
    %c0_89 = arith.constant 0 : index
    %c0_90 = arith.constant 0 : index
    %257 = vector.load %arg6[%c1_88, %c0_89, %c0_90] : memref<4x64x128xf32, #tpu.memory_space<vmem>>, vector<1x64x128xf32>
    %258 = vector.shape_cast %257 : vector<1x64x128xf32> to vector<64x128xf32>
    %259 = vector.shape_cast %256 : vector<64x128xf32> to vector<1x64x128xf32>
    tpu.vector_store %arg6[%c1_88, %c0_89, %c0_90], %259 {strides = array<i32>} : memref<4x64x128xf32, #tpu.memory_space<vmem>>, vector<1x64x128xf32>,
    %c2_91 = arith.constant 2 : index
    %c0_92 = arith.constant 0 : index
    %c0_93 = arith.constant 0 : index
    %260 = vector.load %arg1[%c2_91, %c0_92, %c0_93] : memref<4x64x128xf32, #tpu.memory_space<vmem>>, vector<1x64x128xf32>
    %261 = vector.shape_cast %260 : vector<1x64x128xf32> to vector<64x128xf32>
    %262 = vector.extract_strided_slice %245 {offsets = [0, 256], sizes = [64, 128], strides = [1, 1]} : vector<64x512xf32> to vector<64x128xf32>
    %263 = arith.addf %261, %262 : vector<64x128xf32>
    %c2_94 = arith.constant 2 : index
    %c0_95 = arith.constant 0 : index
    %c0_96 = arith.constant 0 : index
    %264 = vector.load %arg6[%c2_94, %c0_95, %c0_96] : memref<4x64x128xf32, #tpu.memory_space<vmem>>, vector<1x64x128xf32>
    %265 = vector.shape_cast %264 : vector<1x64x128xf32> to vector<64x128xf32>
    %266 = vector.shape_cast %263 : vector<64x128xf32> to vector<1x64x128xf32>
    tpu.vector_store %arg6[%c2_94, %c0_95, %c0_96], %266 {strides = array<i32>} : memref<4x64x128xf32, #tpu.memory_space<vmem>>, vector<1x64x128xf32>,
    %c3_97 = arith.constant 3 : index
    %c0_98 = arith.constant 0 : index
    %c0_99 = arith.constant 0 : index
    %267 = vector.load %arg1[%c3_97, %c0_98, %c0_99] : memref<4x64x128xf32, #tpu.memory_space<vmem>>, vector<1x64x128xf32>
    %268 = vector.shape_cast %267 : vector<1x64x128xf32> to vector<64x128xf32>
    %269 = vector.extract_strided_slice %245 {offsets = [0, 384], sizes = [64, 128], strides = [1, 1]} : vector<64x512xf32> to vector<64x128xf32>
    %270 = arith.addf %268, %269 : vector<64x128xf32>
    %c3_100 = arith.constant 3 : index
    %c0_101 = arith.constant 0 : index
    %c0_102 = arith.constant 0 : index
    %271 = vector.load %arg6[%c3_100, %c0_101, %c0_102] : memref<4x64x128xf32, #tpu.memory_space<vmem>>, vector<1x64x128xf32>
    %272 = vector.shape_cast %271 : vector<1x64x128xf32> to vector<64x128xf32>
    %273 = vector.shape_cast %270 : vector<64x128xf32> to vector<1x64x128xf32>
    tpu.vector_store %arg6[%c3_100, %c0_101, %c0_102], %273 {strides = array<i32>} : memref<4x64x128xf32, #tpu.memory_space<vmem>>, vector<1x64x128xf32>,
    return
  }
  func.func @transform_0(%arg0: i32) -> (i32, i32, i32) {
    %c0_i32 = arith.constant 0 : i32
    %c0_i32_0 = arith.constant 0 : i32
    %c0_i32_1 = arith.constant 0 : i32
    return %arg0, %c0_i32, %c0_i32_0 : i32, i32, i32
  }
  func.func @transform_1(%arg0: i32) -> (i32, i32) {
    %c0_i32 = arith.constant 0 : i32
    %c0_i32_0 = arith.constant 0 : i32
    %c0_i32_1 = arith.constant 0 : i32
    return %c0_i32, %c0_i32_0 : i32, i32
  }
  func.func @transform_2(%arg0: i32) -> (i32, i32) {
    %c0_i32 = arith.constant 0 : i32
    %c0_i32_0 = arith.constant 0 : i32
    %c0_i32_1 = arith.constant 0 : i32
    return %c0_i32, %c0_i32_0 : i32, i32
  }
  func.func @transform_3(%arg0: i32) -> (i32, i32) {
    %c0_i32 = arith.constant 0 : i32
    %c0_i32_0 = arith.constant 0 : i32
    %c0_i32_1 = arith.constant 0 : i32
    return %c0_i32, %c0_i32_0 : i32, i32
  }
  func.func @transform_4(%arg0: i32) -> i32 {
    %c0_i32 = arith.constant 0 : i32
    %c0_i32_0 = arith.constant 0 : i32
    return %c0_i32 : i32
  }
  func.func @transform_5(%arg0: i32) -> (i32, i32, i32) {
    %c0_i32 = arith.constant 0 : i32
    %c0_i32_0 = arith.constant 0 : i32
    %c0_i32_1 = arith.constant 0 : i32
    return %arg0, %c0_i32, %c0_i32_0 : i32, i32, i32
  }
}

</mosaic_0001>

<llo_original>
// kernel: tpu_custom_call.1
$region0: #{tpu_custom_call.1}
  #allocation0 [shape = 'u32[]', space=smem, size = 0x4, offset = 0x4, fixed_abs, tag = 'smem constant byte address 0x4 - core index']
  #allocation1 [shape = 'u32[144,128]{1,0:T(1,128)}', space=vmem, size = 0x12000, scoped, tag = 'internal scratch']
  %s0 = inlined_call_operand.hbm [shape: f32[8,64,128], index: 0, kind: input, shape index: {}]
  %s1 = inlined_call_operand.vmem [shape: bf16[128,64], index: 1, kind: input, shape index: {}]
  %s2 = inlined_call_operand.vmem [shape: bf16[64,128], index: 2, kind: input, shape index: {}]
  %s3 = inlined_call_operand.vmem [shape: f32[128,10], index: 3, kind: input, shape index: {}]
  %s4 = inlined_call_operand.vmem [shape: f32[2], index: 4, kind: input, shape index: {}]
  %s5 = inlined_call_operand.hbm [shape: f32[8,64,128], index: 5, kind: output, shape index: {}]
  %s6 = sld [smem:[#allocation0]]
  $region61: #{tpu_custom_call.1} parent=0
    _
  %s8 = ssub.s32 1, %s6
  %s9 = scalar_select 0, %s8, %s6
  $region1: #{tpu_custom_call.1} parent=0
    #allocation2 [shape = 'u8[262144]{0}', space=vmem, size = 0x40000, scoped, tag = 'input window, operand 0']
    #allocation3 [shape = 's32[2]{0}', space=sflag, size = 0x8, scoped, tag = 'scoped memory for tpu_custom_call.1']
    #allocation4 [shape = 's32[2]{0}', space=sflag, size = 0x8, scoped, tag = 'scoped memory for tpu_custom_call.1']
    #allocation5 [shape = 's32[2]{0}', space=sflag, size = 0x8, scoped, tag = 'scoped memory for tpu_custom_call.1']
    #allocation6 [shape = 'u8[512]{0}', space=smem, size = 0x200, scoped, tag = 'input window, operand 4, single buffered']
    #allocation7 [shape = 'u8[262144]{0}', space=vmem, size = 0x40000, scoped, tag = 'output window, operand 0']
    %10 = vsyncpa [#allocation3], 0
    %s11 = scalar_lea.sflag [#allocation3], 1
    %12 = vsyncpa %s11, 0
    %13 = vsyncpa [#allocation5], 0
    %14 = vsyncpa [#allocation4], 0
    %s15 = scalar_lea.sflag [#allocation4], 1
    %16 = vsyncpa %s15, 0
    loop: start=0, step=1, limit=4
    $region2: #{tpu_custom_call.1} parent=1 // loop_pre_header
      _
    $region3: #{tpu_custom_call.1} parent=1 // loop_header
      %s18 = sphi 0, %s22
      %p19 = scmp.ge.s32.totalorder %s18, 4
      %s28 = sphi 0, %s30
      %s31 = sphi 0, %s28
      %s32 = sphi 0, %s31
      %s48 = sphi 0, %s32
      %s52 = sphi 0, %s52
      %s54 = sphi 0, %s52
      %s55 = sphi 0, %s54
      %s69 = sphi 0, %s55
      %s73 = sphi 0, %s73
      %s75 = sphi 0, %s73
      %s76 = sphi 0, %s75
      %s90 = sphi 0, %s76
      %s94 = sphi 0, %s94
      %s96 = sphi 0, %s94
      %s97 = sphi 0, %s96
      %s111 = sphi 0, %s97
      %s115 = sphi 0, %s115
      %s117 = sphi 0, %s115
      %s118 = sphi 0, %s117
      %s132 = sphi 0, %s118
      %s138 = sphi 0, %s140
      %s141 = sphi 0, %s138
      %s142 = sphi 0, %s141
      %s158 = sphi 0, %s142
    $region4: #{tpu_custom_call.1} parent=1 // loop_header_branch
      %21 = sbr.rel (%p19) target = $region8
    $region5: #{tpu_custom_call.1} parent=1 // loop_body
      %s23 = ssub.s32 %s18, 1
      %s24 = ssub.s32 %s18, 2
      %s25 = sadd.s32 %s18, 1
      %s26 = ssub.s32 %s18, %s25
      %p27 = scmp.eq.s32.totalorder %s26, 0
      %s29 = sadd.s32 %s28, 1
      %s30 = scalar_select %p27, %s28, %s29
      %p33 = pneg %p27
      %p34 = scmp.eq.s32.totalorder %s18, 1
      %p35 = por %p33, %p34
      %p36 = scmp.ne.s32.totalorder %s28, %s31
      %p37 = scmp.eq.s32.totalorder %s18, 0
      %p38 = por %p36, %p37
      %p39 = scmp.ne.s32.totalorder %s28, %s31
      %p40 = scmp.eq.s32.totalorder %s23, 1
      %p41 = por %p39, %p40
      %p42 = scmp.ne.s32.totalorder %s31, %s32
      %p43 = scmp.eq.s32.totalorder %s23, 0
      %p44 = por %p42, %p43
      %p45 = scmp.ne.s32.totalorder %s31, %s32
      %p46 = scmp.eq.s32.totalorder %s24, 1
      %p47 = por %p45, %p46
      %p49 = scmp.ne.s32.totalorder %s32, %s48
      %p50 = scmp.eq.s32.totalorder %s24, 0
      %p51 = por %p49, %p50
      %s53 = sadd.s32 %s52, 1
      %p56 = scmp.eq.s32.totalorder %s18, 1
      %p57 = scmp.ne.s32.totalorder %s52, %s54
      %p58 = scmp.eq.s32.totalorder %s18, 0
      %p59 = por %p57, %p58
      %p60 = scmp.ne.s32.totalorder %s52, %s54
      %p61 = scmp.eq.s32.totalorder %s23, 1
      %p62 = por %p60, %p61
      %p63 = scmp.ne.s32.totalorder %s54, %s55
      %p64 = scmp.eq.s32.totalorder %s23, 0
      %p65 = por %p63, %p64
      %p66 = scmp.ne.s32.totalorder %s54, %s55
      %p67 = scmp.eq.s32.totalorder %s24, 1
      %p68 = por %p66, %p67
      %p70 = scmp.ne.s32.totalorder %s55, %s69
      %p71 = scmp.eq.s32.totalorder %s24, 0
      %p72 = por %p70, %p71
      %s74 = sadd.s32 %s73, 1
      %p77 = scmp.eq.s32.totalorder %s18, 1
      %p78 = scmp.ne.s32.totalorder %s73, %s75
      %p79 = scmp.eq.s32.totalorder %s18, 0
      %p80 = por %p78, %p79
      %p81 = scmp.ne.s32.totalorder %s73, %s75
      %p82 = scmp.eq.s32.totalorder %s23, 1
      %p83 = por %p81, %p82
      %p84 = scmp.ne.s32.totalorder %s75, %s76
      %p85 = scmp.eq.s32.totalorder %s23, 0
      %p86 = por %p84, %p85
      %p87 = scmp.ne.s32.totalorder %s75, %s76
      %p88 = scmp.eq.s32.totalorder %s24, 1
      %p89 = por %p87, %p88
      %p91 = scmp.ne.s32.totalorder %s76, %s90
      %p92 = scmp.eq.s32.totalorder %s24, 0
      %p93 = por %p91, %p92
      %s95 = sadd.s32 %s94, 1
      %p98 = scmp.eq.s32.totalorder %s18, 1
      %p99 = scmp.ne.s32.totalorder %s94, %s96
      %p100 = scmp.eq.s32.totalorder %s18, 0
      %p101 = por %p99, %p100
      %p102 = scmp.ne.s32.totalorder %s94, %s96
      %p103 = scmp.eq.s32.totalorder %s23, 1
      %p104 = por %p102, %p103
      %p105 = scmp.ne.s32.totalorder %s96, %s97
      %p106 = scmp.eq.s32.totalorder %s23, 0
      %p107 = por %p105, %p106
      %p108 = scmp.ne.s32.totalorder %s96, %s97
      %p109 = scmp.eq.s32.totalorder %s24, 1
      %p110 = por %p108, %p109
      %p112 = scmp.ne.s32.totalorder %s97, %s111
      %p113 = scmp.eq.s32.totalorder %s24, 0
      %p114 = por %p112, %p113
      %s116 = sadd.s32 %s115, 1
      %p119 = scmp.eq.s32.totalorder %s18, 1
      %p120 = scmp.ne.s32.totalorder %s115, %s117
      %p121 = scmp.eq.s32.totalorder %s18, 0
      %p122 = por %p120, %p121
      %p123 = scmp.ne.s32.totalorder %s115, %s117
      %p124 = scmp.eq.s32.totalorder %s23, 1
      %p125 = por %p123, %p124
      %p126 = scmp.ne.s32.totalorder %s117, %s118
      %p127 = scmp.eq.s32.totalorder %s23, 0
      %p128 = por %p126, %p127
      %p129 = scmp.ne.s32.totalorder %s117, %s118
      %p130 = scmp.eq.s32.totalorder %s24, 1
      %p131 = por %p129, %p130
      %p133 = scmp.ne.s32.totalorder %s118, %s132
      %p134 = scmp.eq.s32.totalorder %s24, 0
      %p135 = por %p133, %p134
      %s136 = ssub.s32 %s18, %s25
      %p137 = scmp.eq.s32.totalorder %s136, 0
      %s139 = sadd.s32 %s138, 1
      %s140 = scalar_select %p137, %s138, %s139
      %p143 = pneg %p137
      %p144 = scmp.eq.s32.totalorder %s18, 1
      %p145 = por %p143, %p144
      %p146 = scmp.ne.s32.totalorder %s138, %s141
      %p147 = scmp.eq.s32.totalorder %s18, 0
      %p148 = por %p146, %p147
      %p149 = scmp.ne.s32.totalorder %s138, %s141
      %p150 = scmp.eq.s32.totalorder %s23, 1
      %p151 = por %p149, %p150
      %p152 = scmp.ne.s32.totalorder %s141, %s142
      %p153 = scmp.eq.s32.totalorder %s23, 0
      %p154 = por %p152, %p153
      %p155 = scmp.ne.s32.totalorder %s141, %s142
      %p156 = scmp.eq.s32.totalorder %s24, 1
      %p157 = por %p155, %p156
      %p159 = scmp.ne.s32.totalorder %s142, %s158
      %p160 = scmp.eq.s32.totalorder %s24, 0
      %p161 = por %p159, %p160
      %p162 = scmp.le.s32.totalorder 1, %s18
      %p163 = scmp.lt.s32.totalorder %s18, 3
      %p164 = pnand %p162, %p163
      %p165 = pneg %p164
      // Predicated region
      $region9: #{tpu_custom_call.1} parent=5 // pred_check
        _
      $region10: #{tpu_custom_call.1} parent=5 // pred_check_branch
        %167 = sbr.rel (%p164) target = $region12
      $region11: #{tpu_custom_call.1} parent=5 // pred_region
        %s168 = ssub.s32 %s18, 1
        // Predicated region
        $region13: #{tpu_custom_call.1} parent=11 // pred_check
          %p169 = pneg %p65
        $region14: #{tpu_custom_call.1} parent=11 // pred_check_branch
          %171 = sbr.rel (%p169) target = $region16
        $region15: #{tpu_custom_call.1} parent=11 // pred_region
          _
        $region16: #{tpu_custom_call.1} parent=11 // pred_fallthru
          _
        // Predicated region
        $region17: #{tpu_custom_call.1} parent=11 // pred_check
          %p172 = pneg %p86
        $region18: #{tpu_custom_call.1} parent=11 // pred_check_branch
          %174 = sbr.rel (%p172) target = $region20
        $region19: #{tpu_custom_call.1} parent=11 // pred_region
          _
        $region20: #{tpu_custom_call.1} parent=11 // pred_fallthru
          _
        // Predicated region
        $region21: #{tpu_custom_call.1} parent=11 // pred_check
          %p175 = pneg %p107
        $region22: #{tpu_custom_call.1} parent=11 // pred_check_branch
          %177 = sbr.rel (%p175) target = $region24
        $region23: #{tpu_custom_call.1} parent=11 // pred_region
          _
        $region24: #{tpu_custom_call.1} parent=11 // pred_fallthru
          _
        // Predicated region
        $region25: #{tpu_custom_call.1} parent=11 // pred_check
          %p178 = pneg %p128
        $region26: #{tpu_custom_call.1} parent=11 // pred_check_branch
          %180 = sbr.rel (%p178) target = $region28
        $region27: #{tpu_custom_call.1} parent=11 // pred_region
          %s182 = ssub.s32 16, 16
          %183 = vsyncadd [#allocation5], %s182
          %s185 = sshll.u32 %s4, 4
          %s186 = int_to_ptr.vmem [resolvable:$true] %s185
          %188 = dma.vmem_to_smem %s186, 16, [#allocation6], [#allocation5]
        $region28: #{tpu_custom_call.1} parent=11 // pred_fallthru
          _
      $region12: #{tpu_custom_call.1} parent=5 // pred_fallthru
        _
      %p189 = scmp.lt.s32.totalorder %s18, 2
      // Predicated region
      $region29: #{tpu_custom_call.1} parent=5 // pred_check
        %p190 = pneg %p189
      $region30: #{tpu_custom_call.1} parent=5 // pred_check_branch
        %192 = sbr.rel (%p190) target = $region32
      $region31: #{tpu_custom_call.1} parent=5 // pred_region
        // Predicated region
        $region33: #{tpu_custom_call.1} parent=31 // pred_check
          %p193 = pneg %p38
        $region34: #{tpu_custom_call.1} parent=31 // pred_check_branch
          %195 = sbr.rel (%p193) target = $region36
        $region35: #{tpu_custom_call.1} parent=31 // pred_region
          %s196 = sand.u32 %s28, 1
          %s197 = scalar_lea.sflag [#allocation3], %s196
          %s198 = sand.u32 %s28, 1
          %s199 = smul.addr %s198, 256
          %s200 = scalar_lea.vmem [#allocation2], %s199
          %s201 = smul.u32 4, %s18
          %s203 = ssub.s32 4096, 4096
          %204 = vsyncadd %s197, %s203
          %s205 = smul.addr %s201, 8
          %s206 = smul.addr %s205, 128
          %s207 = scalar_lea.hbm %s0, %s206
          %s208 = sshll.u32 %s200, 4
          %s209 = int_to_ptr.vmem [resolvable:$true] %s208
          %214 = dma.hbm_to_vmem [thread:$0]  %s207, 4096, %s209, %s197, 128, 128, 8
        $region36: #{tpu_custom_call.1} parent=31 // pred_fallthru
          _
      $region32: #{tpu_custom_call.1} parent=5 // pred_fallthru
        _
      %p215 = scmp.le.s32.totalorder 1, %s18
      %p216 = scmp.lt.s32.totalorder %s18, 3
      %p217 = pnand %p215, %p216
      %p218 = pneg %p217
      // Predicated region
      $region37: #{tpu_custom_call.1} parent=5 // pred_check
        _
      $region38: #{tpu_custom_call.1} parent=5 // pred_check_branch
        %220 = sbr.rel (%p217) target = $region40
      $region39: #{tpu_custom_call.1} parent=5 // pred_region
        %s221 = ssub.s32 %s18, 1
        %s222 = sand.u32 %s31, 1
        %s223 = scalar_lea.sflag [#allocation3], %s222
        %s224 = sand.u32 %s31, 1
        %s225 = smul.addr %s224, 256
        %s226 = scalar_lea.vmem [#allocation2], %s225
        // Predicated region
        $region41: #{tpu_custom_call.1} parent=39 // pred_check
          %p227 = pneg %p44
        $region42: #{tpu_custom_call.1} parent=39 // pred_check_branch
          %229 = sbr.rel (%p227) target = $region44
        $region43: #{tpu_custom_call.1} parent=39 // pred_region
          %230 = dma.done %s223, 4096
        $region44: #{tpu_custom_call.1} parent=39 // pred_fallthru
          _
        // Predicated region
        $region45: #{tpu_custom_call.1} parent=39 // pred_check
          %p231 = pneg %p128
        $region46: #{tpu_custom_call.1} parent=39 // pred_check_branch
          %233 = sbr.rel (%p231) target = $region48
        $region47: #{tpu_custom_call.1} parent=39 // pred_region
          %234 = dma.done [#allocation5], 16
        $region48: #{tpu_custom_call.1} parent=39 // pred_fallthru
          _
        %235 = sfence
        %s236 = sand.u32 %s31, 1
        %s237 = scalar_lea.sflag [#allocation3], %s236
        %s238 = sand.u32 %s31, 1
        %s239 = smul.addr %s238, 256
        %s240 = scalar_lea.vmem [#allocation2], %s239
        %p241 = pneg %p44
        %p242 = pneg %p41
        %p243 = pneg %p65
        %p244 = pneg %p62
        %p245 = pneg %p86
        %p246 = pneg %p83
        %p247 = pneg %p107
        %p248 = pneg %p104
        %p249 = pneg %p128
        %p250 = pneg %p125
        %p251 = pneg %p154
        %p252 = pneg %p151
        %s253 = sand.u32 %s141, 1
        %s254 = scalar_lea.sflag [#allocation4], %s253
        %s255 = sand.u32 %s141, 1
        %s256 = smul.addr %s255, 256
        %s257 = scalar_lea.vmem [#allocation7], %s256
        %s258 = smul.u32 4, %s23
        %s259 = smul.u32 4, %s23
        %s261 = sld [smem:[#allocation6]]
        %s262 = sld [smem:[#allocation6 + $0x1]]
        %v263 = vld [vmem:[%s3] sm:$0xff]
        %v264 = vld [vmem:[%s3 + $0x8] sm:$0xff]
        %v265 = vld [vmem:[%s3 + $0x10] sm:$0xff]
        %v266 = vld [vmem:[%s3 + $0x18] sm:$0xff]
        %v267 = vld [vmem:[%s3 + $0x20] sm:$0xff]
        %v268 = vld [vmem:[%s3 + $0x28] sm:$0xff]
        %v269 = vld [vmem:[%s3 + $0x30] sm:$0xff]
        %v270 = vld [vmem:[%s3 + $0x38] sm:$0xff]
        %v271 = vld [vmem:[%s3 + $0x40] sm:$0xff]
        %v272 = vld [vmem:[%s3 + $0x48] sm:$0xff]
        %v273 = vld [vmem:[%s3 + $0x50] sm:$0xff]
        %v274 = vld [vmem:[%s3 + $0x58] sm:$0xff]
        %v275 = vld [vmem:[%s3 + $0x60] sm:$0xff]
        %v276 = vld [vmem:[%s3 + $0x68] sm:$0xff]
        %v277 = vld [vmem:[%s3 + $0x70] sm:$0xff]
        %v278 = vld [vmem:[%s3 + $0x78] sm:$0xff]
        %v279 = vld [vmem:[%s226] sm:$0xff]
        %v280 = vld [vmem:[%s226 + $0x8] sm:$0xff]
        %v281 = vld [vmem:[%s226 + $0x10] sm:$0xff]
        %v282 = vld [vmem:[%s226 + $0x18] sm:$0xff]
        %v283 = vld [vmem:[%s226 + $0x20] sm:$0xff]
        %v284 = vld [vmem:[%s226 + $0x28] sm:$0xff]
        %v285 = vld [vmem:[%s226 + $0x30] sm:$0xff]
        %v286 = vld [vmem:[%s226 + $0x38] sm:$0xff]
        %v287 = vpack.c.bf16 %v280, %v279
        %v288 = vpack.c.bf16 %v282, %v281
        %v289 = vpack.c.bf16 %v284, %v283
        %v290 = vpack.c.bf16 %v286, %v285
        %s291 = scalar_lea.vmem %s226, 64 [#allocation2]
        %v292 = vld [vmem:[%s291] sm:$0xff]
        %v293 = vld [vmem:[%s291 + $0x8] sm:$0xff]
        %v294 = vld [vmem:[%s291 + $0x10] sm:$0xff]
        %v295 = vld [vmem:[%s291 + $0x18] sm:$0xff]
        %v296 = vld [vmem:[%s291 + $0x20] sm:$0xff]
        %v297 = vld [vmem:[%s291 + $0x28] sm:$0xff]
        %v298 = vld [vmem:[%s291 + $0x30] sm:$0xff]
        %v299 = vld [vmem:[%s291 + $0x38] sm:$0xff]
        %v300 = vpack.c.bf16 %v293, %v292
        %v301 = vpack.c.bf16 %v295, %v294
        %v302 = vpack.c.bf16 %v297, %v296
        %v303 = vpack.c.bf16 %v299, %v298
        %s304 = scalar_lea.vmem %s226, 128 [#allocation2]
        %v305 = vld [vmem:[%s304] sm:$0xff]
        %v306 = vld [vmem:[%s304 + $0x8] sm:$0xff]
        %v307 = vld [vmem:[%s304 + $0x10] sm:$0xff]
        %v308 = vld [vmem:[%s304 + $0x18] sm:$0xff]
        %v309 = vld [vmem:[%s304 + $0x20] sm:$0xff]
        %v310 = vld [vmem:[%s304 + $0x28] sm:$0xff]
        %v311 = vld [vmem:[%s304 + $0x30] sm:$0xff]
        %v312 = vld [vmem:[%s304 + $0x38] sm:$0xff]
        %v313 = vpack.c.bf16 %v306, %v305
        %v314 = vpack.c.bf16 %v308, %v307
        %v315 = vpack.c.bf16 %v310, %v309
        %v316 = vpack.c.bf16 %v312, %v311
        %s317 = scalar_lea.vmem %s226, 192 [#allocation2]
        %v318 = vld [vmem:[%s317] sm:$0xff]
        %v319 = vld [vmem:[%s317 + $0x8] sm:$0xff]
        %v320 = vld [vmem:[%s317 + $0x10] sm:$0xff]
        %v321 = vld [vmem:[%s317 + $0x18] sm:$0xff]
        %v322 = vld [vmem:[%s317 + $0x20] sm:$0xff]
        %v323 = vld [vmem:[%s317 + $0x28] sm:$0xff]
        %v324 = vld [vmem:[%s317 + $0x30] sm:$0xff]
        %v325 = vld [vmem:[%s317 + $0x38] sm:$0xff]
        %v326 = vpack.c.bf16 %v319, %v318
        %v327 = vpack.c.bf16 %v321, %v320
        %v328 = vpack.c.bf16 %v323, %v322
        %v329 = vpack.c.bf16 %v325, %v324
        %v330 = vld [vmem:[%s1] sm:$0xf]
        %v331 = vld [vmem:[%s1 + $0x4] sm:$0xf]
        %v332 = vld [vmem:[%s1 + $0x8] sm:$0xf]
        %v333 = vld [vmem:[%s1 + $0xc] sm:$0xf]
        %v334 = vld [vmem:[%s1 + $0x10] sm:$0xf]
        %v335 = vld [vmem:[%s1 + $0x14] sm:$0xf]
        %v336 = vld [vmem:[%s1 + $0x18] sm:$0xf]
        %v337 = vld [vmem:[%s1 + $0x1c] sm:$0xf]
        %v338 = vld [vmem:[%s1 + $0x20] sm:$0xf]
        %v339 = vld [vmem:[%s1 + $0x24] sm:$0xf]
        %v340 = vld [vmem:[%s1 + $0x28] sm:$0xf]
        %v341 = vld [vmem:[%s1 + $0x2c] sm:$0xf]
        %v342 = vld [vmem:[%s1 + $0x30] sm:$0xf]
        %v343 = vld [vmem:[%s1 + $0x34] sm:$0xf]
        %v344 = vld [vmem:[%s1 + $0x38] sm:$0xf]
        %v345 = vld [vmem:[%s1 + $0x3c] sm:$0xf]
        %347 = vset.pattern.permute.xlu0 0
        %348 = vperm.xlu0 %347, %v263
        %v349 = vpop.permute.xlu0 %348
        %352 = vset.pattern.permute.xlu0 0
        %353 = vperm.xlu0 %352, %v264
        %v354 = vpop.permute.xlu0 %353
        %357 = vset.pattern.permute.xlu0 0
        %358 = vperm.xlu0 %357, %v265
        %v359 = vpop.permute.xlu0 %358
        %362 = vset.pattern.permute.xlu0 0
        %363 = vperm.xlu0 %362, %v266
        %v364 = vpop.permute.xlu0 %363
        %367 = vset.pattern.permute.xlu0 0
        %368 = vperm.xlu0 %367, %v267
        %v369 = vpop.permute.xlu0 %368
        %372 = vset.pattern.permute.xlu0 0
        %373 = vperm.xlu0 %372, %v268
        %v374 = vpop.permute.xlu0 %373
        %377 = vset.pattern.permute.xlu0 0
        %378 = vperm.xlu0 %377, %v269
        %v379 = vpop.permute.xlu0 %378
        %382 = vset.pattern.permute.xlu0 0
        %383 = vperm.xlu0 %382, %v270
        %v384 = vpop.permute.xlu0 %383
        %387 = vset.pattern.permute.xlu0 0
        %388 = vperm.xlu0 %387, %v271
        %v389 = vpop.permute.xlu0 %388
        %392 = vset.pattern.permute.xlu0 0
        %393 = vperm.xlu0 %392, %v272
        %v394 = vpop.permute.xlu0 %393
        %397 = vset.pattern.permute.xlu0 0
        %398 = vperm.xlu0 %397, %v273
        %v399 = vpop.permute.xlu0 %398
        %402 = vset.pattern.permute.xlu0 0
        %403 = vperm.xlu0 %402, %v274
        %v404 = vpop.permute.xlu0 %403
        %407 = vset.pattern.permute.xlu0 0
        %408 = vperm.xlu0 %407, %v275
        %v409 = vpop.permute.xlu0 %408
        %412 = vset.pattern.permute.xlu0 0
        %413 = vperm.xlu0 %412, %v276
        %v414 = vpop.permute.xlu0 %413
        %417 = vset.pattern.permute.xlu0 0
        %418 = vperm.xlu0 %417, %v277
        %v419 = vpop.permute.xlu0 %418
        %422 = vset.pattern.permute.xlu0 0
        %423 = vperm.xlu0 %422, %v278
        %v424 = vpop.permute.xlu0 %423
        %v442 = vunpack.c.l.b16 %v330
        %v443 = vunpack.c.l.b16 %v331
        %v444 = vunpack.c.l.b16 %v332
        %v445 = vunpack.c.l.b16 %v333
        %v446 = vunpack.c.l.b16 %v334
        %v447 = vunpack.c.l.b16 %v335
        %v448 = vunpack.c.l.b16 %v336
        %v449 = vunpack.c.l.b16 %v337
        %v450 = vunpack.c.l.b16 %v338
        %v451 = vunpack.c.l.b16 %v339
        %v452 = vunpack.c.l.b16 %v340
        %v453 = vunpack.c.l.b16 %v341
        %v454 = vunpack.c.l.b16 %v342
        %v455 = vunpack.c.l.b16 %v343
        %v456 = vunpack.c.l.b16 %v344
        %v457 = vunpack.c.l.b16 %v345
        %v458 = vpack.c.b16 %v443, %v442
        %v459 = vpack.c.b16 %v445, %v444
        %v460 = vpack.c.b16 %v447, %v446
        %v461 = vpack.c.b16 %v449, %v448
        %v462 = vpack.c.b16 %v451, %v450
        %v463 = vpack.c.b16 %v453, %v452
        %v464 = vpack.c.b16 %v455, %v454
        %v465 = vpack.c.b16 %v457, %v456
        %vm466 = vcmask 523264
        %v468 = vsel %vm466, %v458, 0
        %v471 = vsel %vm466, %v459, 0
        %v474 = vsel %vm466, %v460, 0
        %v477 = vsel %vm466, %v461, 0
        %v480 = vsel %vm466, %v462, 0
        %v483 = vsel %vm466, %v463, 0
        %v486 = vsel %vm466, %v464, 0
        %v489 = vsel %vm466, %v465, 0
        %491 = vmatprep.subr.bf16.mxu0 0
        %492 = vmatpush1.bf16.msra.mxu0 0
        %493 = vmatprep.subr.bf16.mxu0 0
        %494 = vmatpush1.bf16.msra.mxu0 0
        %495 = vmatprep.subr.bf16.mxu0 0
        %496 = vmatpush1.bf16.msra.mxu0 0
        %497 = vmatprep.subr.bf16.mxu0 0
        %498 = vmatpush1.bf16.msra.mxu0 0
        %499 = vmatprep.subr.bf16.mxu0 %v303
        %500 = vmatpush1.bf16.msra.mxu0 %v290
        %501 = vmatprep.subr.bf16.mxu0 %v302
        %502 = vmatpush1.bf16.msra.mxu0 %v289
        %503 = vmatprep.subr.bf16.mxu0 %v301
        %504 = vmatpush1.bf16.msra.mxu0 %v288
        %505 = vmatprep.subr.bf16.mxu0 %v300
        %506 = vmatpush1.bf16.msra.mxu0 %v287
        %507 = vmatprep.subr.bf16.mxu0 0
        %508 = vmatpush2.bf16.msra.mxu0 0
        %509 = vmatprep.subr.bf16.mxu0 0
        %510 = vmatpush2.bf16.msra.mxu0 0
        %511 = vmatprep.subr.bf16.mxu0 0
        %512 = vmatpush2.bf16.msra.mxu0 0
        %513 = vmatprep.subr.bf16.mxu0 0
        %514 = vmatpush2.bf16.msra.mxu0 0
        %515 = vmatprep.subr.bf16.mxu0 0
        %516 = vmatpush2.bf16.msra.mxu0 0
        %517 = vmatprep.subr.bf16.mxu0 0
        %518 = vmatpush2.bf16.msra.mxu0 0
        %519 = vmatprep.subr.bf16.mxu0 0
        %520 = vmatpush2.bf16.msra.mxu0 0
        %521 = vmatprep.subr.bf16.mxu0 0
        %522 = vmatpush2.bf16.msra.mxu0 0
        %523 = vmatprep.mubr.bf16.mxu0 0
        %524 = vmatmul.mubr.bf16.gmra.mxu0 %v468
        %v525 = vpop.f32.mrf.mxu0
        %v526 = vadd.f32 %v349, %v525
        %v527 = vpop.f32.mrf.mxu0
        %v528 = vadd.f32 %v349, %v527
        %v529 = vpop.f32.mrf.mxu0
        %v530 = vadd.f32 %v354, %v529
        %v531 = vpop.f32.mrf.mxu0
        %v532 = vadd.f32 %v354, %v531
        %533 = vmatprep.mubr.bf16.mxu0 0
        %534 = vmatmul.mubr.bf16.gmra.mxu0 %v471
        %v535 = vpop.f32.mrf.mxu0
        %v536 = vadd.f32 %v359, %v535
        %v537 = vpop.f32.mrf.mxu0
        %v538 = vadd.f32 %v359, %v537
        %v539 = vpop.f32.mrf.mxu0
        %v540 = vadd.f32 %v364, %v539
        %v541 = vpop.f32.mrf.mxu0
        %v542 = vadd.f32 %v364, %v541
        %543 = vmatprep.mubr.bf16.mxu0 0
        %544 = vmatmul.mubr.bf16.gmra.mxu0 %v474
        %v545 = vpop.f32.mrf.mxu0
        %v546 = vadd.f32 %v369, %v545
        %v547 = vpop.f32.mrf.mxu0
        %v548 = vadd.f32 %v369, %v547
        %v549 = vpop.f32.mrf.mxu0
        %v550 = vadd.f32 %v374, %v549
        %v551 = vpop.f32.mrf.mxu0
        %v552 = vadd.f32 %v374, %v551
        %553 = vmatprep.mubr.bf16.mxu0 0
        %554 = vmatmul.mubr.bf16.gmra.mxu0 %v477
        %v555 = vpop.f32.mrf.mxu0
        %v556 = vadd.f32 %v379, %v555
        %v557 = vpop.f32.mrf.mxu0
        %v558 = vadd.f32 %v379, %v557
        %v559 = vpop.f32.mrf.mxu0
        %v560 = vadd.f32 %v384, %v559
        %v561 = vpop.f32.mrf.mxu0
        %v562 = vadd.f32 %v384, %v561
        %563 = vmatprep.mubr.bf16.mxu0 0
        %564 = vmatmul.mubr.bf16.gmra.mxu0 %v480
        %v565 = vpop.f32.mrf.mxu0
        %v566 = vadd.f32 %v389, %v565
        %v567 = vpop.f32.mrf.mxu0
        %v568 = vadd.f32 %v389, %v567
        %v569 = vpop.f32.mrf.mxu0
        %v570 = vadd.f32 %v394, %v569
        %v571 = vpop.f32.mrf.mxu0
        %v572 = vadd.f32 %v394, %v571
        %573 = vmatprep.mubr.bf16.mxu0 0
        %574 = vmatmul.mubr.bf16.gmra.mxu0 %v483
        %v575 = vpop.f32.mrf.mxu0
        %v576 = vadd.f32 %v399, %v575
        %v577 = vpop.f32.mrf.mxu0
        %v578 = vadd.f32 %v399, %v577
        %v579 = vpop.f32.mrf.mxu0
        %v580 = vadd.f32 %v404, %v579
        %v581 = vpop.f32.mrf.mxu0
        %v582 = vadd.f32 %v404, %v581
        %583 = vmatprep.mubr.bf16.mxu0 0
        %584 = vmatmul.mubr.bf16.gmra.mxu0 %v486
        %v585 = vpop.f32.mrf.mxu0
        %v586 = vadd.f32 %v409, %v585
        %v587 = vpop.f32.mrf.mxu0
        %v588 = vadd.f32 %v409, %v587
        %v589 = vpop.f32.mrf.mxu0
        %v590 = vadd.f32 %v414, %v589
        %v591 = vpop.f32.mrf.mxu0
        %v592 = vadd.f32 %v414, %v591
        %593 = vmatprep.mubr.bf16.mxu0 0
        %594 = vmatmul.mubr.bf16.gmra.mxu0 %v489
        %v595 = vpop.f32.mrf.mxu0
        %v596 = vadd.f32 %v419, %v595
        %v597 = vpop.f32.mrf.mxu0
        %v598 = vadd.f32 %v419, %v597
        %v599 = vpop.f32.mrf.mxu0
        %v600 = vadd.f32 %v424, %v599
        %v601 = vpop.f32.mrf.mxu0
        %v602 = vadd.f32 %v424, %v601
        %603 = vdwg.mxu0
        %604 = vmatprep.subr.bf16.mxu0 0
        %605 = vmatpush1.bf16.msra.mxu0 0
        %606 = vmatprep.subr.bf16.mxu0 0
        %607 = vmatpush1.bf16.msra.mxu0 0
        %608 = vmatprep.subr.bf16.mxu0 0
        %609 = vmatpush1.bf16.msra.mxu0 0
        %610 = vmatprep.subr.bf16.mxu0 0
        %611 = vmatpush1.bf16.msra.mxu0 0
        %612 = vmatprep.subr.bf16.mxu0 %v329
        %613 = vmatpush1.bf16.msra.mxu0 %v316
        %614 = vmatprep.subr.bf16.mxu0 %v328
        %615 = vmatpush1.bf16.msra.mxu0 %v315
        %616 = vmatprep.subr.bf16.mxu0 %v327
        %617 = vmatpush1.bf16.msra.mxu0 %v314
        %618 = vmatprep.subr.bf16.mxu0 %v326
        %619 = vmatpush1.bf16.msra.mxu0 %v313
        %620 = vmatprep.subr.bf16.mxu0 0
        %621 = vmatpush2.bf16.msra.mxu0 0
        %622 = vmatprep.subr.bf16.mxu0 0
        %623 = vmatpush2.bf16.msra.mxu0 0
        %624 = vmatprep.subr.bf16.mxu0 0
        %625 = vmatpush2.bf16.msra.mxu0 0
        %626 = vmatprep.subr.bf16.mxu0 0
        %627 = vmatpush2.bf16.msra.mxu0 0
        %628 = vmatprep.subr.bf16.mxu0 0
        %629 = vmatpush2.bf16.msra.mxu0 0
        %630 = vmatprep.subr.bf16.mxu0 0
        %631 = vmatpush2.bf16.msra.mxu0 0
        %632 = vmatprep.subr.bf16.mxu0 0
        %633 = vmatpush2.bf16.msra.mxu0 0
        %634 = vmatprep.subr.bf16.mxu0 0
        %635 = vmatpush2.bf16.msra.mxu0 0
        %636 = vmatprep.mubr.bf16.mxu0 0
        %637 = vmatmul.mubr.bf16.gmra.mxu0 %v468
        %v638 = vpop.f32.mrf.mxu0
        %v639 = vadd.f32 %v349, %v638
        %v640 = vpop.f32.mrf.mxu0
        %v641 = vadd.f32 %v349, %v640
        %v642 = vpop.f32.mrf.mxu0
        %v643 = vadd.f32 %v354, %v642
        %v644 = vpop.f32.mrf.mxu0
        %v645 = vadd.f32 %v354, %v644
        %646 = vmatprep.mubr.bf16.mxu0 0
        %647 = vmatmul.mubr.bf16.gmra.mxu0 %v471
        %v648 = vpop.f32.mrf.mxu0
        %v649 = vadd.f32 %v359, %v648
        %v650 = vpop.f32.mrf.mxu0
        %v651 = vadd.f32 %v359, %v650
        %v652 = vpop.f32.mrf.mxu0
        %v653 = vadd.f32 %v364, %v652
        %v654 = vpop.f32.mrf.mxu0
        %v655 = vadd.f32 %v364, %v654
        %656 = vmatprep.mubr.bf16.mxu0 0
        %657 = vmatmul.mubr.bf16.gmra.mxu0 %v474
        %v658 = vpop.f32.mrf.mxu0
        %v659 = vadd.f32 %v369, %v658
        %v660 = vpop.f32.mrf.mxu0
        %v661 = vadd.f32 %v369, %v660
        %v662 = vpop.f32.mrf.mxu0
        %v663 = vadd.f32 %v374, %v662
        %v664 = vpop.f32.mrf.mxu0
        %v665 = vadd.f32 %v374, %v664
        %666 = vmatprep.mubr.bf16.mxu0 0
        %667 = vmatmul.mubr.bf16.gmra.mxu0 %v477
        %v668 = vpop.f32.mrf.mxu0
        %v669 = vadd.f32 %v379, %v668
        %v670 = vpop.f32.mrf.mxu0
        %v671 = vadd.f32 %v379, %v670
        %v672 = vpop.f32.mrf.mxu0
        %v673 = vadd.f32 %v384, %v672
        %v674 = vpop.f32.mrf.mxu0
        %v675 = vadd.f32 %v384, %v674
        %676 = vmatprep.mubr.bf16.mxu0 0
        %677 = vmatmul.mubr.bf16.gmra.mxu0 %v480
        %v678 = vpop.f32.mrf.mxu0
        %v679 = vadd.f32 %v389, %v678
        %v680 = vpop.f32.mrf.mxu0
        %v681 = vadd.f32 %v389, %v680
        %v682 = vpop.f32.mrf.mxu0
        %v683 = vadd.f32 %v394, %v682
        %v684 = vpop.f32.mrf.mxu0
        %v685 = vadd.f32 %v394, %v684
        %686 = vmatprep.mubr.bf16.mxu0 0
        %687 = vmatmul.mubr.bf16.gmra.mxu0 %v483
        %v688 = vpop.f32.mrf.mxu0
        %v689 = vadd.f32 %v399, %v688
        %v690 = vpop.f32.mrf.mxu0
        %v691 = vadd.f32 %v399, %v690
        %v692 = vpop.f32.mrf.mxu0
        %v693 = vadd.f32 %v404, %v692
        %v694 = vpop.f32.mrf.mxu0
        %v695 = vadd.f32 %v404, %v694
        %696 = vmatprep.mubr.bf16.mxu0 0
        %697 = vmatmul.mubr.bf16.gmra.mxu0 %v486
        %v698 = vpop.f32.mrf.mxu0
        %v699 = vadd.f32 %v409, %v698
        %v700 = vpop.f32.mrf.mxu0
        %v701 = vadd.f32 %v409, %v700
        %v702 = vpop.f32.mrf.mxu0
        %v703 = vadd.f32 %v414, %v702
        %v704 = vpop.f32.mrf.mxu0
        %v705 = vadd.f32 %v414, %v704
        %706 = vmatprep.mubr.bf16.mxu0 0
        %707 = vmatmul.mubr.bf16.gmra.mxu0 %v489
        %v708 = vpop.f32.mrf.mxu0
        %v709 = vadd.f32 %v419, %v708
        %v710 = vpop.f32.mrf.mxu0
        %v711 = vadd.f32 %v419, %v710
        %v712 = vpop.f32.mrf.mxu0
        %v713 = vadd.f32 %v424, %v712
        %v714 = vpop.f32.mrf.mxu0
        %v715 = vadd.f32 %v424, %v714
        %716 = vdwg.mxu0
        %vm717 = vcmp.gt.f32.partialorder %v526, 0.0
        %vm718 = vcmp.gt.f32.partialorder %v528, 0.0
        %vm719 = vcmp.gt.f32.partialorder %v639, 0.0
        %vm720 = vcmp.gt.f32.partialorder %v641, 0.0
        %vm721 = vcmp.gt.f32.partialorder %v530, 0.0
        %vm722 = vcmp.gt.f32.partialorder %v532, 0.0
        %vm723 = vcmp.gt.f32.partialorder %v643, 0.0
        %vm724 = vcmp.gt.f32.partialorder %v645, 0.0
        %vm725 = vcmp.gt.f32.partialorder %v536, 0.0
        %vm726 = vcmp.gt.f32.partialorder %v538, 0.0
        %vm727 = vcmp.gt.f32.partialorder %v649, 0.0
        %vm728 = vcmp.gt.f32.partialorder %v651, 0.0
        %vm729 = vcmp.gt.f32.partialorder %v540, 0.0
        %vm730 = vcmp.gt.f32.partialorder %v542, 0.0
        %vm731 = vcmp.gt.f32.partialorder %v653, 0.0
        %vm732 = vcmp.gt.f32.partialorder %v655, 0.0
        %vm733 = vcmp.gt.f32.partialorder %v546, 0.0
        %vm734 = vcmp.gt.f32.partialorder %v548, 0.0
        %vm735 = vcmp.gt.f32.partialorder %v659, 0.0
        %vm736 = vcmp.gt.f32.partialorder %v661, 0.0
        %vm737 = vcmp.gt.f32.partialorder %v550, 0.0
        %vm738 = vcmp.gt.f32.partialorder %v552, 0.0
        %vm739 = vcmp.gt.f32.partialorder %v663, 0.0
        %vm740 = vcmp.gt.f32.partialorder %v665, 0.0
        %vm741 = vcmp.gt.f32.partialorder %v556, 0.0
        %vm742 = vcmp.gt.f32.partialorder %v558, 0.0
        %vm743 = vcmp.gt.f32.partialorder %v669, 0.0
        %vm744 = vcmp.gt.f32.partialorder %v671, 0.0
        %vm745 = vcmp.gt.f32.partialorder %v560, 0.0
        %vm746 = vcmp.gt.f32.partialorder %v562, 0.0
        %vm747 = vcmp.gt.f32.partialorder %v673, 0.0
        %vm748 = vcmp.gt.f32.partialorder %v675, 0.0
        %vm749 = vcmp.gt.f32.partialorder %v566, 0.0
        %vm750 = vcmp.gt.f32.partialorder %v568, 0.0
        %vm751 = vcmp.gt.f32.partialorder %v679, 0.0
        %vm752 = vcmp.gt.f32.partialorder %v681, 0.0
        %vm753 = vcmp.gt.f32.partialorder %v570, 0.0
        %vm754 = vcmp.gt.f32.partialorder %v572, 0.0
        %vm755 = vcmp.gt.f32.partialorder %v683, 0.0
        %vm756 = vcmp.gt.f32.partialorder %v685, 0.0
        %vm757 = vcmp.gt.f32.partialorder %v576, 0.0
        %vm758 = vcmp.gt.f32.partialorder %v578, 0.0
        %vm759 = vcmp.gt.f32.partialorder %v689, 0.0
        %vm760 = vcmp.gt.f32.partialorder %v691, 0.0
        %vm761 = vcmp.gt.f32.partialorder %v580, 0.0
        %vm762 = vcmp.gt.f32.partialorder %v582, 0.0
        %vm763 = vcmp.gt.f32.partialorder %v693, 0.0
        %vm764 = vcmp.gt.f32.partialorder %v695, 0.0
        %vm765 = vcmp.gt.f32.partialorder %v586, 0.0
        %vm766 = vcmp.gt.f32.partialorder %v588, 0.0
        %vm767 = vcmp.gt.f32.partialorder %v699, 0.0
        %vm768 = vcmp.gt.f32.partialorder %v701, 0.0
        %vm769 = vcmp.gt.f32.partialorder %v590, 0.0
        %vm770 = vcmp.gt.f32.partialorder %v592, 0.0
        %vm771 = vcmp.gt.f32.partialorder %v703, 0.0
        %vm772 = vcmp.gt.f32.partialorder %v705, 0.0
        %vm773 = vcmp.gt.f32.partialorder %v596, 0.0
        %vm774 = vcmp.gt.f32.partialorder %v598, 0.0
        %vm775 = vcmp.gt.f32.partialorder %v709, 0.0
        %vm776 = vcmp.gt.f32.partialorder %v711, 0.0
        %vm777 = vcmp.gt.f32.partialorder %v600, 0.0
        %vm778 = vcmp.gt.f32.partialorder %v602, 0.0
        %vm779 = vcmp.gt.f32.partialorder %v713, 0.0
        %vm780 = vcmp.gt.f32.partialorder %v715, 0.0
        %v781 = vstv %s261
        %v782 = vmul.f32 %v781, %v526
        %v783 = vmul.f32 %v781, %v528
        %v784 = vmul.f32 %v781, %v639
        %v785 = vmul.f32 %v781, %v641
        %v786 = vmul.f32 %v781, %v530
        %v787 = vmul.f32 %v781, %v532
        %v788 = vmul.f32 %v781, %v643
        %v789 = vmul.f32 %v781, %v645
        %v790 = vmul.f32 %v781, %v536
        %v791 = vmul.f32 %v781, %v538
        %v792 = vmul.f32 %v781, %v649
        %v793 = vmul.f32 %v781, %v651
        %v794 = vmul.f32 %v781, %v540
        %v795 = vmul.f32 %v781, %v542
        %v796 = vmul.f32 %v781, %v653
        %v797 = vmul.f32 %v781, %v655
        %v798 = vmul.f32 %v781, %v546
        %v799 = vmul.f32 %v781, %v548
        %v800 = vmul.f32 %v781, %v659
        %v801 = vmul.f32 %v781, %v661
        %v802 = vmul.f32 %v781, %v550
        %v803 = vmul.f32 %v781, %v552
        %v804 = vmul.f32 %v781, %v663
        %v805 = vmul.f32 %v781, %v665
        %v806 = vmul.f32 %v781, %v556
        %v807 = vmul.f32 %v781, %v558
        %v808 = vmul.f32 %v781, %v669
        %v809 = vmul.f32 %v781, %v671
        %v810 = vmul.f32 %v781, %v560
        %v811 = vmul.f32 %v781, %v562
        %v812 = vmul.f32 %v781, %v673
        %v813 = vmul.f32 %v781, %v675
        %v814 = vmul.f32 %v781, %v566
        %v815 = vmul.f32 %v781, %v568
        %v816 = vmul.f32 %v781, %v679
        %v817 = vmul.f32 %v781, %v681
        %v818 = vmul.f32 %v781, %v570
        %v819 = vmul.f32 %v781, %v572
        %v820 = vmul.f32 %v781, %v683
        %v821 = vmul.f32 %v781, %v685
        %v822 = vmul.f32 %v781, %v576
        %v823 = vmul.f32 %v781, %v578
        %v824 = vmul.f32 %v781, %v689
        %v825 = vmul.f32 %v781, %v691
        %v826 = vmul.f32 %v781, %v580
        %v827 = vmul.f32 %v781, %v582
        %v828 = vmul.f32 %v781, %v693
        %v829 = vmul.f32 %v781, %v695
        %v830 = vmul.f32 %v781, %v586
        %v831 = vmul.f32 %v781, %v588
        %v832 = vmul.f32 %v781, %v699
        %v833 = vmul.f32 %v781, %v701
        %v834 = vmul.f32 %v781, %v590
        %v835 = vmul.f32 %v781, %v592
        %v836 = vmul.f32 %v781, %v703
        %v837 = vmul.f32 %v781, %v705
        %v838 = vmul.f32 %v781, %v596
        %v839 = vmul.f32 %v781, %v598
        %v840 = vmul.f32 %v781, %v709
        %v841 = vmul.f32 %v781, %v711
        %v842 = vmul.f32 %v781, %v600
        %v843 = vmul.f32 %v781, %v602
        %v844 = vmul.f32 %v781, %v713
        %v845 = vmul.f32 %v781, %v715
        %v846 = vsel %vm717, %v526, %v782
        %v847 = vsel %vm718, %v528, %v783
        %v848 = vsel %vm719, %v639, %v784
        %v849 = vsel %vm720, %v641, %v785
        %v850 = vsel %vm721, %v530, %v786
        %v851 = vsel %vm722, %v532, %v787
        %v852 = vsel %vm723, %v643, %v788
        %v853 = vsel %vm724, %v645, %v789
        %v854 = vsel %vm725, %v536, %v790
        %v855 = vsel %vm726, %v538, %v791
        %v856 = vsel %vm727, %v649, %v792
        %v857 = vsel %vm728, %v651, %v793
        %v858 = vsel %vm729, %v540, %v794
        %v859 = vsel %vm730, %v542, %v795
        %v860 = vsel %vm731, %v653, %v796
        %v861 = vsel %vm732, %v655, %v797
        %v862 = vsel %vm733, %v546, %v798
        %v863 = vsel %vm734, %v548, %v799
        %v864 = vsel %vm735, %v659, %v800
        %v865 = vsel %vm736, %v661, %v801
        %v866 = vsel %vm737, %v550, %v802
        %v867 = vsel %vm738, %v552, %v803
        %v868 = vsel %vm739, %v663, %v804
        %v869 = vsel %vm740, %v665, %v805
        %v870 = vsel %vm741, %v556, %v806
        %v871 = vsel %vm742, %v558, %v807
        %v872 = vsel %vm743, %v669, %v808
        %v873 = vsel %vm744, %v671, %v809
        %v874 = vsel %vm745, %v560, %v810
        %v875 = vsel %vm746, %v562, %v811
        %v876 = vsel %vm747, %v673, %v812
        %v877 = vsel %vm748, %v675, %v813
        %v878 = vsel %vm749, %v566, %v814
        %v879 = vsel %vm750, %v568, %v815
        %v880 = vsel %vm751, %v679, %v816
        %v881 = vsel %vm752, %v681, %v817
        %v882 = vsel %vm753, %v570, %v818
        %v883 = vsel %vm754, %v572, %v819
        %v884 = vsel %vm755, %v683, %v820
        %v885 = vsel %vm756, %v685, %v821
        %v886 = vsel %vm757, %v576, %v822
        %v887 = vsel %vm758, %v578, %v823
        %v888 = vsel %vm759, %v689, %v824
        %v889 = vsel %vm760, %v691, %v825
        %v890 = vsel %vm761, %v580, %v826
        %v891 = vsel %vm762, %v582, %v827
        %v892 = vsel %vm763, %v693, %v828
        %v893 = vsel %vm764, %v695, %v829
        %v894 = vsel %vm765, %v586, %v830
        %v895 = vsel %vm766, %v588, %v831
        %v896 = vsel %vm767, %v699, %v832
        %v897 = vsel %vm768, %v701, %v833
        %v898 = vsel %vm769, %v590, %v834
        %v899 = vsel %vm770, %v592, %v835
        %v900 = vsel %vm771, %v703, %v836
        %v901 = vsel %vm772, %v705, %v837
        %v902 = vsel %vm773, %v596, %v838
        %v903 = vsel %vm774, %v598, %v839
        %v904 = vsel %vm775, %v709, %v840
        %v905 = vsel %vm776, %v711, %v841
        %v906 = vsel %vm777, %v600, %v842
        %v907 = vsel %vm778, %v602, %v843
        %v908 = vsel %vm779, %v713, %v844
        %v909 = vsel %vm780, %v715, %v845
        %v910 = vadd.f32 %v846, %v850
        %v911 = vadd.f32 %v910, %v854
        %v912 = vadd.f32 %v911, %v858
        %v913 = vadd.f32 %v912, %v862
        %v914 = vadd.f32 %v913, %v866
        %v915 = vadd.f32 %v914, %v870
        %v916 = vadd.f32 %v915, %v874
        %v917 = vadd.f32 %v916, %v878
        %v918 = vadd.f32 %v917, %v882
        %v919 = vadd.f32 %v918, %v886
        %v920 = vadd.f32 %v919, %v890
        %v921 = vadd.f32 %v920, %v894
        %v922 = vadd.f32 %v921, %v898
        %v923 = vadd.f32 %v922, %v902
        %v924 = vadd.f32 %v923, %v906
        %v925 = vrot.slane %v924, 4
        %v926 = vadd.f32 %v924, %v925
        %v927 = vrot.slane %v926, 2
        %v928 = vadd.f32 %v926, %v927
        %v929 = vrot.slane %v928, 1
        %v930 = vadd.f32 %v928, %v929
        %v931 = vadd.f32 %v847, %v851
        %v932 = vadd.f32 %v931, %v855
        %v933 = vadd.f32 %v932, %v859
        %v934 = vadd.f32 %v933, %v863
        %v935 = vadd.f32 %v934, %v867
        %v936 = vadd.f32 %v935, %v871
        %v937 = vadd.f32 %v936, %v875
        %v938 = vadd.f32 %v937, %v879
        %v939 = vadd.f32 %v938, %v883
        %v940 = vadd.f32 %v939, %v887
        %v941 = vadd.f32 %v940, %v891
        %v942 = vadd.f32 %v941, %v895
        %v943 = vadd.f32 %v942, %v899
        %v944 = vadd.f32 %v943, %v903
        %v945 = vadd.f32 %v944, %v907
        %v946 = vrot.slane %v945, 4
        %v947 = vadd.f32 %v945, %v946
        %v948 = vrot.slane %v947, 2
        %v949 = vadd.f32 %v947, %v948
        %v950 = vrot.slane %v949, 1
        %v951 = vadd.f32 %v949, %v950
        %v952 = vadd.f32 %v848, %v852
        %v953 = vadd.f32 %v952, %v856
        %v954 = vadd.f32 %v953, %v860
        %v955 = vadd.f32 %v954, %v864
        %v956 = vadd.f32 %v955, %v868
        %v957 = vadd.f32 %v956, %v872
        %v958 = vadd.f32 %v957, %v876
        %v959 = vadd.f32 %v958, %v880
        %v960 = vadd.f32 %v959, %v884
        %v961 = vadd.f32 %v960, %v888
        %v962 = vadd.f32 %v961, %v892
        %v963 = vadd.f32 %v962, %v896
        %v964 = vadd.f32 %v963, %v900
        %v965 = vadd.f32 %v964, %v904
        %v966 = vadd.f32 %v965, %v908
        %v967 = vrot.slane %v966, 4
        %v968 = vadd.f32 %v966, %v967
        %v969 = vrot.slane %v968, 2
        %v970 = vadd.f32 %v968, %v969
        %v971 = vrot.slane %v970, 1
        %v972 = vadd.f32 %v970, %v971
        %v973 = vadd.f32 %v849, %v853
        %v974 = vadd.f32 %v973, %v857
        %v975 = vadd.f32 %v974, %v861
        %v976 = vadd.f32 %v975, %v865
        %v977 = vadd.f32 %v976, %v869
        %v978 = vadd.f32 %v977, %v873
        %v979 = vadd.f32 %v978, %v877
        %v980 = vadd.f32 %v979, %v881
        %v981 = vadd.f32 %v980, %v885
        %v982 = vadd.f32 %v981, %v889
        %v983 = vadd.f32 %v982, %v893
        %v984 = vadd.f32 %v983, %v897
        %v985 = vadd.f32 %v984, %v901
        %v986 = vadd.f32 %v985, %v905
        %v987 = vadd.f32 %v986, %v909
        %v988 = vrot.slane %v987, 4
        %v989 = vadd.f32 %v987, %v988
        %v990 = vrot.slane %v989, 2
        %v991 = vadd.f32 %v989, %v990
        %v992 = vrot.slane %v991, 1
        %v993 = vadd.f32 %v991, %v992
        %v994 = vmul.f32 %v846, %v846
        %v995 = vmul.f32 %v847, %v847
        %v996 = vmul.f32 %v848, %v848
        %v997 = vmul.f32 %v849, %v849
        %v998 = vmul.f32 %v850, %v850
        %v999 = vmul.f32 %v851, %v851
        %v1000 = vmul.f32 %v852, %v852
        %v1001 = vmul.f32 %v853, %v853
        %v1002 = vmul.f32 %v854, %v854
        %v1003 = vmul.f32 %v855, %v855
        %v1004 = vmul.f32 %v856, %v856
        %v1005 = vmul.f32 %v857, %v857
        %v1006 = vmul.f32 %v858, %v858
        %v1007 = vmul.f32 %v859, %v859
        %v1008 = vmul.f32 %v860, %v860
        %v1009 = vmul.f32 %v861, %v861
        %v1010 = vmul.f32 %v862, %v862
        %v1011 = vmul.f32 %v863, %v863
        %v1012 = vmul.f32 %v864, %v864
        %v1013 = vmul.f32 %v865, %v865
        %v1014 = vmul.f32 %v866, %v866
        %v1015 = vmul.f32 %v867, %v867
        %v1016 = vmul.f32 %v868, %v868
        %v1017 = vmul.f32 %v869, %v869
        %v1018 = vmul.f32 %v870, %v870
        %v1019 = vmul.f32 %v871, %v871
        %v1020 = vmul.f32 %v872, %v872
        %v1021 = vmul.f32 %v873, %v873
        %v1022 = vmul.f32 %v874, %v874
        %v1023 = vmul.f32 %v875, %v875
        %v1024 = vmul.f32 %v876, %v876
        %v1025 = vmul.f32 %v877, %v877
        %v1026 = vmul.f32 %v878, %v878
        %v1027 = vmul.f32 %v879, %v879
        %v1028 = vmul.f32 %v880, %v880
        %v1029 = vmul.f32 %v881, %v881
        %v1030 = vmul.f32 %v882, %v882
        %v1031 = vmul.f32 %v883, %v883
        %v1032 = vmul.f32 %v884, %v884
        %v1033 = vmul.f32 %v885, %v885
        %v1034 = vmul.f32 %v886, %v886
        %v1035 = vmul.f32 %v887, %v887
        %v1036 = vmul.f32 %v888, %v888
        %v1037 = vmul.f32 %v889, %v889
        %v1038 = vmul.f32 %v890, %v890
        %v1039 = vmul.f32 %v891, %v891
        %v1040 = vmul.f32 %v892, %v892
        %v1041 = vmul.f32 %v893, %v893
        %v1042 = vmul.f32 %v894, %v894
        %v1043 = vmul.f32 %v895, %v895
        %v1044 = vmul.f32 %v896, %v896
        %v1045 = vmul.f32 %v897, %v897
        %v1046 = vmul.f32 %v898, %v898
        %v1047 = vmul.f32 %v899, %v899
        %v1048 = vmul.f32 %v900, %v900
        %v1049 = vmul.f32 %v901, %v901
        %v1050 = vmul.f32 %v902, %v902
        %v1051 = vmul.f32 %v903, %v903
        %v1052 = vmul.f32 %v904, %v904
        %v1053 = vmul.f32 %v905, %v905
        %v1054 = vmul.f32 %v906, %v906
        %v1055 = vmul.f32 %v907, %v907
        %v1056 = vmul.f32 %v908, %v908
        %v1057 = vmul.f32 %v909, %v909
        %v1058 = vadd.f32 %v994, %v998
        %v1059 = vadd.f32 %v1058, %v1002
        %v1060 = vadd.f32 %v1059, %v1006
        %v1061 = vadd.f32 %v1060, %v1010
        %v1062 = vadd.f32 %v1061, %v1014
        %v1063 = vadd.f32 %v1062, %v1018
        %v1064 = vadd.f32 %v1063, %v1022
        %v1065 = vadd.f32 %v1064, %v1026
        %v1066 = vadd.f32 %v1065, %v1030
        %v1067 = vadd.f32 %v1066, %v1034
        %v1068 = vadd.f32 %v1067, %v1038
        %v1069 = vadd.f32 %v1068, %v1042
        %v1070 = vadd.f32 %v1069, %v1046
        %v1071 = vadd.f32 %v1070, %v1050
        %v1072 = vadd.f32 %v1071, %v1054
        %v1073 = vrot.slane %v1072, 4
        %v1074 = vadd.f32 %v1072, %v1073
        %v1075 = vrot.slane %v1074, 2
        %v1076 = vadd.f32 %v1074, %v1075
        %v1077 = vrot.slane %v1076, 1
        %v1078 = vadd.f32 %v1076, %v1077
        %v1079 = vadd.f32 %v995, %v999
        %v1080 = vadd.f32 %v1079, %v1003
        %v1081 = vadd.f32 %v1080, %v1007
        %v1082 = vadd.f32 %v1081, %v1011
        %v1083 = vadd.f32 %v1082, %v1015
        %v1084 = vadd.f32 %v1083, %v1019
        %v1085 = vadd.f32 %v1084, %v1023
        %v1086 = vadd.f32 %v1085, %v1027
        %v1087 = vadd.f32 %v1086, %v1031
        %v1088 = vadd.f32 %v1087, %v1035
        %v1089 = vadd.f32 %v1088, %v1039
        %v1090 = vadd.f32 %v1089, %v1043
        %v1091 = vadd.f32 %v1090, %v1047
        %v1092 = vadd.f32 %v1091, %v1051
        %v1093 = vadd.f32 %v1092, %v1055
        %v1094 = vrot.slane %v1093, 4
        %v1095 = vadd.f32 %v1093, %v1094
        %v1096 = vrot.slane %v1095, 2
        %v1097 = vadd.f32 %v1095, %v1096
        %v1098 = vrot.slane %v1097, 1
        %v1099 = vadd.f32 %v1097, %v1098
        %v1100 = vadd.f32 %v996, %v1000
        %v1101 = vadd.f32 %v1100, %v1004
        %v1102 = vadd.f32 %v1101, %v1008
        %v1103 = vadd.f32 %v1102, %v1012
        %v1104 = vadd.f32 %v1103, %v1016
        %v1105 = vadd.f32 %v1104, %v1020
        %v1106 = vadd.f32 %v1105, %v1024
        %v1107 = vadd.f32 %v1106, %v1028
        %v1108 = vadd.f32 %v1107, %v1032
        %v1109 = vadd.f32 %v1108, %v1036
        %v1110 = vadd.f32 %v1109, %v1040
        %v1111 = vadd.f32 %v1110, %v1044
        %v1112 = vadd.f32 %v1111, %v1048
        %v1113 = vadd.f32 %v1112, %v1052
        %v1114 = vadd.f32 %v1113, %v1056
        %v1115 = vrot.slane %v1114, 4
        %v1116 = vadd.f32 %v1114, %v1115
        %v1117 = vrot.slane %v1116, 2
        %v1118 = vadd.f32 %v1116, %v1117
        %v1119 = vrot.slane %v1118, 1
        %v1120 = vadd.f32 %v1118, %v1119
        %v1121 = vadd.f32 %v997, %v1001
        %v1122 = vadd.f32 %v1121, %v1005
        %v1123 = vadd.f32 %v1122, %v1009
        %v1124 = vadd.f32 %v1123, %v1013
        %v1125 = vadd.f32 %v1124, %v1017
        %v1126 = vadd.f32 %v1125, %v1021
        %v1127 = vadd.f32 %v1126, %v1025
        %v1128 = vadd.f32 %v1127, %v1029
        %v1129 = vadd.f32 %v1128, %v1033
        %v1130 = vadd.f32 %v1129, %v1037
        %v1131 = vadd.f32 %v1130, %v1041
        %v1132 = vadd.f32 %v1131, %v1045
        %v1133 = vadd.f32 %v1132, %v1049
        %v1134 = vadd.f32 %v1133, %v1053
        %v1135 = vadd.f32 %v1134, %v1057
        %v1136 = vrot.slane %v1135, 4
        %v1137 = vadd.f32 %v1135, %v1136
        %v1138 = vrot.slane %v1137, 2
        %v1139 = vadd.f32 %v1137, %v1138
        %v1140 = vrot.slane %v1139, 1
        %v1141 = vadd.f32 %v1139, %v1140
        %vm1142 = vcmask 1040384
        %v1143 = vsel %vm1142, %v930, 0.0
        %1144 = vadd.xlane.f32.xlu0 %v1143
        %v1145 = vpop.xlane.xlu0 %1144
        %v1146 = vrot.slane %v1145, 4
        %v1147 = vadd.f32 %v1145, %v1146
        %v1148 = vrot.slane %v1147, 2
        %v1149 = vadd.f32 %v1147, %v1148
        %v1150 = vrot.slane %v1149, 1
        %v1151 = vadd.f32 %v1149, %v1150
        %s1152 = vtos %v1151
        %v1153 = vsel %vm1142, %v1078, 0.0
        %1154 = vadd.xlane.f32.xlu0 %v1153
        %v1155 = vpop.xlane.xlu0 %1154
        %v1156 = vrot.slane %v1155, 4
        %v1157 = vadd.f32 %v1155, %v1156
        %v1158 = vrot.slane %v1157, 2
        %v1159 = vadd.f32 %v1157, %v1158
        %v1160 = vrot.slane %v1159, 1
        %v1161 = vadd.f32 %v1159, %v1160
        %s1162 = vtos %v1161
        %s1163 = smul.f32 %s1152, 6.1035156e-05
        %s1164 = smul.f32 %s1162, 6.1035156e-05
        %s1165 = smul.f32 %s1163, %s1163
        %s1166 = ssub.f32 %s1164, %s1165
        %v1167 = vstv %s1163
        %s1168 = sadd.f32 %s1166, 1e-05
        %v1169 = vstv %s1168
        %v1170 = vrsqrt.pop %v1169
        %s1171 = vtos %v1170
        %v1172 = vstv %s1171
        %v1173 = vsel %vm1142, %v951, 0.0
        %1174 = vadd.xlane.f32.xlu0 %v1173
        %v1175 = vpop.xlane.xlu0 %1174
        %v1176 = vrot.slane %v1175, 4
        %v1177 = vadd.f32 %v1175, %v1176
        %v1178 = vrot.slane %v1177, 2
        %v1179 = vadd.f32 %v1177, %v1178
        %v1180 = vrot.slane %v1179, 1
        %v1181 = vadd.f32 %v1179, %v1180
        %s1182 = vtos %v1181
        %v1183 = vsel %vm1142, %v1099, 0.0
        %1184 = vadd.xlane.f32.xlu0 %v1183
        %v1185 = vpop.xlane.xlu0 %1184
        %v1186 = vrot.slane %v1185, 4
        %v1187 = vadd.f32 %v1185, %v1186
        %v1188 = vrot.slane %v1187, 2
        %v1189 = vadd.f32 %v1187, %v1188
        %v1190 = vrot.slane %v1189, 1
        %v1191 = vadd.f32 %v1189, %v1190
        %s1192 = vtos %v1191
        %s1193 = smul.f32 %s1182, 6.1035156e-05
        %s1194 = smul.f32 %s1192, 6.1035156e-05
        %s1195 = smul.f32 %s1193, %s1193
        %s1196 = ssub.f32 %s1194, %s1195
        %v1197 = vstv %s1193
        %s1198 = sadd.f32 %s1196, 1e-05
        %v1199 = vstv %s1198
        %v1200 = vrsqrt.pop %v1199
        %s1201 = vtos %v1200
        %v1202 = vstv %s1201
        %v1203 = vsel %vm1142, %v972, 0.0
        %1204 = vadd.xlane.f32.xlu0 %v1203
        %v1205 = vpop.xlane.xlu0 %1204
        %v1206 = vrot.slane %v1205, 4
        %v1207 = vadd.f32 %v1205, %v1206
        %v1208 = vrot.slane %v1207, 2
        %v1209 = vadd.f32 %v1207, %v1208
        %v1210 = vrot.slane %v1209, 1
        %v1211 = vadd.f32 %v1209, %v1210
        %s1212 = vtos %v1211
        %v1213 = vsel %vm1142, %v1120, 0.0
        %1214 = vadd.xlane.f32.xlu0 %v1213
        %v1215 = vpop.xlane.xlu0 %1214
        %v1216 = vrot.slane %v1215, 4
        %v1217 = vadd.f32 %v1215, %v1216
        %v1218 = vrot.slane %v1217, 2
        %v1219 = vadd.f32 %v1217, %v1218
        %v1220 = vrot.slane %v1219, 1
        %v1221 = vadd.f32 %v1219, %v1220
        %s1222 = vtos %v1221
        %s1223 = smul.f32 %s1212, 6.1035156e-05
        %s1224 = smul.f32 %s1222, 6.1035156e-05
        %s1225 = smul.f32 %s1223, %s1223
        %s1226 = ssub.f32 %s1224, %s1225
        %v1227 = vstv %s1223
        %s1228 = sadd.f32 %s1226, 1e-05
        %v1229 = vstv %s1228
        %v1230 = vrsqrt.pop %v1229
        %s1231 = vtos %v1230
        %v1232 = vstv %s1231
        %v1233 = vsel %vm1142, %v993, 0.0
        %1234 = vadd.xlane.f32.xlu0 %v1233
        %v1235 = vpop.xlane.xlu0 %1234
        %v1236 = vrot.slane %v1235, 4
        %v1237 = vadd.f32 %v1235, %v1236
        %v1238 = vrot.slane %v1237, 2
        %v1239 = vadd.f32 %v1237, %v1238
        %v1240 = vrot.slane %v1239, 1
        %v1241 = vadd.f32 %v1239, %v1240
        %s1242 = vtos %v1241
        %v1243 = vsel %vm1142, %v1141, 0.0
        %1244 = vadd.xlane.f32.xlu0 %v1243
        %v1245 = vpop.xlane.xlu0 %1244
        %v1246 = vrot.slane %v1245, 4
        %v1247 = vadd.f32 %v1245, %v1246
        %v1248 = vrot.slane %v1247, 2
        %v1249 = vadd.f32 %v1247, %v1248
        %v1250 = vrot.slane %v1249, 1
        %v1251 = vadd.f32 %v1249, %v1250
        %s1252 = vtos %v1251
        %s1253 = smul.f32 %s1242, 6.1035156e-05
        %s1254 = smul.f32 %s1252, 6.1035156e-05
        %s1255 = smul.f32 %s1253, %s1253
        %s1256 = ssub.f32 %s1254, %s1255
        %v1257 = vstv %s1253
        %s1258 = sadd.f32 %s1256, 1e-05
        %v1259 = vstv %s1258
        %v1260 = vrsqrt.pop %v1259
        %s1261 = vtos %v1260
        %v1262 = vstv %s1261
        %v1263 = vlaneseq
        %v1264 = vshrl.u32 %v1263, 7
        %v1265 = vsub.s32 0, %v1264
        %v1266 = vlaneseq
        %v1267 = vshrl.u32 %v1266, 7
        %v1268 = vsub.s32 0, %v1267
        %v1269 = vlaneseq
        %v1270 = vshrl.u32 %v1269, 7
        %v1271 = vsub.s32 0, %v1270
        %v1272 = vlaneseq
        %v1273 = vshrl.u32 %v1272, 7
        %v1274 = vsub.s32 0, %v1273
        %v1275 = vsub.f32 %v846, %v1167
        %v1276 = vsub.f32 %v847, %v1197
        %v1277 = vsub.f32 %v848, %v1227
        %v1278 = vsub.f32 %v849, %v1257
        %v1279 = vsub.f32 %v850, %v1167
        %v1280 = vsub.f32 %v851, %v1197
        %v1281 = vsub.f32 %v852, %v1227
        %v1282 = vsub.f32 %v853, %v1257
        %v1283 = vsub.f32 %v854, %v1167
        %v1284 = vsub.f32 %v855, %v1197
        %v1285 = vsub.f32 %v856, %v1227
        %v1286 = vsub.f32 %v857, %v1257
        %v1287 = vsub.f32 %v858, %v1167
        %v1288 = vsub.f32 %v859, %v1197
        %v1289 = vsub.f32 %v860, %v1227
        %v1290 = vsub.f32 %v861, %v1257
        %v1291 = vsub.f32 %v862, %v1167
        %v1292 = vsub.f32 %v863, %v1197
        %v1293 = vsub.f32 %v864, %v1227
        %v1294 = vsub.f32 %v865, %v1257
        %v1295 = vsub.f32 %v866, %v1167
        %v1296 = vsub.f32 %v867, %v1197
        %v1297 = vsub.f32 %v868, %v1227
        %v1298 = vsub.f32 %v869, %v1257
        %v1299 = vsub.f32 %v870, %v1167
        %v1300 = vsub.f32 %v871, %v1197
        %v1301 = vsub.f32 %v872, %v1227
        %v1302 = vsub.f32 %v873, %v1257
        %v1303 = vsub.f32 %v874, %v1167
        %v1304 = vsub.f32 %v875, %v1197
        %v1305 = vsub.f32 %v876, %v1227
        %v1306 = vsub.f32 %v877, %v1257
        %v1307 = vsub.f32 %v878, %v1167
        %v1308 = vsub.f32 %v879, %v1197
        %v1309 = vsub.f32 %v880, %v1227
        %v1310 = vsub.f32 %v881, %v1257
        %v1311 = vsub.f32 %v882, %v1167
        %v1312 = vsub.f32 %v883, %v1197
        %v1313 = vsub.f32 %v884, %v1227
        %v1314 = vsub.f32 %v885, %v1257
        %v1315 = vsub.f32 %v886, %v1167
        %v1316 = vsub.f32 %v887, %v1197
        %v1317 = vsub.f32 %v888, %v1227
        %v1318 = vsub.f32 %v889, %v1257
        %v1319 = vsub.f32 %v890, %v1167
        %v1320 = vsub.f32 %v891, %v1197
        %v1321 = vsub.f32 %v892, %v1227
        %v1322 = vsub.f32 %v893, %v1257
        %v1323 = vsub.f32 %v894, %v1167
        %v1324 = vsub.f32 %v895, %v1197
        %v1325 = vsub.f32 %v896, %v1227
        %v1326 = vsub.f32 %v897, %v1257
        %v1327 = vsub.f32 %v898, %v1167
        %v1328 = vsub.f32 %v899, %v1197
        %v1329 = vsub.f32 %v900, %v1227
        %v1330 = vsub.f32 %v901, %v1257
        %v1331 = vsub.f32 %v902, %v1167
        %v1332 = vsub.f32 %v903, %v1197
        %v1333 = vsub.f32 %v904, %v1227
        %v1334 = vsub.f32 %v905, %v1257
        %v1335 = vsub.f32 %v906, %v1167
        %v1336 = vsub.f32 %v907, %v1197
        %v1337 = vsub.f32 %v908, %v1227
        %v1338 = vsub.f32 %v909, %v1257
        %1339 = vset.pattern.permute.xlu0 1
        %1340 = vperm.xlu0 %1339, %v263
        %v1341 = vpop.permute.xlu0 %1340
        %1343 = vset.pattern.permute.xlu0 1
        %1344 = vperm.xlu0 %1343, %v264
        %v1345 = vpop.permute.xlu0 %1344
        %1347 = vset.pattern.permute.xlu0 1
        %1348 = vperm.xlu0 %1347, %v265
        %v1349 = vpop.permute.xlu0 %1348
        %1351 = vset.pattern.permute.xlu0 1
        %1352 = vperm.xlu0 %1351, %v266
        %v1353 = vpop.permute.xlu0 %1352
        %1355 = vset.pattern.permute.xlu0 1
        %1356 = vperm.xlu0 %1355, %v267
        %v1357 = vpop.permute.xlu0 %1356
        %1359 = vset.pattern.permute.xlu0 1
        %1360 = vperm.xlu0 %1359, %v268
        %v1361 = vpop.permute.xlu0 %1360
        %1363 = vset.pattern.permute.xlu0 1
        %1364 = vperm.xlu0 %1363, %v269
        %v1365 = vpop.permute.xlu0 %1364
        %1367 = vset.pattern.permute.xlu0 1
        %1368 = vperm.xlu0 %1367, %v270
        %v1369 = vpop.permute.xlu0 %1368
        %1371 = vset.pattern.permute.xlu0 1
        %1372 = vperm.xlu0 %1371, %v271
        %v1373 = vpop.permute.xlu0 %1372
        %1375 = vset.pattern.permute.xlu0 1
        %1376 = vperm.xlu0 %1375, %v272
        %v1377 = vpop.permute.xlu0 %1376
        %1379 = vset.pattern.permute.xlu0 1
        %1380 = vperm.xlu0 %1379, %v273
        %v1381 = vpop.permute.xlu0 %1380
        %1383 = vset.pattern.permute.xlu0 1
        %1384 = vperm.xlu0 %1383, %v274
        %v1385 = vpop.permute.xlu0 %1384
        %1387 = vset.pattern.permute.xlu0 1
        %1388 = vperm.xlu0 %1387, %v275
        %v1389 = vpop.permute.xlu0 %1388
        %1391 = vset.pattern.permute.xlu0 1
        %1392 = vperm.xlu0 %1391, %v276
        %v1393 = vpop.permute.xlu0 %1392
        %1395 = vset.pattern.permute.xlu0 1
        %1396 = vperm.xlu0 %1395, %v277
        %v1397 = vpop.permute.xlu0 %1396
        %1399 = vset.pattern.permute.xlu0 1
        %1400 = vperm.xlu0 %1399, %v278
        %v1401 = vpop.permute.xlu0 %1400
        %v1403 = vmul.f32 %v1341, %v1275
        %v1404 = vmul.f32 %v1341, %v1276
        %v1405 = vmul.f32 %v1341, %v1277
        %v1406 = vmul.f32 %v1341, %v1278
        %v1407 = vmul.f32 %v1345, %v1279
        %v1408 = vmul.f32 %v1345, %v1280
        %v1409 = vmul.f32 %v1345, %v1281
        %v1410 = vmul.f32 %v1345, %v1282
        %v1411 = vmul.f32 %v1349, %v1283
        %v1412 = vmul.f32 %v1349, %v1284
        %v1413 = vmul.f32 %v1349, %v1285
        %v1414 = vmul.f32 %v1349, %v1286
        %v1415 = vmul.f32 %v1353, %v1287
        %v1416 = vmul.f32 %v1353, %v1288
        %v1417 = vmul.f32 %v1353, %v1289
        %v1418 = vmul.f32 %v1353, %v1290
        %v1419 = vmul.f32 %v1357, %v1291
        %v1420 = vmul.f32 %v1357, %v1292
        %v1421 = vmul.f32 %v1357, %v1293
        %v1422 = vmul.f32 %v1357, %v1294
        %v1423 = vmul.f32 %v1361, %v1295
        %v1424 = vmul.f32 %v1361, %v1296
        %v1425 = vmul.f32 %v1361, %v1297
        %v1426 = vmul.f32 %v1361, %v1298
        %v1427 = vmul.f32 %v1365, %v1299
        %v1428 = vmul.f32 %v1365, %v1300
        %v1429 = vmul.f32 %v1365, %v1301
        %v1430 = vmul.f32 %v1365, %v1302
        %v1431 = vmul.f32 %v1369, %v1303
        %v1432 = vmul.f32 %v1369, %v1304
        %v1433 = vmul.f32 %v1369, %v1305
        %v1434 = vmul.f32 %v1369, %v1306
        %v1435 = vmul.f32 %v1373, %v1307
        %v1436 = vmul.f32 %v1373, %v1308
        %v1437 = vmul.f32 %v1373, %v1309
        %v1438 = vmul.f32 %v1373, %v1310
        %v1439 = vmul.f32 %v1377, %v1311
        %v1440 = vmul.f32 %v1377, %v1312
        %v1441 = vmul.f32 %v1377, %v1313
        %v1442 = vmul.f32 %v1377, %v1314
        %v1443 = vmul.f32 %v1381, %v1315
        %v1444 = vmul.f32 %v1381, %v1316
        %v1445 = vmul.f32 %v1381, %v1317
        %v1446 = vmul.f32 %v1381, %v1318
        %v1447 = vmul.f32 %v1385, %v1319
        %v1448 = vmul.f32 %v1385, %v1320
        %v1449 = vmul.f32 %v1385, %v1321
        %v1450 = vmul.f32 %v1385, %v1322
        %v1451 = vmul.f32 %v1389, %v1323
        %v1452 = vmul.f32 %v1389, %v1324
        %v1453 = vmul.f32 %v1389, %v1325
        %v1454 = vmul.f32 %v1389, %v1326
        %v1455 = vmul.f32 %v1393, %v1327
        %v1456 = vmul.f32 %v1393, %v1328
        %v1457 = vmul.f32 %v1393, %v1329
        %v1458 = vmul.f32 %v1393, %v1330
        %v1459 = vmul.f32 %v1397, %v1331
        %v1460 = vmul.f32 %v1397, %v1332
        %v1461 = vmul.f32 %v1397, %v1333
        %v1462 = vmul.f32 %v1397, %v1334
        %v1463 = vmul.f32 %v1401, %v1335
        %v1464 = vmul.f32 %v1401, %v1336
        %v1465 = vmul.f32 %v1401, %v1337
        %v1466 = vmul.f32 %v1401, %v1338
        %v1467 = vlaneseq
        %v1468 = vshrl.u32 %v1467, 7
        %v1469 = vsub.s32 0, %v1468
        %v1470 = vlaneseq
        %v1471 = vshrl.u32 %v1470, 7
        %v1472 = vsub.s32 0, %v1471
        %v1473 = vlaneseq
        %v1474 = vshrl.u32 %v1473, 7
        %v1475 = vsub.s32 0, %v1474
        %v1476 = vlaneseq
        %v1477 = vshrl.u32 %v1476, 7
        %v1478 = vsub.s32 0, %v1477
        %v1479 = vmul.f32 %v1403, %v1172
        %v1480 = vmul.f32 %v1404, %v1202
        %v1481 = vmul.f32 %v1405, %v1232
        %v1482 = vmul.f32 %v1406, %v1262
        %v1483 = vmul.f32 %v1407, %v1172
        %v1484 = vmul.f32 %v1408, %v1202
        %v1485 = vmul.f32 %v1409, %v1232
        %v1486 = vmul.f32 %v1410, %v1262
        %v1487 = vmul.f32 %v1411, %v1172
        %v1488 = vmul.f32 %v1412, %v1202
        %v1489 = vmul.f32 %v1413, %v1232
        %v1490 = vmul.f32 %v1414, %v1262
        %v1491 = vmul.f32 %v1415, %v1172
        %v1492 = vmul.f32 %v1416, %v1202
        %v1493 = vmul.f32 %v1417, %v1232
        %v1494 = vmul.f32 %v1418, %v1262
        %v1495 = vmul.f32 %v1419, %v1172
        %v1496 = vmul.f32 %v1420, %v1202
        %v1497 = vmul.f32 %v1421, %v1232
        %v1498 = vmul.f32 %v1422, %v1262
        %v1499 = vmul.f32 %v1423, %v1172
        %v1500 = vmul.f32 %v1424, %v1202
        %v1501 = vmul.f32 %v1425, %v1232
        %v1502 = vmul.f32 %v1426, %v1262
        %v1503 = vmul.f32 %v1427, %v1172
        %v1504 = vmul.f32 %v1428, %v1202
        %v1505 = vmul.f32 %v1429, %v1232
        %v1506 = vmul.f32 %v1430, %v1262
        %v1507 = vmul.f32 %v1431, %v1172
        %v1508 = vmul.f32 %v1432, %v1202
        %v1509 = vmul.f32 %v1433, %v1232
        %v1510 = vmul.f32 %v1434, %v1262
        %v1511 = vmul.f32 %v1435, %v1172
        %v1512 = vmul.f32 %v1436, %v1202
        %v1513 = vmul.f32 %v1437, %v1232
        %v1514 = vmul.f32 %v1438, %v1262
        %v1515 = vmul.f32 %v1439, %v1172
        %v1516 = vmul.f32 %v1440, %v1202
        %v1517 = vmul.f32 %v1441, %v1232
        %v1518 = vmul.f32 %v1442, %v1262
        %v1519 = vmul.f32 %v1443, %v1172
        %v1520 = vmul.f32 %v1444, %v1202
        %v1521 = vmul.f32 %v1445, %v1232
        %v1522 = vmul.f32 %v1446, %v1262
        %v1523 = vmul.f32 %v1447, %v1172
        %v1524 = vmul.f32 %v1448, %v1202
        %v1525 = vmul.f32 %v1449, %v1232
        %v1526 = vmul.f32 %v1450, %v1262
        %v1527 = vmul.f32 %v1451, %v1172
        %v1528 = vmul.f32 %v1452, %v1202
        %v1529 = vmul.f32 %v1453, %v1232
        %v1530 = vmul.f32 %v1454, %v1262
        %v1531 = vmul.f32 %v1455, %v1172
        %v1532 = vmul.f32 %v1456, %v1202
        %v1533 = vmul.f32 %v1457, %v1232
        %v1534 = vmul.f32 %v1458, %v1262
        %v1535 = vmul.f32 %v1459, %v1172
        %v1536 = vmul.f32 %v1460, %v1202
        %v1537 = vmul.f32 %v1461, %v1232
        %v1538 = vmul.f32 %v1462, %v1262
        %v1539 = vmul.f32 %v1463, %v1172
        %v1540 = vmul.f32 %v1464, %v1202
        %v1541 = vmul.f32 %v1465, %v1232
        %v1542 = vmul.f32 %v1466, %v1262
        %1543 = vset.pattern.permute.xlu0 2
        %1544 = vperm.xlu0 %1543, %v263
        %v1545 = vpop.permute.xlu0 %1544
        %1547 = vset.pattern.permute.xlu0 2
        %1548 = vperm.xlu0 %1547, %v264
        %v1549 = vpop.permute.xlu0 %1548
        %1551 = vset.pattern.permute.xlu0 2
        %1552 = vperm.xlu0 %1551, %v265
        %v1553 = vpop.permute.xlu0 %1552
        %1555 = vset.pattern.permute.xlu0 2
        %1556 = vperm.xlu0 %1555, %v266
        %v1557 = vpop.permute.xlu0 %1556
        %1559 = vset.pattern.permute.xlu0 2
        %1560 = vperm.xlu0 %1559, %v267
        %v1561 = vpop.permute.xlu0 %1560
        %1563 = vset.pattern.permute.xlu0 2
        %1564 = vperm.xlu0 %1563, %v268
        %v1565 = vpop.permute.xlu0 %1564
        %1567 = vset.pattern.permute.xlu0 2
        %1568 = vperm.xlu0 %1567, %v269
        %v1569 = vpop.permute.xlu0 %1568
        %1571 = vset.pattern.permute.xlu0 2
        %1572 = vperm.xlu0 %1571, %v270
        %v1573 = vpop.permute.xlu0 %1572
        %1575 = vset.pattern.permute.xlu0 2
        %1576 = vperm.xlu0 %1575, %v271
        %v1577 = vpop.permute.xlu0 %1576
        %1579 = vset.pattern.permute.xlu0 2
        %1580 = vperm.xlu0 %1579, %v272
        %v1581 = vpop.permute.xlu0 %1580
        %1583 = vset.pattern.permute.xlu0 2
        %1584 = vperm.xlu0 %1583, %v273
        %v1585 = vpop.permute.xlu0 %1584
        %1587 = vset.pattern.permute.xlu0 2
        %1588 = vperm.xlu0 %1587, %v274
        %v1589 = vpop.permute.xlu0 %1588
        %1591 = vset.pattern.permute.xlu0 2
        %1592 = vperm.xlu0 %1591, %v275
        %v1593 = vpop.permute.xlu0 %1592
        %1595 = vset.pattern.permute.xlu0 2
        %1596 = vperm.xlu0 %1595, %v276
        %v1597 = vpop.permute.xlu0 %1596
        %1599 = vset.pattern.permute.xlu0 2
        %1600 = vperm.xlu0 %1599, %v277
        %v1601 = vpop.permute.xlu0 %1600
        %1603 = vset.pattern.permute.xlu0 2
        %1604 = vperm.xlu0 %1603, %v278
        %v1605 = vpop.permute.xlu0 %1604
        %v1607 = vadd.f32 %v1479, %v1545
        %v1608 = vadd.f32 %v1480, %v1545
        %v1609 = vadd.f32 %v1481, %v1545
        %v1610 = vadd.f32 %v1482, %v1545
        %v1611 = vadd.f32 %v1483, %v1549
        %v1612 = vadd.f32 %v1484, %v1549
        %v1613 = vadd.f32 %v1485, %v1549
        %v1614 = vadd.f32 %v1486, %v1549
        %v1615 = vadd.f32 %v1487, %v1553
        %v1616 = vadd.f32 %v1488, %v1553
        %v1617 = vadd.f32 %v1489, %v1553
        %v1618 = vadd.f32 %v1490, %v1553
        %v1619 = vadd.f32 %v1491, %v1557
        %v1620 = vadd.f32 %v1492, %v1557
        %v1621 = vadd.f32 %v1493, %v1557
        %v1622 = vadd.f32 %v1494, %v1557
        %v1623 = vadd.f32 %v1495, %v1561
        %v1624 = vadd.f32 %v1496, %v1561
        %v1625 = vadd.f32 %v1497, %v1561
        %v1626 = vadd.f32 %v1498, %v1561
        %v1627 = vadd.f32 %v1499, %v1565
        %v1628 = vadd.f32 %v1500, %v1565
        %v1629 = vadd.f32 %v1501, %v1565
        %v1630 = vadd.f32 %v1502, %v1565
        %v1631 = vadd.f32 %v1503, %v1569
        %v1632 = vadd.f32 %v1504, %v1569
        %v1633 = vadd.f32 %v1505, %v1569
        %v1634 = vadd.f32 %v1506, %v1569
        %v1635 = vadd.f32 %v1507, %v1573
        %v1636 = vadd.f32 %v1508, %v1573
        %v1637 = vadd.f32 %v1509, %v1573
        %v1638 = vadd.f32 %v1510, %v1573
        %v1639 = vadd.f32 %v1511, %v1577
        %v1640 = vadd.f32 %v1512, %v1577
        %v1641 = vadd.f32 %v1513, %v1577
        %v1642 = vadd.f32 %v1514, %v1577
        %v1643 = vadd.f32 %v1515, %v1581
        %v1644 = vadd.f32 %v1516, %v1581
        %v1645 = vadd.f32 %v1517, %v1581
        %v1646 = vadd.f32 %v1518, %v1581
        %v1647 = vadd.f32 %v1519, %v1585
        %v1648 = vadd.f32 %v1520, %v1585
        %v1649 = vadd.f32 %v1521, %v1585
        %v1650 = vadd.f32 %v1522, %v1585
        %v1651 = vadd.f32 %v1523, %v1589
        %v1652 = vadd.f32 %v1524, %v1589
        %v1653 = vadd.f32 %v1525, %v1589
        %v1654 = vadd.f32 %v1526, %v1589
        %v1655 = vadd.f32 %v1527, %v1593
        %v1656 = vadd.f32 %v1528, %v1593
        %v1657 = vadd.f32 %v1529, %v1593
        %v1658 = vadd.f32 %v1530, %v1593
        %v1659 = vadd.f32 %v1531, %v1597
        %v1660 = vadd.f32 %v1532, %v1597
        %v1661 = vadd.f32 %v1533, %v1597
        %v1662 = vadd.f32 %v1534, %v1597
        %v1663 = vadd.f32 %v1535, %v1601
        %v1664 = vadd.f32 %v1536, %v1601
        %v1665 = vadd.f32 %v1537, %v1601
        %v1666 = vadd.f32 %v1538, %v1601
        %v1667 = vadd.f32 %v1539, %v1605
        %v1668 = vadd.f32 %v1540, %v1605
        %v1669 = vadd.f32 %v1541, %v1605
        %v1670 = vadd.f32 %v1542, %v1605
        %v1671 = vlaneseq
        %v1672 = vand.u32 %v1671, 127
        %1673 = vrot.lane.b32.xlu0 %v1607, 2
        %v1674 = vpop.permute.xlu0 %1673
        %1675 = vrot.lane.b32.xlu0 %v1611, 2
        %v1676 = vpop.permute.xlu0 %1675
        %1677 = vrot.lane.b32.xlu0 %v1615, 2
        %v1678 = vpop.permute.xlu0 %1677
        %1679 = vrot.lane.b32.xlu0 %v1619, 2
        %v1680 = vpop.permute.xlu0 %1679
        %1681 = vrot.lane.b32.xlu0 %v1623, 2
        %v1682 = vpop.permute.xlu0 %1681
        %1683 = vrot.lane.b32.xlu0 %v1627, 2
        %v1684 = vpop.permute.xlu0 %1683
        %1685 = vrot.lane.b32.xlu0 %v1631, 2
        %v1686 = vpop.permute.xlu0 %1685
        %1687 = vrot.lane.b32.xlu0 %v1635, 2
        %v1688 = vpop.permute.xlu0 %1687
        %1689 = vrot.lane.b32.xlu0 %v1639, 2
        %v1690 = vpop.permute.xlu0 %1689
        %1691 = vrot.lane.b32.xlu0 %v1643, 2
        %v1692 = vpop.permute.xlu0 %1691
        %1693 = vrot.lane.b32.xlu0 %v1647, 2
        %v1694 = vpop.permute.xlu0 %1693
        %1695 = vrot.lane.b32.xlu0 %v1651, 2
        %v1696 = vpop.permute.xlu0 %1695
        %1697 = vrot.lane.b32.xlu0 %v1655, 2
        %v1698 = vpop.permute.xlu0 %1697
        %1699 = vrot.lane.b32.xlu0 %v1659, 2
        %v1700 = vpop.permute.xlu0 %1699
        %1701 = vrot.lane.b32.xlu0 %v1663, 2
        %v1702 = vpop.permute.xlu0 %1701
        %1703 = vrot.lane.b32.xlu0 %v1667, 2
        %v1704 = vpop.permute.xlu0 %1703
        %1705 = vrot.lane.b32.xlu0 %v1608, 2
        %v1706 = vpop.permute.xlu0 %1705
        %1707 = vrot.lane.b32.xlu0 %v1612, 2
        %v1708 = vpop.permute.xlu0 %1707
        %1709 = vrot.lane.b32.xlu0 %v1616, 2
        %v1710 = vpop.permute.xlu0 %1709
        %1711 = vrot.lane.b32.xlu0 %v1620, 2
        %v1712 = vpop.permute.xlu0 %1711
        %1713 = vrot.lane.b32.xlu0 %v1624, 2
        %v1714 = vpop.permute.xlu0 %1713
        %1715 = vrot.lane.b32.xlu0 %v1628, 2
        %v1716 = vpop.permute.xlu0 %1715
        %1717 = vrot.lane.b32.xlu0 %v1632, 2
        %v1718 = vpop.permute.xlu0 %1717
        %1719 = vrot.lane.b32.xlu0 %v1636, 2
        %v1720 = vpop.permute.xlu0 %1719
        %1721 = vrot.lane.b32.xlu0 %v1640, 2
        %v1722 = vpop.permute.xlu0 %1721
        %1723 = vrot.lane.b32.xlu0 %v1644, 2
        %v1724 = vpop.permute.xlu0 %1723
        %1725 = vrot.lane.b32.xlu0 %v1648, 2
        %v1726 = vpop.permute.xlu0 %1725
        %1727 = vrot.lane.b32.xlu0 %v1652, 2
        %v1728 = vpop.permute.xlu0 %1727
        %1729 = vrot.lane.b32.xlu0 %v1656, 2
        %v1730 = vpop.permute.xlu0 %1729
        %1731 = vrot.lane.b32.xlu0 %v1660, 2
        %v1732 = vpop.permute.xlu0 %1731
        %1733 = vrot.lane.b32.xlu0 %v1664, 2
        %v1734 = vpop.permute.xlu0 %1733
        %1735 = vrot.lane.b32.xlu0 %v1668, 2
        %v1736 = vpop.permute.xlu0 %1735
        %1737 = vrot.lane.b32.xlu0 %v1609, 2
        %v1738 = vpop.permute.xlu0 %1737
        %1739 = vrot.lane.b32.xlu0 %v1613, 2
        %v1740 = vpop.permute.xlu0 %1739
        %1741 = vrot.lane.b32.xlu0 %v1617, 2
        %v1742 = vpop.permute.xlu0 %1741
        %1743 = vrot.lane.b32.xlu0 %v1621, 2
        %v1744 = vpop.permute.xlu0 %1743
        %1745 = vrot.lane.b32.xlu0 %v1625, 2
        %v1746 = vpop.permute.xlu0 %1745
        %1747 = vrot.lane.b32.xlu0 %v1629, 2
        %v1748 = vpop.permute.xlu0 %1747
        %1749 = vrot.lane.b32.xlu0 %v1633, 2
        %v1750 = vpop.permute.xlu0 %1749
        %1751 = vrot.lane.b32.xlu0 %v1637, 2
        %v1752 = vpop.permute.xlu0 %1751
        %1753 = vrot.lane.b32.xlu0 %v1641, 2
        %v1754 = vpop.permute.xlu0 %1753
        %1755 = vrot.lane.b32.xlu0 %v1645, 2
        %v1756 = vpop.permute.xlu0 %1755
        %1757 = vrot.lane.b32.xlu0 %v1649, 2
        %v1758 = vpop.permute.xlu0 %1757
        %1759 = vrot.lane.b32.xlu0 %v1653, 2
        %v1760 = vpop.permute.xlu0 %1759
        %1761 = vrot.lane.b32.xlu0 %v1657, 2
        %v1762 = vpop.permute.xlu0 %1761
        %1763 = vrot.lane.b32.xlu0 %v1661, 2
        %v1764 = vpop.permute.xlu0 %1763
        %1765 = vrot.lane.b32.xlu0 %v1665, 2
        %v1766 = vpop.permute.xlu0 %1765
        %1767 = vrot.lane.b32.xlu0 %v1669, 2
        %v1768 = vpop.permute.xlu0 %1767
        %1769 = vrot.lane.b32.xlu0 %v1610, 2
        %v1770 = vpop.permute.xlu0 %1769
        %1771 = vrot.lane.b32.xlu0 %v1614, 2
        %v1772 = vpop.permute.xlu0 %1771
        %1773 = vrot.lane.b32.xlu0 %v1618, 2
        %v1774 = vpop.permute.xlu0 %1773
        %1775 = vrot.lane.b32.xlu0 %v1622, 2
        %v1776 = vpop.permute.xlu0 %1775
        %1777 = vrot.lane.b32.xlu0 %v1626, 2
        %v1778 = vpop.permute.xlu0 %1777
        %1779 = vrot.lane.b32.xlu0 %v1630, 2
        %v1780 = vpop.permute.xlu0 %1779
        %1781 = vrot.lane.b32.xlu0 %v1634, 2
        %v1782 = vpop.permute.xlu0 %1781
        %1783 = vrot.lane.b32.xlu0 %v1638, 2
        %v1784 = vpop.permute.xlu0 %1783
        %1785 = vrot.lane.b32.xlu0 %v1642, 2
        %v1786 = vpop.permute.xlu0 %1785
        %1787 = vrot.lane.b32.xlu0 %v1646, 2
        %v1788 = vpop.permute.xlu0 %1787
        %1789 = vrot.lane.b32.xlu0 %v1650, 2
        %v1790 = vpop.permute.xlu0 %1789
        %1791 = vrot.lane.b32.xlu0 %v1654, 2
        %v1792 = vpop.permute.xlu0 %1791
        %1793 = vrot.lane.b32.xlu0 %v1658, 2
        %v1794 = vpop.permute.xlu0 %1793
        %1795 = vrot.lane.b32.xlu0 %v1662, 2
        %v1796 = vpop.permute.xlu0 %1795
        %1797 = vrot.lane.b32.xlu0 %v1666, 2
        %v1798 = vpop.permute.xlu0 %1797
        %1799 = vrot.lane.b32.xlu0 %v1670, 2
        %v1800 = vpop.permute.xlu0 %1799
        %vm1801 = vcmp.lt.s32.totalorder %v1672, 2
        %v1802 = vsel %vm1801, %v1738, %v1770
        %v1803 = vsel %vm1801, %v1740, %v1772
        %v1804 = vsel %vm1801, %v1742, %v1774
        %v1805 = vsel %vm1801, %v1744, %v1776
        %v1806 = vsel %vm1801, %v1746, %v1778
        %v1807 = vsel %vm1801, %v1748, %v1780
        %v1808 = vsel %vm1801, %v1750, %v1782
        %v1809 = vsel %vm1801, %v1752, %v1784
        %v1810 = vsel %vm1801, %v1754, %v1786
        %v1811 = vsel %vm1801, %v1756, %v1788
        %v1812 = vsel %vm1801, %v1758, %v1790
        %v1813 = vsel %vm1801, %v1760, %v1792
        %v1814 = vsel %vm1801, %v1762, %v1794
        %v1815 = vsel %vm1801, %v1764, %v1796
        %v1816 = vsel %vm1801, %v1766, %v1798
        %v1817 = vsel %vm1801, %v1768, %v1800
        %v1818 = vsel %vm1801, %v1706, %v1738
        %v1819 = vsel %vm1801, %v1708, %v1740
        %v1820 = vsel %vm1801, %v1710, %v1742
        %v1821 = vsel %vm1801, %v1712, %v1744
        %v1822 = vsel %vm1801, %v1714, %v1746
        %v1823 = vsel %vm1801, %v1716, %v1748
        %v1824 = vsel %vm1801, %v1718, %v1750
        %v1825 = vsel %vm1801, %v1720, %v1752
        %v1826 = vsel %vm1801, %v1722, %v1754
        %v1827 = vsel %vm1801, %v1724, %v1756
        %v1828 = vsel %vm1801, %v1726, %v1758
        %v1829 = vsel %vm1801, %v1728, %v1760
        %v1830 = vsel %vm1801, %v1730, %v1762
        %v1831 = vsel %vm1801, %v1732, %v1764
        %v1832 = vsel %vm1801, %v1734, %v1766
        %v1833 = vsel %vm1801, %v1736, %v1768
        %v1834 = vsel %vm1801, %v1674, %v1706
        %v1835 = vsel %vm1801, %v1676, %v1708
        %v1836 = vsel %vm1801, %v1678, %v1710
        %v1837 = vsel %vm1801, %v1680, %v1712
        %v1838 = vsel %vm1801, %v1682, %v1714
        %v1839 = vsel %vm1801, %v1684, %v1716
        %v1840 = vsel %vm1801, %v1686, %v1718
        %v1841 = vsel %vm1801, %v1688, %v1720
        %v1842 = vsel %vm1801, %v1690, %v1722
        %v1843 = vsel %vm1801, %v1692, %v1724
        %v1844 = vsel %vm1801, %v1694, %v1726
        %v1845 = vsel %vm1801, %v1696, %v1728
        %v1846 = vsel %vm1801, %v1698, %v1730
        %v1847 = vsel %vm1801, %v1700, %v1732
        %v1848 = vsel %vm1801, %v1702, %v1734
        %v1849 = vsel %vm1801, %v1704, %v1736
        %v1850 = vsel %vm1801, %v1770, %v1674
        %v1851 = vsel %vm1801, %v1772, %v1676
        %v1852 = vsel %vm1801, %v1774, %v1678
        %v1853 = vsel %vm1801, %v1776, %v1680
        %v1854 = vsel %vm1801, %v1778, %v1682
        %v1855 = vsel %vm1801, %v1780, %v1684
        %v1856 = vsel %vm1801, %v1782, %v1686
        %v1857 = vsel %vm1801, %v1784, %v1688
        %v1858 = vsel %vm1801, %v1786, %v1690
        %v1859 = vsel %vm1801, %v1788, %v1692
        %v1860 = vsel %vm1801, %v1790, %v1694
        %v1861 = vsel %vm1801, %v1792, %v1696
        %v1862 = vsel %vm1801, %v1794, %v1698
        %v1863 = vsel %vm1801, %v1796, %v1700
        %v1864 = vsel %vm1801, %v1798, %v1702
        %v1865 = vsel %vm1801, %v1800, %v1704
        %vm1866 = vcmp.ge.s32.totalorder %v1672, 2
        %v1867 = vsel %vm1866, 1, 0
        %v1868 = vlaneseq
        %v1869 = vshrl.u32 %v1868, 7
        %v1870 = vsub.s32 0, %v1869
        %v1871 = vrot.slane %v1867, %v1870
        %vm1872 = vcmp.eq.s32.totalorder %v1871, 1
        %v1873 = vsel %vm1872, %v1850, 0.0
        %v1874 = vsel %vm1872, %v1834, 0.0
        %v1875 = vsel %vm1872, %v1818, 0.0
        %v1876 = vsel %vm1872, %v1802, 0.0
        %v1877 = vsel %vm1872, %v1851, 0.0
        %v1878 = vsel %vm1872, %v1835, 0.0
        %v1879 = vsel %vm1872, %v1819, 0.0
        %v1880 = vsel %vm1872, %v1803, 0.0
        %v1881 = vsel %vm1872, %v1852, 0.0
        %v1882 = vsel %vm1872, %v1836, 0.0
        %v1883 = vsel %vm1872, %v1820, 0.0
        %v1884 = vsel %vm1872, %v1804, 0.0
        %v1885 = vsel %vm1872, %v1853, 0.0
        %v1886 = vsel %vm1872, %v1837, 0.0
        %v1887 = vsel %vm1872, %v1821, 0.0
        %v1888 = vsel %vm1872, %v1805, 0.0
        %v1889 = vsel %vm1872, %v1854, 0.0
        %v1890 = vsel %vm1872, %v1838, 0.0
        %v1891 = vsel %vm1872, %v1822, 0.0
        %v1892 = vsel %vm1872, %v1806, 0.0
        %v1893 = vsel %vm1872, %v1855, 0.0
        %v1894 = vsel %vm1872, %v1839, 0.0
        %v1895 = vsel %vm1872, %v1823, 0.0
        %v1896 = vsel %vm1872, %v1807, 0.0
        %v1897 = vsel %vm1872, %v1856, 0.0
        %v1898 = vsel %vm1872, %v1840, 0.0
        %v1899 = vsel %vm1872, %v1824, 0.0
        %v1900 = vsel %vm1872, %v1808, 0.0
        %v1901 = vsel %vm1872, %v1857, 0.0
        %v1902 = vsel %vm1872, %v1841, 0.0
        %v1903 = vsel %vm1872, %v1825, 0.0
        %v1904 = vsel %vm1872, %v1809, 0.0
        %v1905 = vsel %vm1872, %v1858, 0.0
        %v1906 = vsel %vm1872, %v1842, 0.0
        %v1907 = vsel %vm1872, %v1826, 0.0
        %v1908 = vsel %vm1872, %v1810, 0.0
        %v1909 = vsel %vm1872, %v1859, 0.0
        %v1910 = vsel %vm1872, %v1843, 0.0
        %v1911 = vsel %vm1872, %v1827, 0.0
        %v1912 = vsel %vm1872, %v1811, 0.0
        %v1913 = vsel %vm1872, %v1860, 0.0
        %v1914 = vsel %vm1872, %v1844, 0.0
        %v1915 = vsel %vm1872, %v1828, 0.0
        %v1916 = vsel %vm1872, %v1812, 0.0
        %v1917 = vsel %vm1872, %v1861, 0.0
        %v1918 = vsel %vm1872, %v1845, 0.0
        %v1919 = vsel %vm1872, %v1829, 0.0
        %v1920 = vsel %vm1872, %v1813, 0.0
        %v1921 = vsel %vm1872, %v1862, 0.0
        %v1922 = vsel %vm1872, %v1846, 0.0
        %v1923 = vsel %vm1872, %v1830, 0.0
        %v1924 = vsel %vm1872, %v1814, 0.0
        %v1925 = vsel %vm1872, %v1863, 0.0
        %v1926 = vsel %vm1872, %v1847, 0.0
        %v1927 = vsel %vm1872, %v1831, 0.0
        %v1928 = vsel %vm1872, %v1815, 0.0
        %v1929 = vsel %vm1872, %v1864, 0.0
        %v1930 = vsel %vm1872, %v1848, 0.0
        %v1931 = vsel %vm1872, %v1832, 0.0
        %v1932 = vsel %vm1872, %v1816, 0.0
        %v1933 = vsel %vm1872, %v1865, 0.0
        %v1934 = vsel %vm1872, %v1849, 0.0
        %v1935 = vsel %vm1872, %v1833, 0.0
        %v1936 = vsel %vm1872, %v1817, 0.0
        %1937 = vset.pattern.permute.xlu0 7
        %1938 = vperm.xlu0 %1937, %v263
        %v1939 = vpop.permute.xlu0 %1938
        %1941 = vset.pattern.permute.xlu0 7
        %1942 = vperm.xlu0 %1941, %v264
        %v1943 = vpop.permute.xlu0 %1942
        %1945 = vset.pattern.permute.xlu0 7
        %1946 = vperm.xlu0 %1945, %v265
        %v1947 = vpop.permute.xlu0 %1946
        %1949 = vset.pattern.permute.xlu0 7
        %1950 = vperm.xlu0 %1949, %v266
        %v1951 = vpop.permute.xlu0 %1950
        %1953 = vset.pattern.permute.xlu0 7
        %1954 = vperm.xlu0 %1953, %v267
        %v1955 = vpop.permute.xlu0 %1954
        %1957 = vset.pattern.permute.xlu0 7
        %1958 = vperm.xlu0 %1957, %v268
        %v1959 = vpop.permute.xlu0 %1958
        %1961 = vset.pattern.permute.xlu0 7
        %1962 = vperm.xlu0 %1961, %v269
        %v1963 = vpop.permute.xlu0 %1962
        %1965 = vset.pattern.permute.xlu0 7
        %1966 = vperm.xlu0 %1965, %v270
        %v1967 = vpop.permute.xlu0 %1966
        %1969 = vset.pattern.permute.xlu0 7
        %1970 = vperm.xlu0 %1969, %v271
        %v1971 = vpop.permute.xlu0 %1970
        %1973 = vset.pattern.permute.xlu0 7
        %1974 = vperm.xlu0 %1973, %v272
        %v1975 = vpop.permute.xlu0 %1974
        %1977 = vset.pattern.permute.xlu0 7
        %1978 = vperm.xlu0 %1977, %v273
        %v1979 = vpop.permute.xlu0 %1978
        %1981 = vset.pattern.permute.xlu0 7
        %1982 = vperm.xlu0 %1981, %v274
        %v1983 = vpop.permute.xlu0 %1982
        %1985 = vset.pattern.permute.xlu0 7
        %1986 = vperm.xlu0 %1985, %v275
        %v1987 = vpop.permute.xlu0 %1986
        %1989 = vset.pattern.permute.xlu0 7
        %1990 = vperm.xlu0 %1989, %v276
        %v1991 = vpop.permute.xlu0 %1990
        %1993 = vset.pattern.permute.xlu0 7
        %1994 = vperm.xlu0 %1993, %v277
        %v1995 = vpop.permute.xlu0 %1994
        %1997 = vset.pattern.permute.xlu0 7
        %1998 = vperm.xlu0 %1997, %v278
        %v1999 = vpop.permute.xlu0 %1998
        %v2001 = vmul.f32 %v1939, %v1873
        %v2002 = vmul.f32 %v1939, %v1874
        %v2003 = vmul.f32 %v1939, %v1875
        %v2004 = vmul.f32 %v1939, %v1876
        %v2005 = vmul.f32 %v1943, %v1877
        %v2006 = vmul.f32 %v1943, %v1878
        %v2007 = vmul.f32 %v1943, %v1879
        %v2008 = vmul.f32 %v1943, %v1880
        %v2009 = vmul.f32 %v1947, %v1881
        %v2010 = vmul.f32 %v1947, %v1882
        %v2011 = vmul.f32 %v1947, %v1883
        %v2012 = vmul.f32 %v1947, %v1884
        %v2013 = vmul.f32 %v1951, %v1885
        %v2014 = vmul.f32 %v1951, %v1886
        %v2015 = vmul.f32 %v1951, %v1887
        %v2016 = vmul.f32 %v1951, %v1888
        %v2017 = vmul.f32 %v1955, %v1889
        %v2018 = vmul.f32 %v1955, %v1890
        %v2019 = vmul.f32 %v1955, %v1891
        %v2020 = vmul.f32 %v1955, %v1892
        %v2021 = vmul.f32 %v1959, %v1893
        %v2022 = vmul.f32 %v1959, %v1894
        %v2023 = vmul.f32 %v1959, %v1895
        %v2024 = vmul.f32 %v1959, %v1896
        %v2025 = vmul.f32 %v1963, %v1897
        %v2026 = vmul.f32 %v1963, %v1898
        %v2027 = vmul.f32 %v1963, %v1899
        %v2028 = vmul.f32 %v1963, %v1900
        %v2029 = vmul.f32 %v1967, %v1901
        %v2030 = vmul.f32 %v1967, %v1902
        %v2031 = vmul.f32 %v1967, %v1903
        %v2032 = vmul.f32 %v1967, %v1904
        %v2033 = vmul.f32 %v1971, %v1905
        %v2034 = vmul.f32 %v1971, %v1906
        %v2035 = vmul.f32 %v1971, %v1907
        %v2036 = vmul.f32 %v1971, %v1908
        %v2037 = vmul.f32 %v1975, %v1909
        %v2038 = vmul.f32 %v1975, %v1910
        %v2039 = vmul.f32 %v1975, %v1911
        %v2040 = vmul.f32 %v1975, %v1912
        %v2041 = vmul.f32 %v1979, %v1913
        %v2042 = vmul.f32 %v1979, %v1914
        %v2043 = vmul.f32 %v1979, %v1915
        %v2044 = vmul.f32 %v1979, %v1916
        %v2045 = vmul.f32 %v1983, %v1917
        %v2046 = vmul.f32 %v1983, %v1918
        %v2047 = vmul.f32 %v1983, %v1919
        %v2048 = vmul.f32 %v1983, %v1920
        %v2049 = vmul.f32 %v1987, %v1921
        %v2050 = vmul.f32 %v1987, %v1922
        %v2051 = vmul.f32 %v1987, %v1923
        %v2052 = vmul.f32 %v1987, %v1924
        %v2053 = vmul.f32 %v1991, %v1925
        %v2054 = vmul.f32 %v1991, %v1926
        %v2055 = vmul.f32 %v1991, %v1927
        %v2056 = vmul.f32 %v1991, %v1928
        %v2057 = vmul.f32 %v1995, %v1929
        %v2058 = vmul.f32 %v1995, %v1930
        %v2059 = vmul.f32 %v1995, %v1931
        %v2060 = vmul.f32 %v1995, %v1932
        %v2061 = vmul.f32 %v1999, %v1933
        %v2062 = vmul.f32 %v1999, %v1934
        %v2063 = vmul.f32 %v1999, %v1935
        %v2064 = vmul.f32 %v1999, %v1936
        %v2065 = vadd.f32 %v2001, 0.0
        %v2066 = vadd.f32 %v2002, 0.0
        %v2067 = vadd.f32 %v2003, 0.0
        %v2068 = vadd.f32 %v2004, 0.0
        %v2069 = vadd.f32 %v2005, 0.0
        %v2070 = vadd.f32 %v2006, 0.0
        %v2071 = vadd.f32 %v2007, 0.0
        %v2072 = vadd.f32 %v2008, 0.0
        %v2073 = vadd.f32 %v2009, 0.0
        %v2074 = vadd.f32 %v2010, 0.0
        %v2075 = vadd.f32 %v2011, 0.0
        %v2076 = vadd.f32 %v2012, 0.0
        %v2077 = vadd.f32 %v2013, 0.0
        %v2078 = vadd.f32 %v2014, 0.0
        %v2079 = vadd.f32 %v2015, 0.0
        %v2080 = vadd.f32 %v2016, 0.0
        %v2081 = vadd.f32 %v2017, 0.0
        %v2082 = vadd.f32 %v2018, 0.0
        %v2083 = vadd.f32 %v2019, 0.0
        %v2084 = vadd.f32 %v2020, 0.0
        %v2085 = vadd.f32 %v2021, 0.0
        %v2086 = vadd.f32 %v2022, 0.0
        %v2087 = vadd.f32 %v2023, 0.0
        %v2088 = vadd.f32 %v2024, 0.0
        %v2089 = vadd.f32 %v2025, 0.0
        %v2090 = vadd.f32 %v2026, 0.0
        %v2091 = vadd.f32 %v2027, 0.0
        %v2092 = vadd.f32 %v2028, 0.0
        %v2093 = vadd.f32 %v2029, 0.0
        %v2094 = vadd.f32 %v2030, 0.0
        %v2095 = vadd.f32 %v2031, 0.0
        %v2096 = vadd.f32 %v2032, 0.0
        %v2097 = vadd.f32 %v2033, 0.0
        %v2098 = vadd.f32 %v2034, 0.0
        %v2099 = vadd.f32 %v2035, 0.0
        %v2100 = vadd.f32 %v2036, 0.0
        %v2101 = vadd.f32 %v2037, 0.0
        %v2102 = vadd.f32 %v2038, 0.0
        %v2103 = vadd.f32 %v2039, 0.0
        %v2104 = vadd.f32 %v2040, 0.0
        %v2105 = vadd.f32 %v2041, 0.0
        %v2106 = vadd.f32 %v2042, 0.0
        %v2107 = vadd.f32 %v2043, 0.0
        %v2108 = vadd.f32 %v2044, 0.0
        %v2109 = vadd.f32 %v2045, 0.0
        %v2110 = vadd.f32 %v2046, 0.0
        %v2111 = vadd.f32 %v2047, 0.0
        %v2112 = vadd.f32 %v2048, 0.0
        %v2113 = vadd.f32 %v2049, 0.0
        %v2114 = vadd.f32 %v2050, 0.0
        %v2115 = vadd.f32 %v2051, 0.0
        %v2116 = vadd.f32 %v2052, 0.0
        %v2117 = vadd.f32 %v2053, 0.0
        %v2118 = vadd.f32 %v2054, 0.0
        %v2119 = vadd.f32 %v2055, 0.0
        %v2120 = vadd.f32 %v2056, 0.0
        %v2121 = vadd.f32 %v2057, 0.0
        %v2122 = vadd.f32 %v2058, 0.0
        %v2123 = vadd.f32 %v2059, 0.0
        %v2124 = vadd.f32 %v2060, 0.0
        %v2125 = vadd.f32 %v2061, 0.0
        %v2126 = vadd.f32 %v2062, 0.0
        %v2127 = vadd.f32 %v2063, 0.0
        %v2128 = vadd.f32 %v2064, 0.0
        %2129 = vset.pattern.permute.xlu0 8
        %2130 = vperm.xlu0 %2129, %v263
        %v2131 = vpop.permute.xlu0 %2130
        %2133 = vset.pattern.permute.xlu0 8
        %2134 = vperm.xlu0 %2133, %v264
        %v2135 = vpop.permute.xlu0 %2134
        %2137 = vset.pattern.permute.xlu0 8
        %2138 = vperm.xlu0 %2137, %v265
        %v2139 = vpop.permute.xlu0 %2138
        %2141 = vset.pattern.permute.xlu0 8
        %2142 = vperm.xlu0 %2141, %v266
        %v2143 = vpop.permute.xlu0 %2142
        %2145 = vset.pattern.permute.xlu0 8
        %2146 = vperm.xlu0 %2145, %v267
        %v2147 = vpop.permute.xlu0 %2146
        %2149 = vset.pattern.permute.xlu0 8
        %2150 = vperm.xlu0 %2149, %v268
        %v2151 = vpop.permute.xlu0 %2150
        %2153 = vset.pattern.permute.xlu0 8
        %2154 = vperm.xlu0 %2153, %v269
        %v2155 = vpop.permute.xlu0 %2154
        %2157 = vset.pattern.permute.xlu0 8
        %2158 = vperm.xlu0 %2157, %v270
        %v2159 = vpop.permute.xlu0 %2158
        %2161 = vset.pattern.permute.xlu0 8
        %2162 = vperm.xlu0 %2161, %v271
        %v2163 = vpop.permute.xlu0 %2162
        %2165 = vset.pattern.permute.xlu0 8
        %2166 = vperm.xlu0 %2165, %v272
        %v2167 = vpop.permute.xlu0 %2166
        %2169 = vset.pattern.permute.xlu0 8
        %2170 = vperm.xlu0 %2169, %v273
        %v2171 = vpop.permute.xlu0 %2170
        %2173 = vset.pattern.permute.xlu0 8
        %2174 = vperm.xlu0 %2173, %v274
        %v2175 = vpop.permute.xlu0 %2174
        %2177 = vset.pattern.permute.xlu0 8
        %2178 = vperm.xlu0 %2177, %v275
        %v2179 = vpop.permute.xlu0 %2178
        %2181 = vset.pattern.permute.xlu0 8
        %2182 = vperm.xlu0 %2181, %v276
        %v2183 = vpop.permute.xlu0 %2182
        %2185 = vset.pattern.permute.xlu0 8
        %2186 = vperm.xlu0 %2185, %v277
        %v2187 = vpop.permute.xlu0 %2186
        %2189 = vset.pattern.permute.xlu0 8
        %2190 = vperm.xlu0 %2189, %v278
        %v2191 = vpop.permute.xlu0 %2190
        %v2193 = vmul.f32 %v2131, %v1607
        %v2194 = vmul.f32 %v2131, %v1608
        %v2195 = vmul.f32 %v2131, %v1609
        %v2196 = vmul.f32 %v2131, %v1610
        %v2197 = vmul.f32 %v2135, %v1611
        %v2198 = vmul.f32 %v2135, %v1612
        %v2199 = vmul.f32 %v2135, %v1613
        %v2200 = vmul.f32 %v2135, %v1614
        %v2201 = vmul.f32 %v2139, %v1615
        %v2202 = vmul.f32 %v2139, %v1616
        %v2203 = vmul.f32 %v2139, %v1617
        %v2204 = vmul.f32 %v2139, %v1618
        %v2205 = vmul.f32 %v2143, %v1619
        %v2206 = vmul.f32 %v2143, %v1620
        %v2207 = vmul.f32 %v2143, %v1621
        %v2208 = vmul.f32 %v2143, %v1622
        %v2209 = vmul.f32 %v2147, %v1623
        %v2210 = vmul.f32 %v2147, %v1624
        %v2211 = vmul.f32 %v2147, %v1625
        %v2212 = vmul.f32 %v2147, %v1626
        %v2213 = vmul.f32 %v2151, %v1627
        %v2214 = vmul.f32 %v2151, %v1628
        %v2215 = vmul.f32 %v2151, %v1629
        %v2216 = vmul.f32 %v2151, %v1630
        %v2217 = vmul.f32 %v2155, %v1631
        %v2218 = vmul.f32 %v2155, %v1632
        %v2219 = vmul.f32 %v2155, %v1633
        %v2220 = vmul.f32 %v2155, %v1634
        %v2221 = vmul.f32 %v2159, %v1635
        %v2222 = vmul.f32 %v2159, %v1636
        %v2223 = vmul.f32 %v2159, %v1637
        %v2224 = vmul.f32 %v2159, %v1638
        %v2225 = vmul.f32 %v2163, %v1639
        %v2226 = vmul.f32 %v2163, %v1640
        %v2227 = vmul.f32 %v2163, %v1641
        %v2228 = vmul.f32 %v2163, %v1642
        %v2229 = vmul.f32 %v2167, %v1643
        %v2230 = vmul.f32 %v2167, %v1644
        %v2231 = vmul.f32 %v2167, %v1645
        %v2232 = vmul.f32 %v2167, %v1646
        %v2233 = vmul.f32 %v2171, %v1647
        %v2234 = vmul.f32 %v2171, %v1648
        %v2235 = vmul.f32 %v2171, %v1649
        %v2236 = vmul.f32 %v2171, %v1650
        %v2237 = vmul.f32 %v2175, %v1651
        %v2238 = vmul.f32 %v2175, %v1652
        %v2239 = vmul.f32 %v2175, %v1653
        %v2240 = vmul.f32 %v2175, %v1654
        %v2241 = vmul.f32 %v2179, %v1655
        %v2242 = vmul.f32 %v2179, %v1656
        %v2243 = vmul.f32 %v2179, %v1657
        %v2244 = vmul.f32 %v2179, %v1658
        %v2245 = vmul.f32 %v2183, %v1659
        %v2246 = vmul.f32 %v2183, %v1660
        %v2247 = vmul.f32 %v2183, %v1661
        %v2248 = vmul.f32 %v2183, %v1662
        %v2249 = vmul.f32 %v2187, %v1663
        %v2250 = vmul.f32 %v2187, %v1664
        %v2251 = vmul.f32 %v2187, %v1665
        %v2252 = vmul.f32 %v2187, %v1666
        %v2253 = vmul.f32 %v2191, %v1667
        %v2254 = vmul.f32 %v2191, %v1668
        %v2255 = vmul.f32 %v2191, %v1669
        %v2256 = vmul.f32 %v2191, %v1670
        %v2257 = vadd.f32 %v2065, %v2193
        %v2258 = vadd.f32 %v2066, %v2194
        %v2259 = vadd.f32 %v2067, %v2195
        %v2260 = vadd.f32 %v2068, %v2196
        %v2261 = vadd.f32 %v2069, %v2197
        %v2262 = vadd.f32 %v2070, %v2198
        %v2263 = vadd.f32 %v2071, %v2199
        %v2264 = vadd.f32 %v2072, %v2200
        %v2265 = vadd.f32 %v2073, %v2201
        %v2266 = vadd.f32 %v2074, %v2202
        %v2267 = vadd.f32 %v2075, %v2203
        %v2268 = vadd.f32 %v2076, %v2204
        %v2269 = vadd.f32 %v2077, %v2205
        %v2270 = vadd.f32 %v2078, %v2206
        %v2271 = vadd.f32 %v2079, %v2207
        %v2272 = vadd.f32 %v2080, %v2208
        %v2273 = vadd.f32 %v2081, %v2209
        %v2274 = vadd.f32 %v2082, %v2210
        %v2275 = vadd.f32 %v2083, %v2211
        %v2276 = vadd.f32 %v2084, %v2212
        %v2277 = vadd.f32 %v2085, %v2213
        %v2278 = vadd.f32 %v2086, %v2214
        %v2279 = vadd.f32 %v2087, %v2215
        %v2280 = vadd.f32 %v2088, %v2216
        %v2281 = vadd.f32 %v2089, %v2217
        %v2282 = vadd.f32 %v2090, %v2218
        %v2283 = vadd.f32 %v2091, %v2219
        %v2284 = vadd.f32 %v2092, %v2220
        %v2285 = vadd.f32 %v2093, %v2221
        %v2286 = vadd.f32 %v2094, %v2222
        %v2287 = vadd.f32 %v2095, %v2223
        %v2288 = vadd.f32 %v2096, %v2224
        %v2289 = vadd.f32 %v2097, %v2225
        %v2290 = vadd.f32 %v2098, %v2226
        %v2291 = vadd.f32 %v2099, %v2227
        %v2292 = vadd.f32 %v2100, %v2228
        %v2293 = vadd.f32 %v2101, %v2229
        %v2294 = vadd.f32 %v2102, %v2230
        %v2295 = vadd.f32 %v2103, %v2231
        %v2296 = vadd.f32 %v2104, %v2232
        %v2297 = vadd.f32 %v2105, %v2233
        %v2298 = vadd.f32 %v2106, %v2234
        %v2299 = vadd.f32 %v2107, %v2235
        %v2300 = vadd.f32 %v2108, %v2236
        %v2301 = vadd.f32 %v2109, %v2237
        %v2302 = vadd.f32 %v2110, %v2238
        %v2303 = vadd.f32 %v2111, %v2239
        %v2304 = vadd.f32 %v2112, %v2240
        %v2305 = vadd.f32 %v2113, %v2241
        %v2306 = vadd.f32 %v2114, %v2242
        %v2307 = vadd.f32 %v2115, %v2243
        %v2308 = vadd.f32 %v2116, %v2244
        %v2309 = vadd.f32 %v2117, %v2245
        %v2310 = vadd.f32 %v2118, %v2246
        %v2311 = vadd.f32 %v2119, %v2247
        %v2312 = vadd.f32 %v2120, %v2248
        %v2313 = vadd.f32 %v2121, %v2249
        %v2314 = vadd.f32 %v2122, %v2250
        %v2315 = vadd.f32 %v2123, %v2251
        %v2316 = vadd.f32 %v2124, %v2252
        %v2317 = vadd.f32 %v2125, %v2253
        %v2318 = vadd.f32 %v2126, %v2254
        %v2319 = vadd.f32 %v2127, %v2255
        %v2320 = vadd.f32 %v2128, %v2256
        %2321 = vrot.lane.b32.xlu0 %v1607, 126
        %v2322 = vpop.permute.xlu0 %2321
        %2323 = vrot.lane.b32.xlu0 %v1611, 126
        %v2324 = vpop.permute.xlu0 %2323
        %2325 = vrot.lane.b32.xlu0 %v1615, 126
        %v2326 = vpop.permute.xlu0 %2325
        %2327 = vrot.lane.b32.xlu0 %v1619, 126
        %v2328 = vpop.permute.xlu0 %2327
        %2329 = vrot.lane.b32.xlu0 %v1623, 126
        %v2330 = vpop.permute.xlu0 %2329
        %2331 = vrot.lane.b32.xlu0 %v1627, 126
        %v2332 = vpop.permute.xlu0 %2331
        %2333 = vrot.lane.b32.xlu0 %v1631, 126
        %v2334 = vpop.permute.xlu0 %2333
        %2335 = vrot.lane.b32.xlu0 %v1635, 126
        %v2336 = vpop.permute.xlu0 %2335
        %2337 = vrot.lane.b32.xlu0 %v1639, 126
        %v2338 = vpop.permute.xlu0 %2337
        %2339 = vrot.lane.b32.xlu0 %v1643, 126
        %v2340 = vpop.permute.xlu0 %2339
        %2341 = vrot.lane.b32.xlu0 %v1647, 126
        %v2342 = vpop.permute.xlu0 %2341
        %2343 = vrot.lane.b32.xlu0 %v1651, 126
        %v2344 = vpop.permute.xlu0 %2343
        %2345 = vrot.lane.b32.xlu0 %v1655, 126
        %v2346 = vpop.permute.xlu0 %2345
        %2347 = vrot.lane.b32.xlu0 %v1659, 126
        %v2348 = vpop.permute.xlu0 %2347
        %2349 = vrot.lane.b32.xlu0 %v1663, 126
        %v2350 = vpop.permute.xlu0 %2349
        %2351 = vrot.lane.b32.xlu0 %v1667, 126
        %v2352 = vpop.permute.xlu0 %2351
        %2353 = vrot.lane.b32.xlu0 %v1608, 126
        %v2354 = vpop.permute.xlu0 %2353
        %2355 = vrot.lane.b32.xlu0 %v1612, 126
        %v2356 = vpop.permute.xlu0 %2355
        %2357 = vrot.lane.b32.xlu0 %v1616, 126
        %v2358 = vpop.permute.xlu0 %2357
        %2359 = vrot.lane.b32.xlu0 %v1620, 126
        %v2360 = vpop.permute.xlu0 %2359
        %2361 = vrot.lane.b32.xlu0 %v1624, 126
        %v2362 = vpop.permute.xlu0 %2361
        %2363 = vrot.lane.b32.xlu0 %v1628, 126
        %v2364 = vpop.permute.xlu0 %2363
        %2365 = vrot.lane.b32.xlu0 %v1632, 126
        %v2366 = vpop.permute.xlu0 %2365
        %2367 = vrot.lane.b32.xlu0 %v1636, 126
        %v2368 = vpop.permute.xlu0 %2367
        %2369 = vrot.lane.b32.xlu0 %v1640, 126
        %v2370 = vpop.permute.xlu0 %2369
        %2371 = vrot.lane.b32.xlu0 %v1644, 126
        %v2372 = vpop.permute.xlu0 %2371
        %2373 = vrot.lane.b32.xlu0 %v1648, 126
        %v2374 = vpop.permute.xlu0 %2373
        %2375 = vrot.lane.b32.xlu0 %v1652, 126
        %v2376 = vpop.permute.xlu0 %2375
        %2377 = vrot.lane.b32.xlu0 %v1656, 126
        %v2378 = vpop.permute.xlu0 %2377
        %2379 = vrot.lane.b32.xlu0 %v1660, 126
        %v2380 = vpop.permute.xlu0 %2379
        %2381 = vrot.lane.b32.xlu0 %v1664, 126
        %v2382 = vpop.permute.xlu0 %2381
        %2383 = vrot.lane.b32.xlu0 %v1668, 126
        %v2384 = vpop.permute.xlu0 %2383
        %2385 = vrot.lane.b32.xlu0 %v1609, 126
        %v2386 = vpop.permute.xlu0 %2385
        %2387 = vrot.lane.b32.xlu0 %v1613, 126
        %v2388 = vpop.permute.xlu0 %2387
        %2389 = vrot.lane.b32.xlu0 %v1617, 126
        %v2390 = vpop.permute.xlu0 %2389
        %2391 = vrot.lane.b32.xlu0 %v1621, 126
        %v2392 = vpop.permute.xlu0 %2391
        %2393 = vrot.lane.b32.xlu0 %v1625, 126
        %v2394 = vpop.permute.xlu0 %2393
        %2395 = vrot.lane.b32.xlu0 %v1629, 126
        %v2396 = vpop.permute.xlu0 %2395
        %2397 = vrot.lane.b32.xlu0 %v1633, 126
        %v2398 = vpop.permute.xlu0 %2397
        %2399 = vrot.lane.b32.xlu0 %v1637, 126
        %v2400 = vpop.permute.xlu0 %2399
        %2401 = vrot.lane.b32.xlu0 %v1641, 126
        %v2402 = vpop.permute.xlu0 %2401
        %2403 = vrot.lane.b32.xlu0 %v1645, 126
        %v2404 = vpop.permute.xlu0 %2403
        %2405 = vrot.lane.b32.xlu0 %v1649, 126
        %v2406 = vpop.permute.xlu0 %2405
        %2407 = vrot.lane.b32.xlu0 %v1653, 126
        %v2408 = vpop.permute.xlu0 %2407
        %2409 = vrot.lane.b32.xlu0 %v1657, 126
        %v2410 = vpop.permute.xlu0 %2409
        %2411 = vrot.lane.b32.xlu0 %v1661, 126
        %v2412 = vpop.permute.xlu0 %2411
        %2413 = vrot.lane.b32.xlu0 %v1665, 126
        %v2414 = vpop.permute.xlu0 %2413
        %2415 = vrot.lane.b32.xlu0 %v1669, 126
        %v2416 = vpop.permute.xlu0 %2415
        %2417 = vrot.lane.b32.xlu0 %v1610, 126
        %v2418 = vpop.permute.xlu0 %2417
        %2419 = vrot.lane.b32.xlu0 %v1614, 126
        %v2420 = vpop.permute.xlu0 %2419
        %2421 = vrot.lane.b32.xlu0 %v1618, 126
        %v2422 = vpop.permute.xlu0 %2421
        %2423 = vrot.lane.b32.xlu0 %v1622, 126
        %v2424 = vpop.permute.xlu0 %2423
        %2425 = vrot.lane.b32.xlu0 %v1626, 126
        %v2426 = vpop.permute.xlu0 %2425
        %2427 = vrot.lane.b32.xlu0 %v1630, 126
        %v2428 = vpop.permute.xlu0 %2427
        %2429 = vrot.lane.b32.xlu0 %v1634, 126
        %v2430 = vpop.permute.xlu0 %2429
        %2431 = vrot.lane.b32.xlu0 %v1638, 126
        %v2432 = vpop.permute.xlu0 %2431
        %2433 = vrot.lane.b32.xlu0 %v1642, 126
        %v2434 = vpop.permute.xlu0 %2433
        %2435 = vrot.lane.b32.xlu0 %v1646, 126
        %v2436 = vpop.permute.xlu0 %2435
        %2437 = vrot.lane.b32.xlu0 %v1650, 126
        %v2438 = vpop.permute.xlu0 %2437
        %2439 = vrot.lane.b32.xlu0 %v1654, 126
        %v2440 = vpop.permute.xlu0 %2439
        %2441 = vrot.lane.b32.xlu0 %v1658, 126
        %v2442 = vpop.permute.xlu0 %2441
        %2443 = vrot.lane.b32.xlu0 %v1662, 126
        %v2444 = vpop.permute.xlu0 %2443
        %2445 = vrot.lane.b32.xlu0 %v1666, 126
        %v2446 = vpop.permute.xlu0 %2445
        %2447 = vrot.lane.b32.xlu0 %v1670, 126
        %v2448 = vpop.permute.xlu0 %2447
        %vm2449 = vcmp.lt.s32.totalorder %v1672, 126
        %v2450 = vsel %vm2449, %v2386, %v2418
        %v2451 = vsel %vm2449, %v2388, %v2420
        %v2452 = vsel %vm2449, %v2390, %v2422
        %v2453 = vsel %vm2449, %v2392, %v2424
        %v2454 = vsel %vm2449, %v2394, %v2426
        %v2455 = vsel %vm2449, %v2396, %v2428
        %v2456 = vsel %vm2449, %v2398, %v2430
        %v2457 = vsel %vm2449, %v2400, %v2432
        %v2458 = vsel %vm2449, %v2402, %v2434
        %v2459 = vsel %vm2449, %v2404, %v2436
        %v2460 = vsel %vm2449, %v2406, %v2438
        %v2461 = vsel %vm2449, %v2408, %v2440
        %v2462 = vsel %vm2449, %v2410, %v2442
        %v2463 = vsel %vm2449, %v2412, %v2444
        %v2464 = vsel %vm2449, %v2414, %v2446
        %v2465 = vsel %vm2449, %v2416, %v2448
        %v2466 = vsel %vm2449, %v2354, %v2386
        %v2467 = vsel %vm2449, %v2356, %v2388
        %v2468 = vsel %vm2449, %v2358, %v2390
        %v2469 = vsel %vm2449, %v2360, %v2392
        %v2470 = vsel %vm2449, %v2362, %v2394
        %v2471 = vsel %vm2449, %v2364, %v2396
        %v2472 = vsel %vm2449, %v2366, %v2398
        %v2473 = vsel %vm2449, %v2368, %v2400
        %v2474 = vsel %vm2449, %v2370, %v2402
        %v2475 = vsel %vm2449, %v2372, %v2404
        %v2476 = vsel %vm2449, %v2374, %v2406
        %v2477 = vsel %vm2449, %v2376, %v2408
        %v2478 = vsel %vm2449, %v2378, %v2410
        %v2479 = vsel %vm2449, %v2380, %v2412
        %v2480 = vsel %vm2449, %v2382, %v2414
        %v2481 = vsel %vm2449, %v2384, %v2416
        %v2482 = vsel %vm2449, %v2322, %v2354
        %v2483 = vsel %vm2449, %v2324, %v2356
        %v2484 = vsel %vm2449, %v2326, %v2358
        %v2485 = vsel %vm2449, %v2328, %v2360
        %v2486 = vsel %vm2449, %v2330, %v2362
        %v2487 = vsel %vm2449, %v2332, %v2364
        %v2488 = vsel %vm2449, %v2334, %v2366
        %v2489 = vsel %vm2449, %v2336, %v2368
        %v2490 = vsel %vm2449, %v2338, %v2370
        %v2491 = vsel %vm2449, %v2340, %v2372
        %v2492 = vsel %vm2449, %v2342, %v2374
        %v2493 = vsel %vm2449, %v2344, %v2376
        %v2494 = vsel %vm2449, %v2346, %v2378
        %v2495 = vsel %vm2449, %v2348, %v2380
        %v2496 = vsel %vm2449, %v2350, %v2382
        %v2497 = vsel %vm2449, %v2352, %v2384
        %v2498 = vsel %vm2449, %v2418, %v2322
        %v2499 = vsel %vm2449, %v2420, %v2324
        %v2500 = vsel %vm2449, %v2422, %v2326
        %v2501 = vsel %vm2449, %v2424, %v2328
        %v2502 = vsel %vm2449, %v2426, %v2330
        %v2503 = vsel %vm2449, %v2428, %v2332
        %v2504 = vsel %vm2449, %v2430, %v2334
        %v2505 = vsel %vm2449, %v2432, %v2336
        %v2506 = vsel %vm2449, %v2434, %v2338
        %v2507 = vsel %vm2449, %v2436, %v2340
        %v2508 = vsel %vm2449, %v2438, %v2342
        %v2509 = vsel %vm2449, %v2440, %v2344
        %v2510 = vsel %vm2449, %v2442, %v2346
        %v2511 = vsel %vm2449, %v2444, %v2348
        %v2512 = vsel %vm2449, %v2446, %v2350
        %v2513 = vsel %vm2449, %v2448, %v2352
        %v2514 = vsel %vm2449, 1, 0
        %v2515 = vlaneseq
        %v2516 = vshrl.u32 %v2515, 7
        %v2517 = vsub.s32 0, %v2516
        %v2518 = vrot.slane %v2514, %v2517
        %vm2519 = vcmp.eq.s32.totalorder %v2518, 1
        %v2520 = vsel %vm2519, %v2482, 0.0
        %v2521 = vsel %vm2519, %v2466, 0.0
        %v2522 = vsel %vm2519, %v2450, 0.0
        %v2523 = vsel %vm2519, %v2498, 0.0
        %v2524 = vsel %vm2519, %v2483, 0.0
        %v2525 = vsel %vm2519, %v2467, 0.0
        %v2526 = vsel %vm2519, %v2451, 0.0
        %v2527 = vsel %vm2519, %v2499, 0.0
        %v2528 = vsel %vm2519, %v2484, 0.0
        %v2529 = vsel %vm2519, %v2468, 0.0
        %v2530 = vsel %vm2519, %v2452, 0.0
        %v2531 = vsel %vm2519, %v2500, 0.0
        %v2532 = vsel %vm2519, %v2485, 0.0
        %v2533 = vsel %vm2519, %v2469, 0.0
        %v2534 = vsel %vm2519, %v2453, 0.0
        %v2535 = vsel %vm2519, %v2501, 0.0
        %v2536 = vsel %vm2519, %v2486, 0.0
        %v2537 = vsel %vm2519, %v2470, 0.0
        %v2538 = vsel %vm2519, %v2454, 0.0
        %v2539 = vsel %vm2519, %v2502, 0.0
        %v2540 = vsel %vm2519, %v2487, 0.0
        %v2541 = vsel %vm2519, %v2471, 0.0
        %v2542 = vsel %vm2519, %v2455, 0.0
        %v2543 = vsel %vm2519, %v2503, 0.0
        %v2544 = vsel %vm2519, %v2488, 0.0
        %v2545 = vsel %vm2519, %v2472, 0.0
        %v2546 = vsel %vm2519, %v2456, 0.0
        %v2547 = vsel %vm2519, %v2504, 0.0
        %v2548 = vsel %vm2519, %v2489, 0.0
        %v2549 = vsel %vm2519, %v2473, 0.0
        %v2550 = vsel %vm2519, %v2457, 0.0
        %v2551 = vsel %vm2519, %v2505, 0.0
        %v2552 = vsel %vm2519, %v2490, 0.0
        %v2553 = vsel %vm2519, %v2474, 0.0
        %v2554 = vsel %vm2519, %v2458, 0.0
        %v2555 = vsel %vm2519, %v2506, 0.0
        %v2556 = vsel %vm2519, %v2491, 0.0
        %v2557 = vsel %vm2519, %v2475, 0.0
        %v2558 = vsel %vm2519, %v2459, 0.0
        %v2559 = vsel %vm2519, %v2507, 0.0
        %v2560 = vsel %vm2519, %v2492, 0.0
        %v2561 = vsel %vm2519, %v2476, 0.0
        %v2562 = vsel %vm2519, %v2460, 0.0
        %v2563 = vsel %vm2519, %v2508, 0.0
        %v2564 = vsel %vm2519, %v2493, 0.0
        %v2565 = vsel %vm2519, %v2477, 0.0
        %v2566 = vsel %vm2519, %v2461, 0.0
        %v2567 = vsel %vm2519, %v2509, 0.0
        %v2568 = vsel %vm2519, %v2494, 0.0
        %v2569 = vsel %vm2519, %v2478, 0.0
        %v2570 = vsel %vm2519, %v2462, 0.0
        %v2571 = vsel %vm2519, %v2510, 0.0
        %v2572 = vsel %vm2519, %v2495, 0.0
        %v2573 = vsel %vm2519, %v2479, 0.0
        %v2574 = vsel %vm2519, %v2463, 0.0
        %v2575 = vsel %vm2519, %v2511, 0.0
        %v2576 = vsel %vm2519, %v2496, 0.0
        %v2577 = vsel %vm2519, %v2480, 0.0
        %v2578 = vsel %vm2519, %v2464, 0.0
        %v2579 = vsel %vm2519, %v2512, 0.0
        %v2580 = vsel %vm2519, %v2497, 0.0
        %v2581 = vsel %vm2519, %v2481, 0.0
        %v2582 = vsel %vm2519, %v2465, 0.0
        %v2583 = vsel %vm2519, %v2513, 0.0
        %2584 = vset.pattern.permute.xlu0 9
        %2585 = vperm.xlu0 %2584, %v263
        %v2586 = vpop.permute.xlu0 %2585
        %2588 = vset.pattern.permute.xlu0 9
        %2589 = vperm.xlu0 %2588, %v264
        %v2590 = vpop.permute.xlu0 %2589
        %2592 = vset.pattern.permute.xlu0 9
        %2593 = vperm.xlu0 %2592, %v265
        %v2594 = vpop.permute.xlu0 %2593
        %2596 = vset.pattern.permute.xlu0 9
        %2597 = vperm.xlu0 %2596, %v266
        %v2598 = vpop.permute.xlu0 %2597
        %2600 = vset.pattern.permute.xlu0 9
        %2601 = vperm.xlu0 %2600, %v267
        %v2602 = vpop.permute.xlu0 %2601
        %2604 = vset.pattern.permute.xlu0 9
        %2605 = vperm.xlu0 %2604, %v268
        %v2606 = vpop.permute.xlu0 %2605
        %2608 = vset.pattern.permute.xlu0 9
        %2609 = vperm.xlu0 %2608, %v269
        %v2610 = vpop.permute.xlu0 %2609
        %2612 = vset.pattern.permute.xlu0 9
        %2613 = vperm.xlu0 %2612, %v270
        %v2614 = vpop.permute.xlu0 %2613
        %2616 = vset.pattern.permute.xlu0 9
        %2617 = vperm.xlu0 %2616, %v271
        %v2618 = vpop.permute.xlu0 %2617
        %2620 = vset.pattern.permute.xlu0 9
        %2621 = vperm.xlu0 %2620, %v272
        %v2622 = vpop.permute.xlu0 %2621
        %2624 = vset.pattern.permute.xlu0 9
        %2625 = vperm.xlu0 %2624, %v273
        %v2626 = vpop.permute.xlu0 %2625
        %2628 = vset.pattern.permute.xlu0 9
        %2629 = vperm.xlu0 %2628, %v274
        %v2630 = vpop.permute.xlu0 %2629
        %2632 = vset.pattern.permute.xlu0 9
        %2633 = vperm.xlu0 %2632, %v275
        %v2634 = vpop.permute.xlu0 %2633
        %2636 = vset.pattern.permute.xlu0 9
        %2637 = vperm.xlu0 %2636, %v276
        %v2638 = vpop.permute.xlu0 %2637
        %2640 = vset.pattern.permute.xlu0 9
        %2641 = vperm.xlu0 %2640, %v277
        %v2642 = vpop.permute.xlu0 %2641
        %2644 = vset.pattern.permute.xlu0 9
        %2645 = vperm.xlu0 %2644, %v278
        %v2646 = vpop.permute.xlu0 %2645
        %v2648 = vmul.f32 %v2586, %v2520
        %v2649 = vmul.f32 %v2586, %v2521
        %v2650 = vmul.f32 %v2586, %v2522
        %v2651 = vmul.f32 %v2586, %v2523
        %v2652 = vmul.f32 %v2590, %v2524
        %v2653 = vmul.f32 %v2590, %v2525
        %v2654 = vmul.f32 %v2590, %v2526
        %v2655 = vmul.f32 %v2590, %v2527
        %v2656 = vmul.f32 %v2594, %v2528
        %v2657 = vmul.f32 %v2594, %v2529
        %v2658 = vmul.f32 %v2594, %v2530
        %v2659 = vmul.f32 %v2594, %v2531
        %v2660 = vmul.f32 %v2598, %v2532
        %v2661 = vmul.f32 %v2598, %v2533
        %v2662 = vmul.f32 %v2598, %v2534
        %v2663 = vmul.f32 %v2598, %v2535
        %v2664 = vmul.f32 %v2602, %v2536
        %v2665 = vmul.f32 %v2602, %v2537
        %v2666 = vmul.f32 %v2602, %v2538
        %v2667 = vmul.f32 %v2602, %v2539
        %v2668 = vmul.f32 %v2606, %v2540
        %v2669 = vmul.f32 %v2606, %v2541
        %v2670 = vmul.f32 %v2606, %v2542
        %v2671 = vmul.f32 %v2606, %v2543
        %v2672 = vmul.f32 %v2610, %v2544
        %v2673 = vmul.f32 %v2610, %v2545
        %v2674 = vmul.f32 %v2610, %v2546
        %v2675 = vmul.f32 %v2610, %v2547
        %v2676 = vmul.f32 %v2614, %v2548
        %v2677 = vmul.f32 %v2614, %v2549
        %v2678 = vmul.f32 %v2614, %v2550
        %v2679 = vmul.f32 %v2614, %v2551
        %v2680 = vmul.f32 %v2618, %v2552
        %v2681 = vmul.f32 %v2618, %v2553
        %v2682 = vmul.f32 %v2618, %v2554
        %v2683 = vmul.f32 %v2618, %v2555
        %v2684 = vmul.f32 %v2622, %v2556
        %v2685 = vmul.f32 %v2622, %v2557
        %v2686 = vmul.f32 %v2622, %v2558
        %v2687 = vmul.f32 %v2622, %v2559
        %v2688 = vmul.f32 %v2626, %v2560
        %v2689 = vmul.f32 %v2626, %v2561
        %v2690 = vmul.f32 %v2626, %v2562
        %v2691 = vmul.f32 %v2626, %v2563
        %v2692 = vmul.f32 %v2630, %v2564
        %v2693 = vmul.f32 %v2630, %v2565
        %v2694 = vmul.f32 %v2630, %v2566
        %v2695 = vmul.f32 %v2630, %v2567
        %v2696 = vmul.f32 %v2634, %v2568
        %v2697 = vmul.f32 %v2634, %v2569
        %v2698 = vmul.f32 %v2634, %v2570
        %v2699 = vmul.f32 %v2634, %v2571
        %v2700 = vmul.f32 %v2638, %v2572
        %v2701 = vmul.f32 %v2638, %v2573
        %v2702 = vmul.f32 %v2638, %v2574
        %v2703 = vmul.f32 %v2638, %v2575
        %v2704 = vmul.f32 %v2642, %v2576
        %v2705 = vmul.f32 %v2642, %v2577
        %v2706 = vmul.f32 %v2642, %v2578
        %v2707 = vmul.f32 %v2642, %v2579
        %v2708 = vmul.f32 %v2646, %v2580
        %v2709 = vmul.f32 %v2646, %v2581
        %v2710 = vmul.f32 %v2646, %v2582
        %v2711 = vmul.f32 %v2646, %v2583
        %v2712 = vadd.f32 %v2257, %v2648
        %v2713 = vadd.f32 %v2258, %v2649
        %v2714 = vadd.f32 %v2259, %v2650
        %v2715 = vadd.f32 %v2260, %v2651
        %v2716 = vadd.f32 %v2261, %v2652
        %v2717 = vadd.f32 %v2262, %v2653
        %v2718 = vadd.f32 %v2263, %v2654
        %v2719 = vadd.f32 %v2264, %v2655
        %v2720 = vadd.f32 %v2265, %v2656
        %v2721 = vadd.f32 %v2266, %v2657
        %v2722 = vadd.f32 %v2267, %v2658
        %v2723 = vadd.f32 %v2268, %v2659
        %v2724 = vadd.f32 %v2269, %v2660
        %v2725 = vadd.f32 %v2270, %v2661
        %v2726 = vadd.f32 %v2271, %v2662
        %v2727 = vadd.f32 %v2272, %v2663
        %v2728 = vadd.f32 %v2273, %v2664
        %v2729 = vadd.f32 %v2274, %v2665
        %v2730 = vadd.f32 %v2275, %v2666
        %v2731 = vadd.f32 %v2276, %v2667
        %v2732 = vadd.f32 %v2277, %v2668
        %v2733 = vadd.f32 %v2278, %v2669
        %v2734 = vadd.f32 %v2279, %v2670
        %v2735 = vadd.f32 %v2280, %v2671
        %v2736 = vadd.f32 %v2281, %v2672
        %v2737 = vadd.f32 %v2282, %v2673
        %v2738 = vadd.f32 %v2283, %v2674
        %v2739 = vadd.f32 %v2284, %v2675
        %v2740 = vadd.f32 %v2285, %v2676
        %v2741 = vadd.f32 %v2286, %v2677
        %v2742 = vadd.f32 %v2287, %v2678
        %v2743 = vadd.f32 %v2288, %v2679
        %v2744 = vadd.f32 %v2289, %v2680
        %v2745 = vadd.f32 %v2290, %v2681
        %v2746 = vadd.f32 %v2291, %v2682
        %v2747 = vadd.f32 %v2292, %v2683
        %v2748 = vadd.f32 %v2293, %v2684
        %v2749 = vadd.f32 %v2294, %v2685
        %v2750 = vadd.f32 %v2295, %v2686
        %v2751 = vadd.f32 %v2296, %v2687
        %v2752 = vadd.f32 %v2297, %v2688
        %v2753 = vadd.f32 %v2298, %v2689
        %v2754 = vadd.f32 %v2299, %v2690
        %v2755 = vadd.f32 %v2300, %v2691
        %v2756 = vadd.f32 %v2301, %v2692
        %v2757 = vadd.f32 %v2302, %v2693
        %v2758 = vadd.f32 %v2303, %v2694
        %v2759 = vadd.f32 %v2304, %v2695
        %v2760 = vadd.f32 %v2305, %v2696
        %v2761 = vadd.f32 %v2306, %v2697
        %v2762 = vadd.f32 %v2307, %v2698
        %v2763 = vadd.f32 %v2308, %v2699
        %v2764 = vadd.f32 %v2309, %v2700
        %v2765 = vadd.f32 %v2310, %v2701
        %v2766 = vadd.f32 %v2311, %v2702
        %v2767 = vadd.f32 %v2312, %v2703
        %v2768 = vadd.f32 %v2313, %v2704
        %v2769 = vadd.f32 %v2314, %v2705
        %v2770 = vadd.f32 %v2315, %v2706
        %v2771 = vadd.f32 %v2316, %v2707
        %v2772 = vadd.f32 %v2317, %v2708
        %v2773 = vadd.f32 %v2318, %v2709
        %v2774 = vadd.f32 %v2319, %v2710
        %v2775 = vadd.f32 %v2320, %v2711
        %2776 = vset.pattern.permute.xlu0 3
        %2777 = vperm.xlu0 %2776, %v263
        %v2778 = vpop.permute.xlu0 %2777
        %2780 = vset.pattern.permute.xlu0 3
        %2781 = vperm.xlu0 %2780, %v264
        %v2782 = vpop.permute.xlu0 %2781
        %2784 = vset.pattern.permute.xlu0 3
        %2785 = vperm.xlu0 %2784, %v265
        %v2786 = vpop.permute.xlu0 %2785
        %2788 = vset.pattern.permute.xlu0 3
        %2789 = vperm.xlu0 %2788, %v266
        %v2790 = vpop.permute.xlu0 %2789
        %2792 = vset.pattern.permute.xlu0 3
        %2793 = vperm.xlu0 %2792, %v267
        %v2794 = vpop.permute.xlu0 %2793
        %2796 = vset.pattern.permute.xlu0 3
        %2797 = vperm.xlu0 %2796, %v268
        %v2798 = vpop.permute.xlu0 %2797
        %2800 = vset.pattern.permute.xlu0 3
        %2801 = vperm.xlu0 %2800, %v269
        %v2802 = vpop.permute.xlu0 %2801
        %2804 = vset.pattern.permute.xlu0 3
        %2805 = vperm.xlu0 %2804, %v270
        %v2806 = vpop.permute.xlu0 %2805
        %2808 = vset.pattern.permute.xlu0 3
        %2809 = vperm.xlu0 %2808, %v271
        %v2810 = vpop.permute.xlu0 %2809
        %2812 = vset.pattern.permute.xlu0 3
        %2813 = vperm.xlu0 %2812, %v272
        %v2814 = vpop.permute.xlu0 %2813
        %2816 = vset.pattern.permute.xlu0 3
        %2817 = vperm.xlu0 %2816, %v273
        %v2818 = vpop.permute.xlu0 %2817
        %2820 = vset.pattern.permute.xlu0 3
        %2821 = vperm.xlu0 %2820, %v274
        %v2822 = vpop.permute.xlu0 %2821
        %2824 = vset.pattern.permute.xlu0 3
        %2825 = vperm.xlu0 %2824, %v275
        %v2826 = vpop.permute.xlu0 %2825
        %2828 = vset.pattern.permute.xlu0 3
        %2829 = vperm.xlu0 %2828, %v276
        %v2830 = vpop.permute.xlu0 %2829
        %2832 = vset.pattern.permute.xlu0 3
        %2833 = vperm.xlu0 %2832, %v277
        %v2834 = vpop.permute.xlu0 %2833
        %2836 = vset.pattern.permute.xlu0 3
        %2837 = vperm.xlu0 %2836, %v278
        %v2838 = vpop.permute.xlu0 %2837
        %v2840 = vadd.f32 %v2712, %v2778
        %v2841 = vadd.f32 %v2713, %v2778
        %v2842 = vadd.f32 %v2714, %v2778
        %v2843 = vadd.f32 %v2715, %v2778
        %v2844 = vadd.f32 %v2716, %v2782
        %v2845 = vadd.f32 %v2717, %v2782
        %v2846 = vadd.f32 %v2718, %v2782
        %v2847 = vadd.f32 %v2719, %v2782
        %v2848 = vadd.f32 %v2720, %v2786
        %v2849 = vadd.f32 %v2721, %v2786
        %v2850 = vadd.f32 %v2722, %v2786
        %v2851 = vadd.f32 %v2723, %v2786
        %v2852 = vadd.f32 %v2724, %v2790
        %v2853 = vadd.f32 %v2725, %v2790
        %v2854 = vadd.f32 %v2726, %v2790
        %v2855 = vadd.f32 %v2727, %v2790
        %v2856 = vadd.f32 %v2728, %v2794
        %v2857 = vadd.f32 %v2729, %v2794
        %v2858 = vadd.f32 %v2730, %v2794
        %v2859 = vadd.f32 %v2731, %v2794
        %v2860 = vadd.f32 %v2732, %v2798
        %v2861 = vadd.f32 %v2733, %v2798
        %v2862 = vadd.f32 %v2734, %v2798
        %v2863 = vadd.f32 %v2735, %v2798
        %v2864 = vadd.f32 %v2736, %v2802
        %v2865 = vadd.f32 %v2737, %v2802
        %v2866 = vadd.f32 %v2738, %v2802
        %v2867 = vadd.f32 %v2739, %v2802
        %v2868 = vadd.f32 %v2740, %v2806
        %v2869 = vadd.f32 %v2741, %v2806
        %v2870 = vadd.f32 %v2742, %v2806
        %v2871 = vadd.f32 %v2743, %v2806
        %v2872 = vadd.f32 %v2744, %v2810
        %v2873 = vadd.f32 %v2745, %v2810
        %v2874 = vadd.f32 %v2746, %v2810
        %v2875 = vadd.f32 %v2747, %v2810
        %v2876 = vadd.f32 %v2748, %v2814
        %v2877 = vadd.f32 %v2749, %v2814
        %v2878 = vadd.f32 %v2750, %v2814
        %v2879 = vadd.f32 %v2751, %v2814
        %v2880 = vadd.f32 %v2752, %v2818
        %v2881 = vadd.f32 %v2753, %v2818
        %v2882 = vadd.f32 %v2754, %v2818
        %v2883 = vadd.f32 %v2755, %v2818
        %v2884 = vadd.f32 %v2756, %v2822
        %v2885 = vadd.f32 %v2757, %v2822
        %v2886 = vadd.f32 %v2758, %v2822
        %v2887 = vadd.f32 %v2759, %v2822
        %v2888 = vadd.f32 %v2760, %v2826
        %v2889 = vadd.f32 %v2761, %v2826
        %v2890 = vadd.f32 %v2762, %v2826
        %v2891 = vadd.f32 %v2763, %v2826
        %v2892 = vadd.f32 %v2764, %v2830
        %v2893 = vadd.f32 %v2765, %v2830
        %v2894 = vadd.f32 %v2766, %v2830
        %v2895 = vadd.f32 %v2767, %v2830
        %v2896 = vadd.f32 %v2768, %v2834
        %v2897 = vadd.f32 %v2769, %v2834
        %v2898 = vadd.f32 %v2770, %v2834
        %v2899 = vadd.f32 %v2771, %v2834
        %v2900 = vadd.f32 %v2772, %v2838
        %v2901 = vadd.f32 %v2773, %v2838
        %v2902 = vadd.f32 %v2774, %v2838
        %v2903 = vadd.f32 %v2775, %v2838
        %vm2904 = vcmp.gt.f32.partialorder %v2840, 0.0
        %vm2905 = vcmp.gt.f32.partialorder %v2841, 0.0
        %vm2906 = vcmp.gt.f32.partialorder %v2842, 0.0
        %vm2907 = vcmp.gt.f32.partialorder %v2843, 0.0
        %vm2908 = vcmp.gt.f32.partialorder %v2844, 0.0
        %vm2909 = vcmp.gt.f32.partialorder %v2845, 0.0
        %vm2910 = vcmp.gt.f32.partialorder %v2846, 0.0
        %vm2911 = vcmp.gt.f32.partialorder %v2847, 0.0
        %vm2912 = vcmp.gt.f32.partialorder %v2848, 0.0
        %vm2913 = vcmp.gt.f32.partialorder %v2849, 0.0
        %vm2914 = vcmp.gt.f32.partialorder %v2850, 0.0
        %vm2915 = vcmp.gt.f32.partialorder %v2851, 0.0
        %vm2916 = vcmp.gt.f32.partialorder %v2852, 0.0
        %vm2917 = vcmp.gt.f32.partialorder %v2853, 0.0
        %vm2918 = vcmp.gt.f32.partialorder %v2854, 0.0
        %vm2919 = vcmp.gt.f32.partialorder %v2855, 0.0
        %vm2920 = vcmp.gt.f32.partialorder %v2856, 0.0
        %vm2921 = vcmp.gt.f32.partialorder %v2857, 0.0
        %vm2922 = vcmp.gt.f32.partialorder %v2858, 0.0
        %vm2923 = vcmp.gt.f32.partialorder %v2859, 0.0
        %vm2924 = vcmp.gt.f32.partialorder %v2860, 0.0
        %vm2925 = vcmp.gt.f32.partialorder %v2861, 0.0
        %vm2926 = vcmp.gt.f32.partialorder %v2862, 0.0
        %vm2927 = vcmp.gt.f32.partialorder %v2863, 0.0
        %vm2928 = vcmp.gt.f32.partialorder %v2864, 0.0
        %vm2929 = vcmp.gt.f32.partialorder %v2865, 0.0
        %vm2930 = vcmp.gt.f32.partialorder %v2866, 0.0
        %vm2931 = vcmp.gt.f32.partialorder %v2867, 0.0
        %vm2932 = vcmp.gt.f32.partialorder %v2868, 0.0
        %vm2933 = vcmp.gt.f32.partialorder %v2869, 0.0
        %vm2934 = vcmp.gt.f32.partialorder %v2870, 0.0
        %vm2935 = vcmp.gt.f32.partialorder %v2871, 0.0
        %vm2936 = vcmp.gt.f32.partialorder %v2872, 0.0
        %vm2937 = vcmp.gt.f32.partialorder %v2873, 0.0
        %vm2938 = vcmp.gt.f32.partialorder %v2874, 0.0
        %vm2939 = vcmp.gt.f32.partialorder %v2875, 0.0
        %vm2940 = vcmp.gt.f32.partialorder %v2876, 0.0
        %vm2941 = vcmp.gt.f32.partialorder %v2877, 0.0
        %vm2942 = vcmp.gt.f32.partialorder %v2878, 0.0
        %vm2943 = vcmp.gt.f32.partialorder %v2879, 0.0
        %vm2944 = vcmp.gt.f32.partialorder %v2880, 0.0
        %vm2945 = vcmp.gt.f32.partialorder %v2881, 0.0
        %vm2946 = vcmp.gt.f32.partialorder %v2882, 0.0
        %vm2947 = vcmp.gt.f32.partialorder %v2883, 0.0
        %vm2948 = vcmp.gt.f32.partialorder %v2884, 0.0
        %vm2949 = vcmp.gt.f32.partialorder %v2885, 0.0
        %vm2950 = vcmp.gt.f32.partialorder %v2886, 0.0
        %vm2951 = vcmp.gt.f32.partialorder %v2887, 0.0
        %vm2952 = vcmp.gt.f32.partialorder %v2888, 0.0
        %vm2953 = vcmp.gt.f32.partialorder %v2889, 0.0
        %vm2954 = vcmp.gt.f32.partialorder %v2890, 0.0
        %vm2955 = vcmp.gt.f32.partialorder %v2891, 0.0
        %vm2956 = vcmp.gt.f32.partialorder %v2892, 0.0
        %vm2957 = vcmp.gt.f32.partialorder %v2893, 0.0
        %vm2958 = vcmp.gt.f32.partialorder %v2894, 0.0
        %vm2959 = vcmp.gt.f32.partialorder %v2895, 0.0
        %vm2960 = vcmp.gt.f32.partialorder %v2896, 0.0
        %vm2961 = vcmp.gt.f32.partialorder %v2897, 0.0
        %vm2962 = vcmp.gt.f32.partialorder %v2898, 0.0
        %vm2963 = vcmp.gt.f32.partialorder %v2899, 0.0
        %vm2964 = vcmp.gt.f32.partialorder %v2900, 0.0
        %vm2965 = vcmp.gt.f32.partialorder %v2901, 0.0
        %vm2966 = vcmp.gt.f32.partialorder %v2902, 0.0
        %vm2967 = vcmp.gt.f32.partialorder %v2903, 0.0
        %v2968 = vstv %s262
        %v2969 = vmul.f32 %v2968, %v2840
        %v2970 = vmul.f32 %v2968, %v2841
        %v2971 = vmul.f32 %v2968, %v2842
        %v2972 = vmul.f32 %v2968, %v2843
        %v2973 = vmul.f32 %v2968, %v2844
        %v2974 = vmul.f32 %v2968, %v2845
        %v2975 = vmul.f32 %v2968, %v2846
        %v2976 = vmul.f32 %v2968, %v2847
        %v2977 = vmul.f32 %v2968, %v2848
        %v2978 = vmul.f32 %v2968, %v2849
        %v2979 = vmul.f32 %v2968, %v2850
        %v2980 = vmul.f32 %v2968, %v2851
        %v2981 = vmul.f32 %v2968, %v2852
        %v2982 = vmul.f32 %v2968, %v2853
        %v2983 = vmul.f32 %v2968, %v2854
        %v2984 = vmul.f32 %v2968, %v2855
        %v2985 = vmul.f32 %v2968, %v2856
        %v2986 = vmul.f32 %v2968, %v2857
        %v2987 = vmul.f32 %v2968, %v2858
        %v2988 = vmul.f32 %v2968, %v2859
        %v2989 = vmul.f32 %v2968, %v2860
        %v2990 = vmul.f32 %v2968, %v2861
        %v2991 = vmul.f32 %v2968, %v2862
        %v2992 = vmul.f32 %v2968, %v2863
        %v2993 = vmul.f32 %v2968, %v2864
        %v2994 = vmul.f32 %v2968, %v2865
        %v2995 = vmul.f32 %v2968, %v2866
        %v2996 = vmul.f32 %v2968, %v2867
        %v2997 = vmul.f32 %v2968, %v2868
        %v2998 = vmul.f32 %v2968, %v2869
        %v2999 = vmul.f32 %v2968, %v2870
        %v3000 = vmul.f32 %v2968, %v2871
        %v3001 = vmul.f32 %v2968, %v2872
        %v3002 = vmul.f32 %v2968, %v2873
        %v3003 = vmul.f32 %v2968, %v2874
        %v3004 = vmul.f32 %v2968, %v2875
        %v3005 = vmul.f32 %v2968, %v2876
        %v3006 = vmul.f32 %v2968, %v2877
        %v3007 = vmul.f32 %v2968, %v2878
        %v3008 = vmul.f32 %v2968, %v2879
        %v3009 = vmul.f32 %v2968, %v2880
        %v3010 = vmul.f32 %v2968, %v2881
        %v3011 = vmul.f32 %v2968, %v2882
        %v3012 = vmul.f32 %v2968, %v2883
        %v3013 = vmul.f32 %v2968, %v2884
        %v3014 = vmul.f32 %v2968, %v2885
        %v3015 = vmul.f32 %v2968, %v2886
        %v3016 = vmul.f32 %v2968, %v2887
        %v3017 = vmul.f32 %v2968, %v2888
        %v3018 = vmul.f32 %v2968, %v2889
        %v3019 = vmul.f32 %v2968, %v2890
        %v3020 = vmul.f32 %v2968, %v2891
        %v3021 = vmul.f32 %v2968, %v2892
        %v3022 = vmul.f32 %v2968, %v2893
        %v3023 = vmul.f32 %v2968, %v2894
        %v3024 = vmul.f32 %v2968, %v2895
        %v3025 = vmul.f32 %v2968, %v2896
        %v3026 = vmul.f32 %v2968, %v2897
        %v3027 = vmul.f32 %v2968, %v2898
        %v3028 = vmul.f32 %v2968, %v2899
        %v3029 = vmul.f32 %v2968, %v2900
        %v3030 = vmul.f32 %v2968, %v2901
        %v3031 = vmul.f32 %v2968, %v2902
        %v3032 = vmul.f32 %v2968, %v2903
        %v3033 = vsel %vm2904, %v2840, %v2969
        %v3034 = vsel %vm2905, %v2841, %v2970
        %v3035 = vsel %vm2906, %v2842, %v2971
        %v3036 = vsel %vm2907, %v2843, %v2972
        %v3037 = vsel %vm2908, %v2844, %v2973
        %v3038 = vsel %vm2909, %v2845, %v2974
        %v3039 = vsel %vm2910, %v2846, %v2975
        %v3040 = vsel %vm2911, %v2847, %v2976
        %v3041 = vsel %vm2912, %v2848, %v2977
        %v3042 = vsel %vm2913, %v2849, %v2978
        %v3043 = vsel %vm2914, %v2850, %v2979
        %v3044 = vsel %vm2915, %v2851, %v2980
        %v3045 = vsel %vm2916, %v2852, %v2981
        %v3046 = vsel %vm2917, %v2853, %v2982
        %v3047 = vsel %vm2918, %v2854, %v2983
        %v3048 = vsel %vm2919, %v2855, %v2984
        %v3049 = vsel %vm2920, %v2856, %v2985
        %v3050 = vsel %vm2921, %v2857, %v2986
        %v3051 = vsel %vm2922, %v2858, %v2987
        %v3052 = vsel %vm2923, %v2859, %v2988
        %v3053 = vsel %vm2924, %v2860, %v2989
        %v3054 = vsel %vm2925, %v2861, %v2990
        %v3055 = vsel %vm2926, %v2862, %v2991
        %v3056 = vsel %vm2927, %v2863, %v2992
        %v3057 = vsel %vm2928, %v2864, %v2993
        %v3058 = vsel %vm2929, %v2865, %v2994
        %v3059 = vsel %vm2930, %v2866, %v2995
        %v3060 = vsel %vm2931, %v2867, %v2996
        %v3061 = vsel %vm2932, %v2868, %v2997
        %v3062 = vsel %vm2933, %v2869, %v2998
        %v3063 = vsel %vm2934, %v2870, %v2999
        %v3064 = vsel %vm2935, %v2871, %v3000
        %v3065 = vsel %vm2936, %v2872, %v3001
        %v3066 = vsel %vm2937, %v2873, %v3002
        %v3067 = vsel %vm2938, %v2874, %v3003
        %v3068 = vsel %vm2939, %v2875, %v3004
        %v3069 = vsel %vm2940, %v2876, %v3005
        %v3070 = vsel %vm2941, %v2877, %v3006
        %v3071 = vsel %vm2942, %v2878, %v3007
        %v3072 = vsel %vm2943, %v2879, %v3008
        %v3073 = vsel %vm2944, %v2880, %v3009
        %v3074 = vsel %vm2945, %v2881, %v3010
        %v3075 = vsel %vm2946, %v2882, %v3011
        %v3076 = vsel %vm2947, %v2883, %v3012
        %v3077 = vsel %vm2948, %v2884, %v3013
        %v3078 = vsel %vm2949, %v2885, %v3014
        %v3079 = vsel %vm2950, %v2886, %v3015
        %v3080 = vsel %vm2951, %v2887, %v3016
        %v3081 = vsel %vm2952, %v2888, %v3017
        %v3082 = vsel %vm2953, %v2889, %v3018
        %v3083 = vsel %vm2954, %v2890, %v3019
        %v3084 = vsel %vm2955, %v2891, %v3020
        %v3085 = vsel %vm2956, %v2892, %v3021
        %v3086 = vsel %vm2957, %v2893, %v3022
        %v3087 = vsel %vm2958, %v2894, %v3023
        %v3088 = vsel %vm2959, %v2895, %v3024
        %v3089 = vsel %vm2960, %v2896, %v3025
        %v3090 = vsel %vm2961, %v2897, %v3026
        %v3091 = vsel %vm2962, %v2898, %v3027
        %v3092 = vsel %vm2963, %v2899, %v3028
        %v3093 = vsel %vm2964, %v2900, %v3029
        %v3094 = vsel %vm2965, %v2901, %v3030
        %v3095 = vsel %vm2966, %v2902, %v3031
        %v3096 = vsel %vm2967, %v2903, %v3032
        %v3097 = vadd.f32 %v3033, %v3037
        %v3098 = vadd.f32 %v3097, %v3041
        %v3099 = vadd.f32 %v3098, %v3045
        %v3100 = vadd.f32 %v3099, %v3049
        %v3101 = vadd.f32 %v3100, %v3053
        %v3102 = vadd.f32 %v3101, %v3057
        %v3103 = vadd.f32 %v3102, %v3061
        %v3104 = vadd.f32 %v3103, %v3065
        %v3105 = vadd.f32 %v3104, %v3069
        %v3106 = vadd.f32 %v3105, %v3073
        %v3107 = vadd.f32 %v3106, %v3077
        %v3108 = vadd.f32 %v3107, %v3081
        %v3109 = vadd.f32 %v3108, %v3085
        %v3110 = vadd.f32 %v3109, %v3089
        %v3111 = vadd.f32 %v3110, %v3093
        %v3112 = vrot.slane %v3111, 4
        %v3113 = vadd.f32 %v3111, %v3112
        %v3114 = vrot.slane %v3113, 2
        %v3115 = vadd.f32 %v3113, %v3114
        %v3116 = vrot.slane %v3115, 1
        %v3117 = vadd.f32 %v3115, %v3116
        %v3118 = vadd.f32 %v3034, %v3038
        %v3119 = vadd.f32 %v3118, %v3042
        %v3120 = vadd.f32 %v3119, %v3046
        %v3121 = vadd.f32 %v3120, %v3050
        %v3122 = vadd.f32 %v3121, %v3054
        %v3123 = vadd.f32 %v3122, %v3058
        %v3124 = vadd.f32 %v3123, %v3062
        %v3125 = vadd.f32 %v3124, %v3066
        %v3126 = vadd.f32 %v3125, %v3070
        %v3127 = vadd.f32 %v3126, %v3074
        %v3128 = vadd.f32 %v3127, %v3078
        %v3129 = vadd.f32 %v3128, %v3082
        %v3130 = vadd.f32 %v3129, %v3086
        %v3131 = vadd.f32 %v3130, %v3090
        %v3132 = vadd.f32 %v3131, %v3094
        %v3133 = vrot.slane %v3132, 4
        %v3134 = vadd.f32 %v3132, %v3133
        %v3135 = vrot.slane %v3134, 2
        %v3136 = vadd.f32 %v3134, %v3135
        %v3137 = vrot.slane %v3136, 1
        %v3138 = vadd.f32 %v3136, %v3137
        %v3139 = vadd.f32 %v3035, %v3039
        %v3140 = vadd.f32 %v3139, %v3043
        %v3141 = vadd.f32 %v3140, %v3047
        %v3142 = vadd.f32 %v3141, %v3051
        %v3143 = vadd.f32 %v3142, %v3055
        %v3144 = vadd.f32 %v3143, %v3059
        %v3145 = vadd.f32 %v3144, %v3063
        %v3146 = vadd.f32 %v3145, %v3067
        %v3147 = vadd.f32 %v3146, %v3071
        %v3148 = vadd.f32 %v3147, %v3075
        %v3149 = vadd.f32 %v3148, %v3079
        %v3150 = vadd.f32 %v3149, %v3083
        %v3151 = vadd.f32 %v3150, %v3087
        %v3152 = vadd.f32 %v3151, %v3091
        %v3153 = vadd.f32 %v3152, %v3095
        %v3154 = vrot.slane %v3153, 4
        %v3155 = vadd.f32 %v3153, %v3154
        %v3156 = vrot.slane %v3155, 2
        %v3157 = vadd.f32 %v3155, %v3156
        %v3158 = vrot.slane %v3157, 1
        %v3159 = vadd.f32 %v3157, %v3158
        %v3160 = vadd.f32 %v3036, %v3040
        %v3161 = vadd.f32 %v3160, %v3044
        %v3162 = vadd.f32 %v3161, %v3048
        %v3163 = vadd.f32 %v3162, %v3052
        %v3164 = vadd.f32 %v3163, %v3056
        %v3165 = vadd.f32 %v3164, %v3060
        %v3166 = vadd.f32 %v3165, %v3064
        %v3167 = vadd.f32 %v3166, %v3068
        %v3168 = vadd.f32 %v3167, %v3072
        %v3169 = vadd.f32 %v3168, %v3076
        %v3170 = vadd.f32 %v3169, %v3080
        %v3171 = vadd.f32 %v3170, %v3084
        %v3172 = vadd.f32 %v3171, %v3088
        %v3173 = vadd.f32 %v3172, %v3092
        %v3174 = vadd.f32 %v3173, %v3096
        %v3175 = vrot.slane %v3174, 4
        %v3176 = vadd.f32 %v3174, %v3175
        %v3177 = vrot.slane %v3176, 2
        %v3178 = vadd.f32 %v3176, %v3177
        %v3179 = vrot.slane %v3178, 1
        %v3180 = vadd.f32 %v3178, %v3179
        %v3181 = vmul.f32 %v3033, %v3033
        %v3182 = vmul.f32 %v3034, %v3034
        %v3183 = vmul.f32 %v3035, %v3035
        %v3184 = vmul.f32 %v3036, %v3036
        %v3185 = vmul.f32 %v3037, %v3037
        %v3186 = vmul.f32 %v3038, %v3038
        %v3187 = vmul.f32 %v3039, %v3039
        %v3188 = vmul.f32 %v3040, %v3040
        %v3189 = vmul.f32 %v3041, %v3041
        %v3190 = vmul.f32 %v3042, %v3042
        %v3191 = vmul.f32 %v3043, %v3043
        %v3192 = vmul.f32 %v3044, %v3044
        %v3193 = vmul.f32 %v3045, %v3045
        %v3194 = vmul.f32 %v3046, %v3046
        %v3195 = vmul.f32 %v3047, %v3047
        %v3196 = vmul.f32 %v3048, %v3048
        %v3197 = vmul.f32 %v3049, %v3049
        %v3198 = vmul.f32 %v3050, %v3050
        %v3199 = vmul.f32 %v3051, %v3051
        %v3200 = vmul.f32 %v3052, %v3052
        %v3201 = vmul.f32 %v3053, %v3053
        %v3202 = vmul.f32 %v3054, %v3054
        %v3203 = vmul.f32 %v3055, %v3055
        %v3204 = vmul.f32 %v3056, %v3056
        %v3205 = vmul.f32 %v3057, %v3057
        %v3206 = vmul.f32 %v3058, %v3058
        %v3207 = vmul.f32 %v3059, %v3059
        %v3208 = vmul.f32 %v3060, %v3060
        %v3209 = vmul.f32 %v3061, %v3061
        %v3210 = vmul.f32 %v3062, %v3062
        %v3211 = vmul.f32 %v3063, %v3063
        %v3212 = vmul.f32 %v3064, %v3064
        %v3213 = vmul.f32 %v3065, %v3065
        %v3214 = vmul.f32 %v3066, %v3066
        %v3215 = vmul.f32 %v3067, %v3067
        %v3216 = vmul.f32 %v3068, %v3068
        %v3217 = vmul.f32 %v3069, %v3069
        %v3218 = vmul.f32 %v3070, %v3070
        %v3219 = vmul.f32 %v3071, %v3071
        %v3220 = vmul.f32 %v3072, %v3072
        %v3221 = vmul.f32 %v3073, %v3073
        %v3222 = vmul.f32 %v3074, %v3074
        %v3223 = vmul.f32 %v3075, %v3075
        %v3224 = vmul.f32 %v3076, %v3076
        %v3225 = vmul.f32 %v3077, %v3077
        %v3226 = vmul.f32 %v3078, %v3078
        %v3227 = vmul.f32 %v3079, %v3079
        %v3228 = vmul.f32 %v3080, %v3080
        %v3229 = vmul.f32 %v3081, %v3081
        %v3230 = vmul.f32 %v3082, %v3082
        %v3231 = vmul.f32 %v3083, %v3083
        %v3232 = vmul.f32 %v3084, %v3084
        %v3233 = vmul.f32 %v3085, %v3085
        %v3234 = vmul.f32 %v3086, %v3086
        %v3235 = vmul.f32 %v3087, %v3087
        %v3236 = vmul.f32 %v3088, %v3088
        %v3237 = vmul.f32 %v3089, %v3089
        %v3238 = vmul.f32 %v3090, %v3090
        %v3239 = vmul.f32 %v3091, %v3091
        %v3240 = vmul.f32 %v3092, %v3092
        %v3241 = vmul.f32 %v3093, %v3093
        %v3242 = vmul.f32 %v3094, %v3094
        %v3243 = vmul.f32 %v3095, %v3095
        %v3244 = vmul.f32 %v3096, %v3096
        %v3245 = vadd.f32 %v3181, %v3185
        %v3246 = vadd.f32 %v3245, %v3189
        %v3247 = vadd.f32 %v3246, %v3193
        %v3248 = vadd.f32 %v3247, %v3197
        %v3249 = vadd.f32 %v3248, %v3201
        %v3250 = vadd.f32 %v3249, %v3205
        %v3251 = vadd.f32 %v3250, %v3209
        %v3252 = vadd.f32 %v3251, %v3213
        %v3253 = vadd.f32 %v3252, %v3217
        %v3254 = vadd.f32 %v3253, %v3221
        %v3255 = vadd.f32 %v3254, %v3225
        %v3256 = vadd.f32 %v3255, %v3229
        %v3257 = vadd.f32 %v3256, %v3233
        %v3258 = vadd.f32 %v3257, %v3237
        %v3259 = vadd.f32 %v3258, %v3241
        %v3260 = vrot.slane %v3259, 4
        %v3261 = vadd.f32 %v3259, %v3260
        %v3262 = vrot.slane %v3261, 2
        %v3263 = vadd.f32 %v3261, %v3262
        %v3264 = vrot.slane %v3263, 1
        %v3265 = vadd.f32 %v3263, %v3264
        %v3266 = vadd.f32 %v3182, %v3186
        %v3267 = vadd.f32 %v3266, %v3190
        %v3268 = vadd.f32 %v3267, %v3194
        %v3269 = vadd.f32 %v3268, %v3198
        %v3270 = vadd.f32 %v3269, %v3202
        %v3271 = vadd.f32 %v3270, %v3206
        %v3272 = vadd.f32 %v3271, %v3210
        %v3273 = vadd.f32 %v3272, %v3214
        %v3274 = vadd.f32 %v3273, %v3218
        %v3275 = vadd.f32 %v3274, %v3222
        %v3276 = vadd.f32 %v3275, %v3226
        %v3277 = vadd.f32 %v3276, %v3230
        %v3278 = vadd.f32 %v3277, %v3234
        %v3279 = vadd.f32 %v3278, %v3238
        %v3280 = vadd.f32 %v3279, %v3242
        %v3281 = vrot.slane %v3280, 4
        %v3282 = vadd.f32 %v3280, %v3281
        %v3283 = vrot.slane %v3282, 2
        %v3284 = vadd.f32 %v3282, %v3283
        %v3285 = vrot.slane %v3284, 1
        %v3286 = vadd.f32 %v3284, %v3285
        %v3287 = vadd.f32 %v3183, %v3187
        %v3288 = vadd.f32 %v3287, %v3191
        %v3289 = vadd.f32 %v3288, %v3195
        %v3290 = vadd.f32 %v3289, %v3199
        %v3291 = vadd.f32 %v3290, %v3203
        %v3292 = vadd.f32 %v3291, %v3207
        %v3293 = vadd.f32 %v3292, %v3211
        %v3294 = vadd.f32 %v3293, %v3215
        %v3295 = vadd.f32 %v3294, %v3219
        %v3296 = vadd.f32 %v3295, %v3223
        %v3297 = vadd.f32 %v3296, %v3227
        %v3298 = vadd.f32 %v3297, %v3231
        %v3299 = vadd.f32 %v3298, %v3235
        %v3300 = vadd.f32 %v3299, %v3239
        %v3301 = vadd.f32 %v3300, %v3243
        %v3302 = vrot.slane %v3301, 4
        %v3303 = vadd.f32 %v3301, %v3302
        %v3304 = vrot.slane %v3303, 2
        %v3305 = vadd.f32 %v3303, %v3304
        %v3306 = vrot.slane %v3305, 1
        %v3307 = vadd.f32 %v3305, %v3306
        %v3308 = vadd.f32 %v3184, %v3188
        %v3309 = vadd.f32 %v3308, %v3192
        %v3310 = vadd.f32 %v3309, %v3196
        %v3311 = vadd.f32 %v3310, %v3200
        %v3312 = vadd.f32 %v3311, %v3204
        %v3313 = vadd.f32 %v3312, %v3208
        %v3314 = vadd.f32 %v3313, %v3212
        %v3315 = vadd.f32 %v3314, %v3216
        %v3316 = vadd.f32 %v3315, %v3220
        %v3317 = vadd.f32 %v3316, %v3224
        %v3318 = vadd.f32 %v3317, %v3228
        %v3319 = vadd.f32 %v3318, %v3232
        %v3320 = vadd.f32 %v3319, %v3236
        %v3321 = vadd.f32 %v3320, %v3240
        %v3322 = vadd.f32 %v3321, %v3244
        %v3323 = vrot.slane %v3322, 4
        %v3324 = vadd.f32 %v3322, %v3323
        %v3325 = vrot.slane %v3324, 2
        %v3326 = vadd.f32 %v3324, %v3325
        %v3327 = vrot.slane %v3326, 1
        %v3328 = vadd.f32 %v3326, %v3327
        %v3329 = vsel %vm1142, %v3117, 0.0
        %3330 = vadd.xlane.f32.xlu0 %v3329
        %v3331 = vpop.xlane.xlu0 %3330
        %v3332 = vrot.slane %v3331, 4
        %v3333 = vadd.f32 %v3331, %v3332
        %v3334 = vrot.slane %v3333, 2
        %v3335 = vadd.f32 %v3333, %v3334
        %v3336 = vrot.slane %v3335, 1
        %v3337 = vadd.f32 %v3335, %v3336
        %s3338 = vtos %v3337
        %v3339 = vsel %vm1142, %v3265, 0.0
        %3340 = vadd.xlane.f32.xlu0 %v3339
        %v3341 = vpop.xlane.xlu0 %3340
        %v3342 = vrot.slane %v3341, 4
        %v3343 = vadd.f32 %v3341, %v3342
        %v3344 = vrot.slane %v3343, 2
        %v3345 = vadd.f32 %v3343, %v3344
        %v3346 = vrot.slane %v3345, 1
        %v3347 = vadd.f32 %v3345, %v3346
        %s3348 = vtos %v3347
        %s3349 = smul.f32 %s3338, 6.1035156e-05
        %s3350 = smul.f32 %s3348, 6.1035156e-05
        %s3351 = smul.f32 %s3349, %s3349
        %s3352 = ssub.f32 %s3350, %s3351
        %v3353 = vstv %s3349
        %s3354 = sadd.f32 %s3352, 1e-05
        %v3355 = vstv %s3354
        %v3356 = vrsqrt.pop %v3355
        %s3357 = vtos %v3356
        %v3358 = vstv %s3357
        %v3359 = vsel %vm1142, %v3138, 0.0
        %3360 = vadd.xlane.f32.xlu0 %v3359
        %v3361 = vpop.xlane.xlu0 %3360
        %v3362 = vrot.slane %v3361, 4
        %v3363 = vadd.f32 %v3361, %v3362
        %v3364 = vrot.slane %v3363, 2
        %v3365 = vadd.f32 %v3363, %v3364
        %v3366 = vrot.slane %v3365, 1
        %v3367 = vadd.f32 %v3365, %v3366
        %s3368 = vtos %v3367
        %v3369 = vsel %vm1142, %v3286, 0.0
        %3370 = vadd.xlane.f32.xlu0 %v3369
        %v3371 = vpop.xlane.xlu0 %3370
        %v3372 = vrot.slane %v3371, 4
        %v3373 = vadd.f32 %v3371, %v3372
        %v3374 = vrot.slane %v3373, 2
        %v3375 = vadd.f32 %v3373, %v3374
        %v3376 = vrot.slane %v3375, 1
        %v3377 = vadd.f32 %v3375, %v3376
        %s3378 = vtos %v3377
        %s3379 = smul.f32 %s3368, 6.1035156e-05
        %s3380 = smul.f32 %s3378, 6.1035156e-05
        %s3381 = smul.f32 %s3379, %s3379
        %s3382 = ssub.f32 %s3380, %s3381
        %v3383 = vstv %s3379
        %s3384 = sadd.f32 %s3382, 1e-05
        %v3385 = vstv %s3384
        %v3386 = vrsqrt.pop %v3385
        %s3387 = vtos %v3386
        %v3388 = vstv %s3387
        %v3389 = vsel %vm1142, %v3159, 0.0
        %3390 = vadd.xlane.f32.xlu0 %v3389
        %v3391 = vpop.xlane.xlu0 %3390
        %v3392 = vrot.slane %v3391, 4
        %v3393 = vadd.f32 %v3391, %v3392
        %v3394 = vrot.slane %v3393, 2
        %v3395 = vadd.f32 %v3393, %v3394
        %v3396 = vrot.slane %v3395, 1
        %v3397 = vadd.f32 %v3395, %v3396
        %s3398 = vtos %v3397
        %v3399 = vsel %vm1142, %v3307, 0.0
        %3400 = vadd.xlane.f32.xlu0 %v3399
        %v3401 = vpop.xlane.xlu0 %3400
        %v3402 = vrot.slane %v3401, 4
        %v3403 = vadd.f32 %v3401, %v3402
        %v3404 = vrot.slane %v3403, 2
        %v3405 = vadd.f32 %v3403, %v3404
        %v3406 = vrot.slane %v3405, 1
        %v3407 = vadd.f32 %v3405, %v3406
        %s3408 = vtos %v3407
        %s3409 = smul.f32 %s3398, 6.1035156e-05
        %s3410 = smul.f32 %s3408, 6.1035156e-05
        %s3411 = smul.f32 %s3409, %s3409
        %s3412 = ssub.f32 %s3410, %s3411
        %v3413 = vstv %s3409
        %s3414 = sadd.f32 %s3412, 1e-05
        %v3415 = vstv %s3414
        %v3416 = vrsqrt.pop %v3415
        %s3417 = vtos %v3416
        %v3418 = vstv %s3417
        %v3419 = vsel %vm1142, %v3180, 0.0
        %3420 = vadd.xlane.f32.xlu0 %v3419
        %v3421 = vpop.xlane.xlu0 %3420
        %v3422 = vrot.slane %v3421, 4
        %v3423 = vadd.f32 %v3421, %v3422
        %v3424 = vrot.slane %v3423, 2
        %v3425 = vadd.f32 %v3423, %v3424
        %v3426 = vrot.slane %v3425, 1
        %v3427 = vadd.f32 %v3425, %v3426
        %s3428 = vtos %v3427
        %v3429 = vsel %vm1142, %v3328, 0.0
        %3430 = vadd.xlane.f32.xlu0 %v3429
        %v3431 = vpop.xlane.xlu0 %3430
        %v3432 = vrot.slane %v3431, 4
        %v3433 = vadd.f32 %v3431, %v3432
        %v3434 = vrot.slane %v3433, 2
        %v3435 = vadd.f32 %v3433, %v3434
        %v3436 = vrot.slane %v3435, 1
        %v3437 = vadd.f32 %v3435, %v3436
        %s3438 = vtos %v3437
        %s3439 = smul.f32 %s3428, 6.1035156e-05
        %s3440 = smul.f32 %s3438, 6.1035156e-05
        %s3441 = smul.f32 %s3439, %s3439
        %s3442 = ssub.f32 %s3440, %s3441
        %v3443 = vstv %s3439
        %s3444 = sadd.f32 %s3442, 1e-05
        %v3445 = vstv %s3444
        %v3446 = vrsqrt.pop %v3445
        %s3447 = vtos %v3446
        %v3448 = vstv %s3447
        %v3449 = vlaneseq
        %v3450 = vshrl.u32 %v3449, 7
        %v3451 = vsub.s32 0, %v3450
        %v3452 = vlaneseq
        %v3453 = vshrl.u32 %v3452, 7
        %v3454 = vsub.s32 0, %v3453
        %v3455 = vlaneseq
        %v3456 = vshrl.u32 %v3455, 7
        %v3457 = vsub.s32 0, %v3456
        %v3458 = vlaneseq
        %v3459 = vshrl.u32 %v3458, 7
        %v3460 = vsub.s32 0, %v3459
        %v3461 = vsub.f32 %v3033, %v3353
        %v3462 = vsub.f32 %v3034, %v3383
        %v3463 = vsub.f32 %v3035, %v3413
        %v3464 = vsub.f32 %v3036, %v3443
        %v3465 = vsub.f32 %v3037, %v3353
        %v3466 = vsub.f32 %v3038, %v3383
        %v3467 = vsub.f32 %v3039, %v3413
        %v3468 = vsub.f32 %v3040, %v3443
        %v3469 = vsub.f32 %v3041, %v3353
        %v3470 = vsub.f32 %v3042, %v3383
        %v3471 = vsub.f32 %v3043, %v3413
        %v3472 = vsub.f32 %v3044, %v3443
        %v3473 = vsub.f32 %v3045, %v3353
        %v3474 = vsub.f32 %v3046, %v3383
        %v3475 = vsub.f32 %v3047, %v3413
        %v3476 = vsub.f32 %v3048, %v3443
        %v3477 = vsub.f32 %v3049, %v3353
        %v3478 = vsub.f32 %v3050, %v3383
        %v3479 = vsub.f32 %v3051, %v3413
        %v3480 = vsub.f32 %v3052, %v3443
        %v3481 = vsub.f32 %v3053, %v3353
        %v3482 = vsub.f32 %v3054, %v3383
        %v3483 = vsub.f32 %v3055, %v3413
        %v3484 = vsub.f32 %v3056, %v3443
        %v3485 = vsub.f32 %v3057, %v3353
        %v3486 = vsub.f32 %v3058, %v3383
        %v3487 = vsub.f32 %v3059, %v3413
        %v3488 = vsub.f32 %v3060, %v3443
        %v3489 = vsub.f32 %v3061, %v3353
        %v3490 = vsub.f32 %v3062, %v3383
        %v3491 = vsub.f32 %v3063, %v3413
        %v3492 = vsub.f32 %v3064, %v3443
        %v3493 = vsub.f32 %v3065, %v3353
        %v3494 = vsub.f32 %v3066, %v3383
        %v3495 = vsub.f32 %v3067, %v3413
        %v3496 = vsub.f32 %v3068, %v3443
        %v3497 = vsub.f32 %v3069, %v3353
        %v3498 = vsub.f32 %v3070, %v3383
        %v3499 = vsub.f32 %v3071, %v3413
        %v3500 = vsub.f32 %v3072, %v3443
        %v3501 = vsub.f32 %v3073, %v3353
        %v3502 = vsub.f32 %v3074, %v3383
        %v3503 = vsub.f32 %v3075, %v3413
        %v3504 = vsub.f32 %v3076, %v3443
        %v3505 = vsub.f32 %v3077, %v3353
        %v3506 = vsub.f32 %v3078, %v3383
        %v3507 = vsub.f32 %v3079, %v3413
        %v3508 = vsub.f32 %v3080, %v3443
        %v3509 = vsub.f32 %v3081, %v3353
        %v3510 = vsub.f32 %v3082, %v3383
        %v3511 = vsub.f32 %v3083, %v3413
        %v3512 = vsub.f32 %v3084, %v3443
        %v3513 = vsub.f32 %v3085, %v3353
        %v3514 = vsub.f32 %v3086, %v3383
        %v3515 = vsub.f32 %v3087, %v3413
        %v3516 = vsub.f32 %v3088, %v3443
        %v3517 = vsub.f32 %v3089, %v3353
        %v3518 = vsub.f32 %v3090, %v3383
        %v3519 = vsub.f32 %v3091, %v3413
        %v3520 = vsub.f32 %v3092, %v3443
        %v3521 = vsub.f32 %v3093, %v3353
        %v3522 = vsub.f32 %v3094, %v3383
        %v3523 = vsub.f32 %v3095, %v3413
        %v3524 = vsub.f32 %v3096, %v3443
        %3525 = vset.pattern.permute.xlu0 4
        %3526 = vperm.xlu0 %3525, %v263
        %v3527 = vpop.permute.xlu0 %3526
        %3529 = vset.pattern.permute.xlu0 4
        %3530 = vperm.xlu0 %3529, %v264
        %v3531 = vpop.permute.xlu0 %3530
        %3533 = vset.pattern.permute.xlu0 4
        %3534 = vperm.xlu0 %3533, %v265
        %v3535 = vpop.permute.xlu0 %3534
        %3537 = vset.pattern.permute.xlu0 4
        %3538 = vperm.xlu0 %3537, %v266
        %v3539 = vpop.permute.xlu0 %3538
        %3541 = vset.pattern.permute.xlu0 4
        %3542 = vperm.xlu0 %3541, %v267
        %v3543 = vpop.permute.xlu0 %3542
        %3545 = vset.pattern.permute.xlu0 4
        %3546 = vperm.xlu0 %3545, %v268
        %v3547 = vpop.permute.xlu0 %3546
        %3549 = vset.pattern.permute.xlu0 4
        %3550 = vperm.xlu0 %3549, %v269
        %v3551 = vpop.permute.xlu0 %3550
        %3553 = vset.pattern.permute.xlu0 4
        %3554 = vperm.xlu0 %3553, %v270
        %v3555 = vpop.permute.xlu0 %3554
        %3557 = vset.pattern.permute.xlu0 4
        %3558 = vperm.xlu0 %3557, %v271
        %v3559 = vpop.permute.xlu0 %3558
        %3561 = vset.pattern.permute.xlu0 4
        %3562 = vperm.xlu0 %3561, %v272
        %v3563 = vpop.permute.xlu0 %3562
        %3565 = vset.pattern.permute.xlu0 4
        %3566 = vperm.xlu0 %3565, %v273
        %v3567 = vpop.permute.xlu0 %3566
        %3569 = vset.pattern.permute.xlu0 4
        %3570 = vperm.xlu0 %3569, %v274
        %v3571 = vpop.permute.xlu0 %3570
        %3573 = vset.pattern.permute.xlu0 4
        %3574 = vperm.xlu0 %3573, %v275
        %v3575 = vpop.permute.xlu0 %3574
        %3577 = vset.pattern.permute.xlu0 4
        %3578 = vperm.xlu0 %3577, %v276
        %v3579 = vpop.permute.xlu0 %3578
        %3581 = vset.pattern.permute.xlu0 4
        %3582 = vperm.xlu0 %3581, %v277
        %v3583 = vpop.permute.xlu0 %3582
        %3585 = vset.pattern.permute.xlu0 4
        %3586 = vperm.xlu0 %3585, %v278
        %v3587 = vpop.permute.xlu0 %3586
        %v3589 = vmul.f32 %v3527, %v3461
        %v3590 = vmul.f32 %v3527, %v3462
        %v3591 = vmul.f32 %v3527, %v3463
        %v3592 = vmul.f32 %v3527, %v3464
        %v3593 = vmul.f32 %v3531, %v3465
        %v3594 = vmul.f32 %v3531, %v3466
        %v3595 = vmul.f32 %v3531, %v3467
        %v3596 = vmul.f32 %v3531, %v3468
        %v3597 = vmul.f32 %v3535, %v3469
        %v3598 = vmul.f32 %v3535, %v3470
        %v3599 = vmul.f32 %v3535, %v3471
        %v3600 = vmul.f32 %v3535, %v3472
        %v3601 = vmul.f32 %v3539, %v3473
        %v3602 = vmul.f32 %v3539, %v3474
        %v3603 = vmul.f32 %v3539, %v3475
        %v3604 = vmul.f32 %v3539, %v3476
        %v3605 = vmul.f32 %v3543, %v3477
        %v3606 = vmul.f32 %v3543, %v3478
        %v3607 = vmul.f32 %v3543, %v3479
        %v3608 = vmul.f32 %v3543, %v3480
        %v3609 = vmul.f32 %v3547, %v3481
        %v3610 = vmul.f32 %v3547, %v3482
        %v3611 = vmul.f32 %v3547, %v3483
        %v3612 = vmul.f32 %v3547, %v3484
        %v3613 = vmul.f32 %v3551, %v3485
        %v3614 = vmul.f32 %v3551, %v3486
        %v3615 = vmul.f32 %v3551, %v3487
        %v3616 = vmul.f32 %v3551, %v3488
        %v3617 = vmul.f32 %v3555, %v3489
        %v3618 = vmul.f32 %v3555, %v3490
        %v3619 = vmul.f32 %v3555, %v3491
        %v3620 = vmul.f32 %v3555, %v3492
        %v3621 = vmul.f32 %v3559, %v3493
        %v3622 = vmul.f32 %v3559, %v3494
        %v3623 = vmul.f32 %v3559, %v3495
        %v3624 = vmul.f32 %v3559, %v3496
        %v3625 = vmul.f32 %v3563, %v3497
        %v3626 = vmul.f32 %v3563, %v3498
        %v3627 = vmul.f32 %v3563, %v3499
        %v3628 = vmul.f32 %v3563, %v3500
        %v3629 = vmul.f32 %v3567, %v3501
        %v3630 = vmul.f32 %v3567, %v3502
        %v3631 = vmul.f32 %v3567, %v3503
        %v3632 = vmul.f32 %v3567, %v3504
        %v3633 = vmul.f32 %v3571, %v3505
        %v3634 = vmul.f32 %v3571, %v3506
        %v3635 = vmul.f32 %v3571, %v3507
        %v3636 = vmul.f32 %v3571, %v3508
        %v3637 = vmul.f32 %v3575, %v3509
        %v3638 = vmul.f32 %v3575, %v3510
        %v3639 = vmul.f32 %v3575, %v3511
        %v3640 = vmul.f32 %v3575, %v3512
        %v3641 = vmul.f32 %v3579, %v3513
        %v3642 = vmul.f32 %v3579, %v3514
        %v3643 = vmul.f32 %v3579, %v3515
        %v3644 = vmul.f32 %v3579, %v3516
        %v3645 = vmul.f32 %v3583, %v3517
        %v3646 = vmul.f32 %v3583, %v3518
        %v3647 = vmul.f32 %v3583, %v3519
        %v3648 = vmul.f32 %v3583, %v3520
        %v3649 = vmul.f32 %v3587, %v3521
        %v3650 = vmul.f32 %v3587, %v3522
        %v3651 = vmul.f32 %v3587, %v3523
        %v3652 = vmul.f32 %v3587, %v3524
        %v3653 = vlaneseq
        %v3654 = vshrl.u32 %v3653, 7
        %v3655 = vsub.s32 0, %v3654
        %v3656 = vlaneseq
        %v3657 = vshrl.u32 %v3656, 7
        %v3658 = vsub.s32 0, %v3657
        %v3659 = vlaneseq
        %v3660 = vshrl.u32 %v3659, 7
        %v3661 = vsub.s32 0, %v3660
        %v3662 = vlaneseq
        %v3663 = vshrl.u32 %v3662, 7
        %v3664 = vsub.s32 0, %v3663
        %v3665 = vmul.f32 %v3589, %v3358
        %v3666 = vmul.f32 %v3590, %v3388
        %v3667 = vmul.f32 %v3591, %v3418
        %v3668 = vmul.f32 %v3592, %v3448
        %v3669 = vmul.f32 %v3593, %v3358
        %v3670 = vmul.f32 %v3594, %v3388
        %v3671 = vmul.f32 %v3595, %v3418
        %v3672 = vmul.f32 %v3596, %v3448
        %v3673 = vmul.f32 %v3597, %v3358
        %v3674 = vmul.f32 %v3598, %v3388
        %v3675 = vmul.f32 %v3599, %v3418
        %v3676 = vmul.f32 %v3600, %v3448
        %v3677 = vmul.f32 %v3601, %v3358
        %v3678 = vmul.f32 %v3602, %v3388
        %v3679 = vmul.f32 %v3603, %v3418
        %v3680 = vmul.f32 %v3604, %v3448
        %v3681 = vmul.f32 %v3605, %v3358
        %v3682 = vmul.f32 %v3606, %v3388
        %v3683 = vmul.f32 %v3607, %v3418
        %v3684 = vmul.f32 %v3608, %v3448
        %v3685 = vmul.f32 %v3609, %v3358
        %v3686 = vmul.f32 %v3610, %v3388
        %v3687 = vmul.f32 %v3611, %v3418
        %v3688 = vmul.f32 %v3612, %v3448
        %v3689 = vmul.f32 %v3613, %v3358
        %v3690 = vmul.f32 %v3614, %v3388
        %v3691 = vmul.f32 %v3615, %v3418
        %v3692 = vmul.f32 %v3616, %v3448
        %v3693 = vmul.f32 %v3617, %v3358
        %v3694 = vmul.f32 %v3618, %v3388
        %v3695 = vmul.f32 %v3619, %v3418
        %v3696 = vmul.f32 %v3620, %v3448
        %v3697 = vmul.f32 %v3621, %v3358
        %v3698 = vmul.f32 %v3622, %v3388
        %v3699 = vmul.f32 %v3623, %v3418
        %v3700 = vmul.f32 %v3624, %v3448
        %v3701 = vmul.f32 %v3625, %v3358
        %v3702 = vmul.f32 %v3626, %v3388
        %v3703 = vmul.f32 %v3627, %v3418
        %v3704 = vmul.f32 %v3628, %v3448
        %v3705 = vmul.f32 %v3629, %v3358
        %v3706 = vmul.f32 %v3630, %v3388
        %v3707 = vmul.f32 %v3631, %v3418
        %v3708 = vmul.f32 %v3632, %v3448
        %v3709 = vmul.f32 %v3633, %v3358
        %v3710 = vmul.f32 %v3634, %v3388
        %v3711 = vmul.f32 %v3635, %v3418
        %v3712 = vmul.f32 %v3636, %v3448
        %v3713 = vmul.f32 %v3637, %v3358
        %v3714 = vmul.f32 %v3638, %v3388
        %v3715 = vmul.f32 %v3639, %v3418
        %v3716 = vmul.f32 %v3640, %v3448
        %v3717 = vmul.f32 %v3641, %v3358
        %v3718 = vmul.f32 %v3642, %v3388
        %v3719 = vmul.f32 %v3643, %v3418
        %v3720 = vmul.f32 %v3644, %v3448
        %v3721 = vmul.f32 %v3645, %v3358
        %v3722 = vmul.f32 %v3646, %v3388
        %v3723 = vmul.f32 %v3647, %v3418
        %v3724 = vmul.f32 %v3648, %v3448
        %v3725 = vmul.f32 %v3649, %v3358
        %v3726 = vmul.f32 %v3650, %v3388
        %v3727 = vmul.f32 %v3651, %v3418
        %v3728 = vmul.f32 %v3652, %v3448
        %3729 = vset.pattern.permute.xlu0 5
        %3730 = vperm.xlu0 %3729, %v263
        %v3731 = vpop.permute.xlu0 %3730
        %3733 = vset.pattern.permute.xlu0 5
        %3734 = vperm.xlu0 %3733, %v264
        %v3735 = vpop.permute.xlu0 %3734
        %3737 = vset.pattern.permute.xlu0 5
        %3738 = vperm.xlu0 %3737, %v265
        %v3739 = vpop.permute.xlu0 %3738
        %3741 = vset.pattern.permute.xlu0 5
        %3742 = vperm.xlu0 %3741, %v266
        %v3743 = vpop.permute.xlu0 %3742
        %3745 = vset.pattern.permute.xlu0 5
        %3746 = vperm.xlu0 %3745, %v267
        %v3747 = vpop.permute.xlu0 %3746
        %3749 = vset.pattern.permute.xlu0 5
        %3750 = vperm.xlu0 %3749, %v268
        %v3751 = vpop.permute.xlu0 %3750
        %3753 = vset.pattern.permute.xlu0 5
        %3754 = vperm.xlu0 %3753, %v269
        %v3755 = vpop.permute.xlu0 %3754
        %3757 = vset.pattern.permute.xlu0 5
        %3758 = vperm.xlu0 %3757, %v270
        %v3759 = vpop.permute.xlu0 %3758
        %3761 = vset.pattern.permute.xlu0 5
        %3762 = vperm.xlu0 %3761, %v271
        %v3763 = vpop.permute.xlu0 %3762
        %3765 = vset.pattern.permute.xlu0 5
        %3766 = vperm.xlu0 %3765, %v272
        %v3767 = vpop.permute.xlu0 %3766
        %3769 = vset.pattern.permute.xlu0 5
        %3770 = vperm.xlu0 %3769, %v273
        %v3771 = vpop.permute.xlu0 %3770
        %3773 = vset.pattern.permute.xlu0 5
        %3774 = vperm.xlu0 %3773, %v274
        %v3775 = vpop.permute.xlu0 %3774
        %3777 = vset.pattern.permute.xlu0 5
        %3778 = vperm.xlu0 %3777, %v275
        %v3779 = vpop.permute.xlu0 %3778
        %3781 = vset.pattern.permute.xlu0 5
        %3782 = vperm.xlu0 %3781, %v276
        %v3783 = vpop.permute.xlu0 %3782
        %3785 = vset.pattern.permute.xlu0 5
        %3786 = vperm.xlu0 %3785, %v277
        %v3787 = vpop.permute.xlu0 %3786
        %3789 = vset.pattern.permute.xlu0 5
        %3790 = vperm.xlu0 %3789, %v278
        %v3791 = vpop.permute.xlu0 %3790
        %v3793 = vadd.f32 %v3665, %v3731
        %v3794 = vadd.f32 %v3666, %v3731
        %v3795 = vadd.f32 %v3667, %v3731
        %v3796 = vadd.f32 %v3668, %v3731
        %v3797 = vadd.f32 %v3669, %v3735
        %v3798 = vadd.f32 %v3670, %v3735
        %v3799 = vadd.f32 %v3671, %v3735
        %v3800 = vadd.f32 %v3672, %v3735
        %v3801 = vadd.f32 %v3673, %v3739
        %v3802 = vadd.f32 %v3674, %v3739
        %v3803 = vadd.f32 %v3675, %v3739
        %v3804 = vadd.f32 %v3676, %v3739
        %v3805 = vadd.f32 %v3677, %v3743
        %v3806 = vadd.f32 %v3678, %v3743
        %v3807 = vadd.f32 %v3679, %v3743
        %v3808 = vadd.f32 %v3680, %v3743
        %v3809 = vadd.f32 %v3681, %v3747
        %v3810 = vadd.f32 %v3682, %v3747
        %v3811 = vadd.f32 %v3683, %v3747
        %v3812 = vadd.f32 %v3684, %v3747
        %v3813 = vadd.f32 %v3685, %v3751
        %v3814 = vadd.f32 %v3686, %v3751
        %v3815 = vadd.f32 %v3687, %v3751
        %v3816 = vadd.f32 %v3688, %v3751
        %v3817 = vadd.f32 %v3689, %v3755
        %v3818 = vadd.f32 %v3690, %v3755
        %v3819 = vadd.f32 %v3691, %v3755
        %v3820 = vadd.f32 %v3692, %v3755
        %v3821 = vadd.f32 %v3693, %v3759
        %v3822 = vadd.f32 %v3694, %v3759
        %v3823 = vadd.f32 %v3695, %v3759
        %v3824 = vadd.f32 %v3696, %v3759
        %v3825 = vadd.f32 %v3697, %v3763
        %v3826 = vadd.f32 %v3698, %v3763
        %v3827 = vadd.f32 %v3699, %v3763
        %v3828 = vadd.f32 %v3700, %v3763
        %v3829 = vadd.f32 %v3701, %v3767
        %v3830 = vadd.f32 %v3702, %v3767
        %v3831 = vadd.f32 %v3703, %v3767
        %v3832 = vadd.f32 %v3704, %v3767
        %v3833 = vadd.f32 %v3705, %v3771
        %v3834 = vadd.f32 %v3706, %v3771
        %v3835 = vadd.f32 %v3707, %v3771
        %v3836 = vadd.f32 %v3708, %v3771
        %v3837 = vadd.f32 %v3709, %v3775
        %v3838 = vadd.f32 %v3710, %v3775
        %v3839 = vadd.f32 %v3711, %v3775
        %v3840 = vadd.f32 %v3712, %v3775
        %v3841 = vadd.f32 %v3713, %v3779
        %v3842 = vadd.f32 %v3714, %v3779
        %v3843 = vadd.f32 %v3715, %v3779
        %v3844 = vadd.f32 %v3716, %v3779
        %v3845 = vadd.f32 %v3717, %v3783
        %v3846 = vadd.f32 %v3718, %v3783
        %v3847 = vadd.f32 %v3719, %v3783
        %v3848 = vadd.f32 %v3720, %v3783
        %v3849 = vadd.f32 %v3721, %v3787
        %v3850 = vadd.f32 %v3722, %v3787
        %v3851 = vadd.f32 %v3723, %v3787
        %v3852 = vadd.f32 %v3724, %v3787
        %v3853 = vadd.f32 %v3725, %v3791
        %v3854 = vadd.f32 %v3726, %v3791
        %v3855 = vadd.f32 %v3727, %v3791
        %v3856 = vadd.f32 %v3728, %v3791
        %v3857 = vld [vmem:[%s2] sm:$0xf]
        %v3858 = vld [vmem:[%s2 + $0x4] sm:$0xf]
        %v3859 = vld [vmem:[%s2 + $0x8] sm:$0xf]
        %v3860 = vld [vmem:[%s2 + $0xc] sm:$0xf]
        %v3861 = vld [vmem:[%s2 + $0x10] sm:$0xf]
        %v3862 = vld [vmem:[%s2 + $0x14] sm:$0xf]
        %v3863 = vld [vmem:[%s2 + $0x18] sm:$0xf]
        %v3864 = vld [vmem:[%s2 + $0x1c] sm:$0xf]
        %v3865 = vpack.c.bf16 %v3797, %v3793
        %v3866 = vpack.c.bf16 %v3798, %v3794
        %v3867 = vpack.c.bf16 %v3799, %v3795
        %v3868 = vpack.c.bf16 %v3800, %v3796
        %v3869 = vpack.c.bf16 %v3805, %v3801
        %v3870 = vpack.c.bf16 %v3806, %v3802
        %v3871 = vpack.c.bf16 %v3807, %v3803
        %v3872 = vpack.c.bf16 %v3808, %v3804
        %v3873 = vpack.c.bf16 %v3813, %v3809
        %v3874 = vpack.c.bf16 %v3814, %v3810
        %v3875 = vpack.c.bf16 %v3815, %v3811
        %v3876 = vpack.c.bf16 %v3816, %v3812
        %v3877 = vpack.c.bf16 %v3821, %v3817
        %v3878 = vpack.c.bf16 %v3822, %v3818
        %v3879 = vpack.c.bf16 %v3823, %v3819
        %v3880 = vpack.c.bf16 %v3824, %v3820
        %v3881 = vpack.c.bf16 %v3829, %v3825
        %v3882 = vpack.c.bf16 %v3830, %v3826
        %v3883 = vpack.c.bf16 %v3831, %v3827
        %v3884 = vpack.c.bf16 %v3832, %v3828
        %v3885 = vpack.c.bf16 %v3837, %v3833
        %v3886 = vpack.c.bf16 %v3838, %v3834
        %v3887 = vpack.c.bf16 %v3839, %v3835
        %v3888 = vpack.c.bf16 %v3840, %v3836
        %v3889 = vpack.c.bf16 %v3845, %v3841
        %v3890 = vpack.c.bf16 %v3846, %v3842
        %v3891 = vpack.c.bf16 %v3847, %v3843
        %v3892 = vpack.c.bf16 %v3848, %v3844
        %v3893 = vpack.c.bf16 %v3853, %v3849
        %v3894 = vpack.c.bf16 %v3854, %v3850
        %v3895 = vpack.c.bf16 %v3855, %v3851
        %v3896 = vpack.c.bf16 %v3856, %v3852
        %3897 = vset.pattern.permute.xlu0 6
        %3898 = vperm.xlu0 %3897, %v263
        %v3899 = vpop.permute.xlu0 %3898
        %3901 = vset.pattern.permute.xlu0 6
        %3902 = vperm.xlu0 %3901, %v264
        %v3903 = vpop.permute.xlu0 %3902
        %3905 = vset.pattern.permute.xlu0 6
        %3906 = vperm.xlu0 %3905, %v265
        %v3907 = vpop.permute.xlu0 %3906
        %3909 = vset.pattern.permute.xlu0 6
        %3910 = vperm.xlu0 %3909, %v266
        %v3911 = vpop.permute.xlu0 %3910
        %3913 = vset.pattern.permute.xlu0 6
        %3914 = vperm.xlu0 %3913, %v267
        %v3915 = vpop.permute.xlu0 %3914
        %3917 = vset.pattern.permute.xlu0 6
        %3918 = vperm.xlu0 %3917, %v268
        %v3919 = vpop.permute.xlu0 %3918
        %3921 = vset.pattern.permute.xlu0 6
        %3922 = vperm.xlu0 %3921, %v269
        %v3923 = vpop.permute.xlu0 %3922
        %3925 = vset.pattern.permute.xlu0 6
        %3926 = vperm.xlu0 %3925, %v270
        %v3927 = vpop.permute.xlu0 %3926
        %v3937 = vunpack.c.l.b16 %v3857
        %v3938 = vunpack.c.l.b16 %v3858
        %v3939 = vunpack.c.l.b16 %v3859
        %v3940 = vunpack.c.l.b16 %v3860
        %v3941 = vunpack.c.l.b16 %v3861
        %v3942 = vunpack.c.l.b16 %v3862
        %v3943 = vunpack.c.l.b16 %v3863
        %v3944 = vunpack.c.l.b16 %v3864
        %v3945 = vpack.c.b16 %v3938, %v3937
        %v3946 = vpack.c.b16 %v3940, %v3939
        %v3947 = vpack.c.b16 %v3942, %v3941
        %v3948 = vpack.c.b16 %v3944, %v3943
        %3953 = vmatprep.subr.bf16.mxu0 %v3894
        %3954 = vmatpush1.bf16.msra.mxu0 %v3893
        %3955 = vmatprep.subr.bf16.mxu0 %v3890
        %3956 = vmatpush1.bf16.msra.mxu0 %v3889
        %3957 = vmatprep.subr.bf16.mxu0 %v3886
        %3958 = vmatpush1.bf16.msra.mxu0 %v3885
        %3959 = vmatprep.subr.bf16.mxu0 %v3882
        %3960 = vmatpush1.bf16.msra.mxu0 %v3881
        %3961 = vmatprep.subr.bf16.mxu0 %v3878
        %3962 = vmatpush1.bf16.msra.mxu0 %v3877
        %3963 = vmatprep.subr.bf16.mxu0 %v3874
        %3964 = vmatpush1.bf16.msra.mxu0 %v3873
        %3965 = vmatprep.subr.bf16.mxu0 %v3870
        %3966 = vmatpush1.bf16.msra.mxu0 %v3869
        %3967 = vmatprep.subr.bf16.mxu0 %v3866
        %3968 = vmatpush1.bf16.msra.mxu0 %v3865
        %3969 = vmatprep.subr.bf16.mxu0 0
        %3970 = vmatpush2.bf16.msra.mxu0 0
        %3971 = vmatprep.subr.bf16.mxu0 0
        %3972 = vmatpush2.bf16.msra.mxu0 0
        %3973 = vmatprep.subr.bf16.mxu0 0
        %3974 = vmatpush2.bf16.msra.mxu0 0
        %3975 = vmatprep.subr.bf16.mxu0 0
        %3976 = vmatpush2.bf16.msra.mxu0 0
        %3977 = vmatprep.subr.bf16.mxu0 0
        %3978 = vmatpush2.bf16.msra.mxu0 0
        %3979 = vmatprep.subr.bf16.mxu0 0
        %3980 = vmatpush2.bf16.msra.mxu0 0
        %3981 = vmatprep.subr.bf16.mxu0 0
        %3982 = vmatpush2.bf16.msra.mxu0 0
        %3983 = vmatprep.subr.bf16.mxu0 0
        %3984 = vmatpush2.bf16.msra.mxu0 0
        %3985 = vmatprep.mubr.bf16.mxu0 0
        %3986 = vmatmul.mubr.bf16.gmra.mxu0 %v3945
        %v3987 = vpop.f32.mrf.mxu0
        %v3988 = vadd.f32 %v3899, %v3987
        %v3989 = vpop.f32.mrf.mxu0
        %v3990 = vadd.f32 %v3899, %v3989
        %v3991 = vpop.f32.mrf.mxu0
        %v3992 = vadd.f32 %v3903, %v3991
        %v3993 = vpop.f32.mrf.mxu0
        %v3994 = vadd.f32 %v3903, %v3993
        %3995 = vmatprep.mubr.bf16.mxu0 0
        %3996 = vmatmul.mubr.bf16.gmra.mxu0 %v3946
        %v3997 = vpop.f32.mrf.mxu0
        %v3998 = vadd.f32 %v3907, %v3997
        %v3999 = vpop.f32.mrf.mxu0
        %v4000 = vadd.f32 %v3907, %v3999
        %v4001 = vpop.f32.mrf.mxu0
        %v4002 = vadd.f32 %v3911, %v4001
        %v4003 = vpop.f32.mrf.mxu0
        %v4004 = vadd.f32 %v3911, %v4003
        %4005 = vmatprep.mubr.bf16.mxu0 0
        %4006 = vmatmul.mubr.bf16.gmra.mxu0 %v3947
        %v4007 = vpop.f32.mrf.mxu0
        %v4008 = vadd.f32 %v3915, %v4007
        %v4009 = vpop.f32.mrf.mxu0
        %v4010 = vadd.f32 %v3915, %v4009
        %v4011 = vpop.f32.mrf.mxu0
        %v4012 = vadd.f32 %v3919, %v4011
        %v4013 = vpop.f32.mrf.mxu0
        %v4014 = vadd.f32 %v3919, %v4013
        %4015 = vmatprep.mubr.bf16.mxu0 0
        %4016 = vmatmul.mubr.bf16.gmra.mxu0 %v3948
        %v4017 = vpop.f32.mrf.mxu0
        %v4018 = vadd.f32 %v3923, %v4017
        %v4019 = vpop.f32.mrf.mxu0
        %v4020 = vadd.f32 %v3923, %v4019
        %v4021 = vpop.f32.mrf.mxu0
        %v4022 = vadd.f32 %v3927, %v4021
        %v4023 = vpop.f32.mrf.mxu0
        %v4024 = vadd.f32 %v3927, %v4023
        %4025 = vdwg.mxu0
        %4026 = vmatprep.subr.bf16.mxu0 %v3896
        %4027 = vmatpush1.bf16.msra.mxu0 %v3895
        %4028 = vmatprep.subr.bf16.mxu0 %v3892
        %4029 = vmatpush1.bf16.msra.mxu0 %v3891
        %4030 = vmatprep.subr.bf16.mxu0 %v3888
        %4031 = vmatpush1.bf16.msra.mxu0 %v3887
        %4032 = vmatprep.subr.bf16.mxu0 %v3884
        %4033 = vmatpush1.bf16.msra.mxu0 %v3883
        %4034 = vmatprep.subr.bf16.mxu0 %v3880
        %4035 = vmatpush1.bf16.msra.mxu0 %v3879
        %4036 = vmatprep.subr.bf16.mxu0 %v3876
        %4037 = vmatpush1.bf16.msra.mxu0 %v3875
        %4038 = vmatprep.subr.bf16.mxu0 %v3872
        %4039 = vmatpush1.bf16.msra.mxu0 %v3871
        %4040 = vmatprep.subr.bf16.mxu0 %v3868
        %4041 = vmatpush1.bf16.msra.mxu0 %v3867
        %4042 = vmatprep.subr.bf16.mxu0 0
        %4043 = vmatpush2.bf16.msra.mxu0 0
        %4044 = vmatprep.subr.bf16.mxu0 0
        %4045 = vmatpush2.bf16.msra.mxu0 0
        %4046 = vmatprep.subr.bf16.mxu0 0
        %4047 = vmatpush2.bf16.msra.mxu0 0
        %4048 = vmatprep.subr.bf16.mxu0 0
        %4049 = vmatpush2.bf16.msra.mxu0 0
        %4050 = vmatprep.subr.bf16.mxu0 0
        %4051 = vmatpush2.bf16.msra.mxu0 0
        %4052 = vmatprep.subr.bf16.mxu0 0
        %4053 = vmatpush2.bf16.msra.mxu0 0
        %4054 = vmatprep.subr.bf16.mxu0 0
        %4055 = vmatpush2.bf16.msra.mxu0 0
        %4056 = vmatprep.subr.bf16.mxu0 0
        %4057 = vmatpush2.bf16.msra.mxu0 0
        %4058 = vmatprep.mubr.bf16.mxu0 0
        %4059 = vmatmul.mubr.bf16.gmra.mxu0 %v3945
        %v4060 = vpop.f32.mrf.mxu0
        %v4061 = vadd.f32 %v3899, %v4060
        %v4062 = vpop.f32.mrf.mxu0
        %v4063 = vadd.f32 %v3899, %v4062
        %v4064 = vpop.f32.mrf.mxu0
        %v4065 = vadd.f32 %v3903, %v4064
        %v4066 = vpop.f32.mrf.mxu0
        %v4067 = vadd.f32 %v3903, %v4066
        %4068 = vmatprep.mubr.bf16.mxu0 0
        %4069 = vmatmul.mubr.bf16.gmra.mxu0 %v3946
        %v4070 = vpop.f32.mrf.mxu0
        %v4071 = vadd.f32 %v3907, %v4070
        %v4072 = vpop.f32.mrf.mxu0
        %v4073 = vadd.f32 %v3907, %v4072
        %v4074 = vpop.f32.mrf.mxu0
        %v4075 = vadd.f32 %v3911, %v4074
        %v4076 = vpop.f32.mrf.mxu0
        %v4077 = vadd.f32 %v3911, %v4076
        %4078 = vmatprep.mubr.bf16.mxu0 0
        %4079 = vmatmul.mubr.bf16.gmra.mxu0 %v3947
        %v4080 = vpop.f32.mrf.mxu0
        %v4081 = vadd.f32 %v3915, %v4080
        %v4082 = vpop.f32.mrf.mxu0
        %v4083 = vadd.f32 %v3915, %v4082
        %v4084 = vpop.f32.mrf.mxu0
        %v4085 = vadd.f32 %v3919, %v4084
        %v4086 = vpop.f32.mrf.mxu0
        %v4087 = vadd.f32 %v3919, %v4086
        %4088 = vmatprep.mubr.bf16.mxu0 0
        %4089 = vmatmul.mubr.bf16.gmra.mxu0 %v3948
        %v4090 = vpop.f32.mrf.mxu0
        %v4091 = vadd.f32 %v3923, %v4090
        %v4092 = vpop.f32.mrf.mxu0
        %v4093 = vadd.f32 %v3923, %v4092
        %v4094 = vpop.f32.mrf.mxu0
        %v4095 = vadd.f32 %v3927, %v4094
        %v4096 = vpop.f32.mrf.mxu0
        %v4097 = vadd.f32 %v3927, %v4096
        %4098 = vdwg.mxu0
        %v4099 = vadd.f32 %v279, %v3988
        %v4100 = vadd.f32 %v280, %v3992
        %v4101 = vadd.f32 %v281, %v3998
        %v4102 = vadd.f32 %v282, %v4002
        %v4103 = vadd.f32 %v283, %v4008
        %v4104 = vadd.f32 %v284, %v4012
        %v4105 = vadd.f32 %v285, %v4018
        %v4106 = vadd.f32 %v286, %v4022
        %4107 = vst [vmem:[%s257] sm:$0xff] %v4099
        %4108 = vst [vmem:[%s257 + $0x8] sm:$0xff] %v4100
        %4109 = vst [vmem:[%s257 + $0x10] sm:$0xff] %v4101
        %4110 = vst [vmem:[%s257 + $0x18] sm:$0xff] %v4102
        %4111 = vst [vmem:[%s257 + $0x20] sm:$0xff] %v4103
        %4112 = vst [vmem:[%s257 + $0x28] sm:$0xff] %v4104
        %4113 = vst [vmem:[%s257 + $0x30] sm:$0xff] %v4105
        %4114 = vst [vmem:[%s257 + $0x38] sm:$0xff] %v4106
        %v4115 = vld [vmem:[%s291] sm:$0xff]
        %v4116 = vld [vmem:[%s291 + $0x8] sm:$0xff]
        %v4117 = vld [vmem:[%s291 + $0x10] sm:$0xff]
        %v4118 = vld [vmem:[%s291 + $0x18] sm:$0xff]
        %v4119 = vld [vmem:[%s291 + $0x20] sm:$0xff]
        %v4120 = vld [vmem:[%s291 + $0x28] sm:$0xff]
        %v4121 = vld [vmem:[%s291 + $0x30] sm:$0xff]
        %v4122 = vld [vmem:[%s291 + $0x38] sm:$0xff]
        %v4123 = vadd.f32 %v4115, %v3990
        %v4124 = vadd.f32 %v4116, %v3994
        %v4125 = vadd.f32 %v4117, %v4000
        %v4126 = vadd.f32 %v4118, %v4004
        %v4127 = vadd.f32 %v4119, %v4010
        %v4128 = vadd.f32 %v4120, %v4014
        %v4129 = vadd.f32 %v4121, %v4020
        %v4130 = vadd.f32 %v4122, %v4024
        %s4131 = scalar_lea.vmem %s257, 64 [#allocation7]
        %4132 = vst [vmem:[%s4131] sm:$0xff] %v4123
        %4133 = vst [vmem:[%s4131 + $0x8] sm:$0xff] %v4124
        %4134 = vst [vmem:[%s4131 + $0x10] sm:$0xff] %v4125
        %4135 = vst [vmem:[%s4131 + $0x18] sm:$0xff] %v4126
        %4136 = vst [vmem:[%s4131 + $0x20] sm:$0xff] %v4127
        %4137 = vst [vmem:[%s4131 + $0x28] sm:$0xff] %v4128
        %4138 = vst [vmem:[%s4131 + $0x30] sm:$0xff] %v4129
        %4139 = vst [vmem:[%s4131 + $0x38] sm:$0xff] %v4130
        %v4140 = vld [vmem:[%s304] sm:$0xff]
        %v4141 = vld [vmem:[%s304 + $0x8] sm:$0xff]
        %v4142 = vld [vmem:[%s304 + $0x10] sm:$0xff]
        %v4143 = vld [vmem:[%s304 + $0x18] sm:$0xff]
        %v4144 = vld [vmem:[%s304 + $0x20] sm:$0xff]
        %v4145 = vld [vmem:[%s304 + $0x28] sm:$0xff]
        %v4146 = vld [vmem:[%s304 + $0x30] sm:$0xff]
        %v4147 = vld [vmem:[%s304 + $0x38] sm:$0xff]
        %v4148 = vadd.f32 %v4140, %v4061
        %v4149 = vadd.f32 %v4141, %v4065
        %v4150 = vadd.f32 %v4142, %v4071
        %v4151 = vadd.f32 %v4143, %v4075
        %v4152 = vadd.f32 %v4144, %v4081
        %v4153 = vadd.f32 %v4145, %v4085
        %v4154 = vadd.f32 %v4146, %v4091
        %v4155 = vadd.f32 %v4147, %v4095
        %s4156 = scalar_lea.vmem %s257, 128 [#allocation7]
        %4157 = vst [vmem:[%s4156] sm:$0xff] %v4148
        %4158 = vst [vmem:[%s4156 + $0x8] sm:$0xff] %v4149
        %4159 = vst [vmem:[%s4156 + $0x10] sm:$0xff] %v4150
        %4160 = vst [vmem:[%s4156 + $0x18] sm:$0xff] %v4151
        %4161 = vst [vmem:[%s4156 + $0x20] sm:$0xff] %v4152
        %4162 = vst [vmem:[%s4156 + $0x28] sm:$0xff] %v4153
        %4163 = vst [vmem:[%s4156 + $0x30] sm:$0xff] %v4154
        %4164 = vst [vmem:[%s4156 + $0x38] sm:$0xff] %v4155
        %v4165 = vld [vmem:[%s317] sm:$0xff]
        %v4166 = vld [vmem:[%s317 + $0x8] sm:$0xff]
        %v4167 = vld [vmem:[%s317 + $0x10] sm:$0xff]
        %v4168 = vld [vmem:[%s317 + $0x18] sm:$0xff]
        %v4169 = vld [vmem:[%s317 + $0x20] sm:$0xff]
        %v4170 = vld [vmem:[%s317 + $0x28] sm:$0xff]
        %v4171 = vld [vmem:[%s317 + $0x30] sm:$0xff]
        %v4172 = vld [vmem:[%s317 + $0x38] sm:$0xff]
        %v4173 = vadd.f32 %v4165, %v4063
        %v4174 = vadd.f32 %v4166, %v4067
        %v4175 = vadd.f32 %v4167, %v4073
        %v4176 = vadd.f32 %v4168, %v4077
        %v4177 = vadd.f32 %v4169, %v4083
        %v4178 = vadd.f32 %v4170, %v4087
        %v4179 = vadd.f32 %v4171, %v4093
        %v4180 = vadd.f32 %v4172, %v4097
        %s4181 = scalar_lea.vmem %s257, 192 [#allocation7]
        %4182 = vst [vmem:[%s4181] sm:$0xff] %v4173
        %4183 = vst [vmem:[%s4181 + $0x8] sm:$0xff] %v4174
        %4184 = vst [vmem:[%s4181 + $0x10] sm:$0xff] %v4175
        %4185 = vst [vmem:[%s4181 + $0x18] sm:$0xff] %v4176
        %4186 = vst [vmem:[%s4181 + $0x20] sm:$0xff] %v4177
        %4187 = vst [vmem:[%s4181 + $0x28] sm:$0xff] %v4178
        %4188 = vst [vmem:[%s4181 + $0x30] sm:$0xff] %v4179
        %4189 = vst [vmem:[%s4181 + $0x38] sm:$0xff] %v4180
        %s4190 = sand.u32 %s141, 1
        %s4191 = scalar_lea.sflag [#allocation4], %s4190
        %s4192 = sand.u32 %s141, 1
        %s4193 = smul.addr %s4192, 256
        %s4194 = scalar_lea.vmem [#allocation7], %s4193
        // Predicated region
        $region49: #{tpu_custom_call.1} parent=39 // pred_check
          %p4195 = pneg %p151
        $region50: #{tpu_custom_call.1} parent=39 // pred_check_branch
          %4197 = sbr.rel (%p4195) target = $region52
        $region51: #{tpu_custom_call.1} parent=39 // pred_region
          %s4198 = smul.u32 4, %s23
          %s4200 = ssub.s32 4096, 4096
          %4201 = vsyncadd %s4191, %s4200
          %s4202 = smul.addr %s4198, 8
          %s4203 = smul.addr %s4202, 128
          %s4204 = scalar_lea.hbm %s5, %s4203
          %s4205 = sshll.u32 %s4194, 4
          %s4206 = int_to_ptr.vmem [resolvable:$true] %s4205
          %4211 = dma.vmem_to_hbm [thread:$0]  %s4206, 4096, %s4204, %s4191, 128, 128, 8
        $region52: #{tpu_custom_call.1} parent=39 // pred_fallthru
          _
      $region40: #{tpu_custom_call.1} parent=5 // pred_fallthru
        _
      %p4212 = scmp.le.s32.totalorder 2, %s18
      // Predicated region
      $region53: #{tpu_custom_call.1} parent=5 // pred_check
        %p4213 = pneg %p4212
      $region54: #{tpu_custom_call.1} parent=5 // pred_check_branch
        %4215 = sbr.rel (%p4213) target = $region56
      $region55: #{tpu_custom_call.1} parent=5 // pred_region
        %s4216 = ssub.s32 %s18, 2
        // Predicated region
        $region57: #{tpu_custom_call.1} parent=55 // pred_check
          %p4217 = pneg %p157
        $region58: #{tpu_custom_call.1} parent=55 // pred_check_branch
          %4219 = sbr.rel (%p4217) target = $region60
        $region59: #{tpu_custom_call.1} parent=55 // pred_region
          %s4220 = sand.u32 %s142, 1
          %s4221 = scalar_lea.sflag [#allocation4], %s4220
          %s4222 = sand.u32 %s142, 1
          %s4223 = smul.addr %s4222, 256
          %s4224 = scalar_lea.vmem [#allocation7], %s4223
          %4225 = dma.done %s4221, 4096
        $region60: #{tpu_custom_call.1} parent=55 // pred_fallthru
          _
      $region56: #{tpu_custom_call.1} parent=5 // pred_fallthru
        _
    $region6: #{tpu_custom_call.1} parent=1 // loop_footer
      %s22 = sadd.s32 1, %s18
    $region7: #{tpu_custom_call.1} parent=1 // loop_footer_branch
      %17 = sbr.rel target = $region3
    $region8: #{tpu_custom_call.1} parent=1 // loop_exit
      _
    %4226 = vsyncpa [#allocation3], 1
    %s4227 = scalar_lea.sflag [#allocation3], 1
    %4228 = vsyncpa %s4227, 1
    %4229 = vsyncpa [#allocation4], 1
    %s4230 = scalar_lea.sflag [#allocation4], 1
    %4231 = vsyncpa %s4230, 1
    %4232 = vsyncpa [#allocation5], 1
    %s4233 = scalar_lea.sflag [#allocation5], 1
    %4234 = vsyncpa %s4233, 1

</llo_original>
